<compile_context>
chip_gen: v7x
topology: tpu7x:2x2x1
jax: 0.10.0
libtpu: 0.0.40
codegen_flags: <defaults>
</compile_context>

<pallas_src>
import functools
import math

import jax
import jax.numpy as jnp
from jax.experimental import pallas as pl
from jax.experimental.pallas import tpu as pltpu


def _mha_kernel(*refs, num_heads, d_k, bt, seq, compute_dtype, self_attn,
                emit_attn):
    D = num_heads * d_k
    T = bt * seq  # rows fed to the projection matmuls this grid step

    if self_attn:
        (x_ref, wqkv_ref, bqkv_ref, wo_ref, bo_ref, out_ref) = refs[:6]
        rest = refs[6:]
    else:
        (xq_ref, xk_ref, xv_ref, wqkv_ref, bqkv_ref,
         wo_ref, bo_ref, out_ref) = refs[:8]
        rest = refs[8:]
    attn_ref = rest[0] if emit_attn else None

    def mxu(x):
        # Cast only MXU inputs; softmax and all accumulation stay f32.
        return x if compute_dtype is None else x.astype(compute_dtype)

    wqkv = mxu(wqkv_ref[...])   # (D, 3D); already compute_dtype (wrapper cast)
    bqkv = bqkv_ref[...]        # (1, 3D) f32
    wo = mxu(wo_ref[...])       # (D, D)

    # ---- fused fat input projections on the MXU -----------------------------
    if self_attn:
        # One (T, D) @ (D, 3D) matmul; q/k/v split is a lane slice at D-multiples.
        x = mxu(x_ref[...].reshape(T, D))
        qkv = jnp.dot(x, wqkv, preferred_element_type=jnp.float32) + bqkv
        q = qkv[:, 0:D]
        k = qkv[:, D:2 * D]
        v = qkv[:, 2 * D:3 * D]
    else:
        xq = mxu(xq_ref[...].reshape(T, D))
        xk = mxu(xk_ref[...].reshape(T, D))
        xv = mxu(xv_ref[...].reshape(T, D))
        q = jnp.dot(xq, wqkv[:, 0:D],
                    preferred_element_type=jnp.float32) + bqkv[:, 0:D]
        k = jnp.dot(xk, wqkv[:, D:2 * D],
                    preferred_element_type=jnp.float32) + bqkv[:, D:2 * D]
        v = jnp.dot(xv, wqkv[:, 2 * D:3 * D],
                    preferred_element_type=jnp.float32) + bqkv[:, 2 * D:3 * D]

    # Back to (bt, S, D): leading-dim split only (no lane relayout).
    q3 = q.reshape(bt, seq, D)
    k3 = k.reshape(bt, seq, D)
    v3 = v.reshape(bt, seq, D)
    inv_sqrt_dk = 1.0 / math.sqrt(d_k)

    if num_heads >= 16:
        # Batched-head path: one dot_general with (b, h) batch dims keeps a
        # single copy of the loop body (less code / vreg pressure at large H).
        q4 = (q3 * inv_sqrt_dk).reshape(bt, seq, num_heads, d_k)
        k4 = k3.reshape(bt, seq, num_heads, d_k)
        v4 = v3.reshape(bt, seq, num_heads, d_k)
        s = jnp.einsum("bqhd,bkhd->bhqk", mxu(q4), mxu(k4),
                       preferred_element_type=jnp.float32)
        m = jnp.max(s, axis=-1, keepdims=True)
        e = jnp.exp(s - m)
        w = e * pl.reciprocal(jnp.sum(e, axis=-1, keepdims=True), approx=True)
        if emit_attn:
            attn_ref[...] = w.astype(attn_ref.dtype)
        ctx = jnp.einsum("bhqk,bkhd->bqhd", mxu(w), mxu(v4),
                         preferred_element_type=jnp.float32)
        out_acc = jnp.dot(mxu(ctx.reshape(T, D)), wo,
                          preferred_element_type=jnp.float32)
    else:
        # Static Python head loop (num_heads is small & static).
        fuse_out = (d_k % 128 == 0)
        ctx_heads = []
        out_acc = None if fuse_out else jnp.zeros((T, D), jnp.float32)
        for h in range(num_heads):
            sl = slice(h * d_k, (h + 1) * d_k)
            qh = q3[:, :, sl] * inv_sqrt_dk   # pre-scale q (fewer elements)
            kh = k3[:, :, sl]
            vh = v3[:, :, sl]

            # Scores via batched dot_general contracting last dims — no kh.T.
            s = jnp.einsum("bqd,bkd->bqk", mxu(qh), mxu(kh),
                           preferred_element_type=jnp.float32)   # (bt, S, S)

            # Numerically-stable softmax, strictly f32; divide on the EUP.
            m = jnp.max(s, axis=-1, keepdims=True)
            e = jnp.exp(s - m)
            w = e * pl.reciprocal(jnp.sum(e, axis=-1, keepdims=True),
                                  approx=True)

            if emit_attn:
                # NOTE: stored weights are the f32 softmax; with bf16
                # compute_dtype the PV matmul uses their bf16 cast.
                attn_ref[:, h, :, :] = w.astype(attn_ref.dtype)

            ctx = jnp.einsum("bqk,bkd->bqd", mxu(w), mxu(vh),
                             preferred_element_type=jnp.float32)  # (bt, S, d_k)

            if fuse_out:
                ctx_heads.append(ctx.reshape(T, d_k))
            else:
                # Fold the head-concat into W_o (kept for d_k < 128):
                #   concat_h(ctx_h) @ Wo == sum_h ctx_h @ Wo[h*d_k:(h+1)*d_k, :]
                out_acc = out_acc + jnp.dot(
                    mxu(ctx.reshape(T, d_k)), wo[sl, :],
                    preferred_element_type=jnp.float32)
        if fuse_out:
            # d_k is 128-aligned: place heads at 128-aligned lane offsets and
            # run ONE full-depth (T, D)@(D, D) output projection.
            ctx_full = jnp.concatenate(ctx_heads, axis=-1)   # (T, D)
            out_acc = jnp.dot(mxu(ctx_full), wo,
                              preferred_element_type=jnp.float32)

    out = out_acc + bo_ref[...]
    out_ref[...] = out.reshape(bt, seq, D).astype(out_ref.dtype)


def _vmem_capacity_bytes():
    """Generation-aware VMEM capacity (v5e/v6e: 128 MiB, v7x: 64 MiB/TC)."""
    try:
        return int(pltpu.get_tpu_info().vmem_capacity_bytes)
    except Exception:
        return 64 * 1024 * 1024   # conservative default (v7x per-core VMEM)


def _block_footprint_bytes(bt, S, D, H, *, in_itemsize, out_itemsize,
                           w_itemsize, emit_attn, attn_itemsize, self_attn):
    """Per-grid-step VMEM estimate: double-buffered pipelined blocks,
    single-buffered resident weights, and live f32 intermediates."""
    T = bt * S
    n_x = 1 if self_attn else 3
    io = 2 * (n_x * T * D * in_itemsize + T * D * out_itemsize)  # x2 dbl-buffer
    if emit_attn:
        io += 2 * bt * H * S * S * attn_itemsize
    weights = 4 * D * D * w_itemsize + 4 * D * 4                 # wqkv+wo, biases
    # live f32: q/k/v (3*T*D), one (bt,S,S) score/exp buffer, ctx + out acc.
    live = (3 * T * D + bt * S * S + 2 * T * D) * 4
    return io + weights + live


def _pick_batch_tile(B, S, D, H, *, budget_bytes, **fp_kwargs):
    """Largest divisor of B whose per-step footprint fits the budget; prefer a
    grid of >= 2 even steps so v7x's two TensorCores both get work."""
    def fits(bt):
        return _block_footprint_bytes(bt, S, D, H, **fp_kwargs) <= budget_bytes

    divisors = sorted((d for d in range(1, B + 1) if B % d == 0), reverse=True)
    for pred in (lambda bt: fits(bt) and (B // bt) >= 2 and (B // bt) % 2 == 0,
                 lambda bt: fits(bt) and (B // bt) >= 2,
                 fits):
        for bt in divisors:
            if pred(bt):
                return bt
    return 1


def _const_spec(shape, buffer_once):
    """BlockSpec for a grid-invariant operand (index_map always (0,...,0))."""
    idx = lambda b: tuple(0 for _ in shape)
    if buffer_once:
        # Single-buffered: the pipeliner won't reserve a useless second buffer.
        return pl.BlockSpec(shape, idx, pipeline_mode=pl.Buffered(1))
    return pl.BlockSpec(shape, idx)


def multi_head_attention(query, key, value, params, *, num_heads: int,
                         batch_tile=None, compute_dtype=jnp.bfloat16,
                         return_attention=True, attn_dtype=jnp.float32):
    """params: dict with 'wq','bq','wk','bk','wv','bv','wo','bo'.
    Weights 'w*' are (d_model, d_model) in (in, out) layout; biases (d_model,).
    compute_dtype: MXU-input dtype (default bf16; None keeps f32 operands).
    Returns (output, attention_weights) — attention_weights is None when
    return_attention=False (saves the O(B*H*S^2) HBM writeback)."""
    B, S, D = query.shape
    assert D % num_heads == 0
    d_k = D // num_heads
    self_attn = (query is key) and (key is value)

    # Fused QKV weight (D, 3D) and bias (1, 3D); weights cast to compute_dtype
    # (halved weight DMA + resident VMEM); biases stay f32 (added post-acc).
    w_qkv = jnp.concatenate([params["wq"], params["wk"], params["wv"]], axis=1)
    wo = params["wo"]
    if compute_dtype is not None:
        w_qkv = w_qkv.astype(compute_dtype)
        wo = wo.astype(compute_dtype)
    b_qkv = jnp.concatenate([params["bq"], params["bk"],
                             params["bv"]]).reshape(1, 3 * D)
    bo = params["bo"].reshape(1, D)

    fp_kwargs = dict(
        in_itemsize=jnp.dtype(query.dtype).itemsize,
        out_itemsize=jnp.dtype(query.dtype).itemsize,
        w_itemsize=jnp.dtype(w_qkv.dtype).itemsize,
        emit_attn=return_attention,
        attn_itemsize=jnp.dtype(attn_dtype).itemsize,
        self_attn=self_attn)

    vmem_cap = _vmem_capacity_bytes()
    budget = int(0.45 * vmem_cap)          # headroom for compiler scratch/spill
    if batch_tile is None:
        batch_tile = _pick_batch_tile(B, S, D, num_heads,
                                      budget_bytes=budget, **fp_kwargs)
    assert B % batch_tile == 0, "batch_tile must divide batch"
    bt = batch_tile
    est = _block_footprint_bytes(bt, S, D, num_heads, **fp_kwargs)
    vmem_limit = int(min(vmem_cap, max(2 * est, 32 * 1024 * 1024)))

    kernel = functools.partial(_mha_kernel, num_heads=num_heads, d_k=d_k,
                               bt=bt, seq=S, compute_dtype=compute_dtype,
                               self_attn=self_attn, emit_attn=return_attention)

    x_spec = pl.BlockSpec((bt, S, D), lambda b: (b, 0, 0))
    out_spec = pl.BlockSpec((bt, S, D), lambda b: (b, 0, 0))
    out_sds = jax.ShapeDtypeStruct((B, S, D), query.dtype)
    if return_attention:
        attn_spec = pl.BlockSpec((bt, num_heads, S, S), lambda b: (b, 0, 0, 0))
        attn_sds = jax.ShapeDtypeStruct((B, num_heads, S, S), attn_dtype)
        out_shape, out_specs = (out_sds, attn_sds), (out_spec, attn_spec)
    else:
        out_shape, out_specs = out_sds, out_spec

    x_args = (query,) if self_attn else (query, key, value)
    w_args = (w_qkv, b_qkv, wo, bo)

    def run(buffer_weights_once):
        w_specs = [_const_spec(a.shape, buffer_weights_once) for a in w_args]
        in_specs = [x_spec] * len(x_args) + w_specs
        return pl.pallas_call(
            kernel,
            out_shape=out_shape,
            grid_spec=pltpu.PrefetchScalarGridSpec(
                num_scalar_prefetch=0,
                grid=(B // bt,),
                in_specs=in_specs,
                out_specs=out_specs,
            ),
            compiler_params=pltpu.CompilerParams(
                dimension_semantics=("parallel",),
                vmem_limit_bytes=vmem_limit),
        )(*x_args, *w_args)

    try:
        res = run(True)
    except Exception:
        # Fallback if this JAX build rejects pipeline_mode=pl.Buffered(1).
        res = run(False)

    if return_attention:
        return res[0], res[1]
    return res, None


def _reference_mha(query, key, value, params, *, num_heads: int):
    """Pure-JAX reference mirroring the PyTorch forward (eval mode)."""
    B, S, D = query.shape
    d_k = D // num_heads
    q = query @ params["wq"] + params["bq"]
    k = key @ params["wk"] + params["bk"]
    v = value @ params["wv"] + params["bv"]

    def split(x):
        return x.reshape(B, S, num_heads, d_k).transpose(0, 2, 1, 3)

    q, k, v = split(q), split(k), split(v)
    scores = jnp.einsum("bhqd,bhkd->bhqk", q, k) / math.sqrt(d_k)
    weights = jax.nn.softmax(scores, axis=-1)
    ctx = jnp.einsum("bhqk,bhkd->bhqd", weights, v)
    ctx = ctx.transpose(0, 2, 1, 3).reshape(B, S, D)
    out = ctx @ params["wo"] + params["bo"]
    return out, weights


if __name__ == "__main__":
    # Small shapes consistent with the module: batch=2, seq=8, d_model=32, heads=4.
    B, S, D, H = 2, 8, 32, 4

    key = jax.random.PRNGKey(0)
    ks = jax.random.split(key, 11)
    bound = 1.0 / math.sqrt(D)  # PyTorch nn.Linear default init range

    def uinit(k, shape):
        return jax.random.uniform(k, shape, jnp.float32, minval=-bound, maxval=bound)

    params = {
        "wq": uinit(ks[0], (D, D)), "bq": uinit(ks[1], (D,)),
        "wk": uinit(ks[2], (D, D)), "bk": uinit(ks[3], (D,)),
        "wv": uinit(ks[4], (D, D)), "bv": uinit(ks[5], (D,)),
        "wo": uinit(ks[6], (D, D)), "bo": uinit(ks[7], (D,)),
    }

    query = jax.random.normal(ks[8], (B, S, D), jnp.float32)
    key_in = jax.random.normal(ks[9], (B, S, D), jnp.float32)
    value = jax.random.normal(ks[10], (B, S, D), jnp.float32)

    ref_out, ref_attn = _reference_mha(query, key_in, value, params, num_heads=H)

    # 1) Cross-attention, f32 MXU operands (tight check; approx reciprocal only).
    out32, attn32 = multi_head_attention(query, key_in, value, params,
                                         num_heads=H, compute_dtype=None)
    out32 = jax.block_until_ready(out32)
    attn32 = jax.block_until_ready(attn32)
    assert out32.shape == (B, S, D) and attn32.shape == (B, H, S, S)
    assert jnp.allclose(out32, ref_out, atol=5e-3, rtol=5e-3)
    assert jnp.allclose(attn32, ref_attn, atol=5e-3, rtol=5e-3)

    # 2) Default path: bf16 MXU inputs, f32 softmax/accumulation (looser check).
    out_bf, attn_bf = multi_head_attention(query, key_in, value, params,
                                           num_heads=H)
    out_bf = jax.block_until_ready(out_bf)
    attn_bf = jax.block_until_ready(attn_bf)
    assert jnp.allclose(out_bf, ref_out, atol=6e-2, rtol=6e-2)
    assert jnp.allclose(attn_bf, ref_attn, atol=6e-2, rtol=6e-2)

    # 3) Self-attention (q is k is v): fused single (T,D)@(D,3D) QKV projection.
    ref_sa_out, ref_sa_attn = _reference_mha(query, query, query, params,
                                             num_heads=H)
    out_sa, attn_sa = multi_head_attention(query, query, query, params,
                                           num_heads=H, compute_dtype=None)
    out_sa = jax.block_until_ready(out_sa)
    attn_sa = jax.block_until_ready(attn_sa)
    assert jnp.allclose(out_sa, ref_sa_out, atol=5e-3, rtol=5e-3)
    assert jnp.allclose(attn_sa, ref_sa_attn, atol=5e-3, rtol=5e-3)

    print("KERNEL_OK")
</pallas_src>

<mosaic_0001>
module attributes {stable_mosaic.version = 11 : i64} {
  func.func @_mha_kernel(%arg0: i32, %arg1: memref<1x8x32xf32, #tpu.memory_space<vmem>>, %arg2: memref<1x8x32xf32, #tpu.memory_space<vmem>>, %arg3: memref<1x8x32xf32, #tpu.memory_space<vmem>>, %arg4: memref<32x96xf32, #tpu.memory_space<vmem>>, %arg5: memref<1x96xf32, #tpu.memory_space<vmem>>, %arg6: memref<32x32xf32, #tpu.memory_space<vmem>>, %arg7: memref<1x32xf32, #tpu.memory_space<vmem>>, %arg8: memref<1x8x32xf32, #tpu.memory_space<vmem>>, %arg9: memref<1x4x8x8xf32, #tpu.memory_space<vmem>>) attributes {dimension_semantics = [#tpu.dimension_semantics<parallel>], iteration_bounds = array<i64: 2>, scalar_prefetch = 0 : i64, scratch_operands = 0 : i64, tpu.core_type = #tpu.core_type<tc>, window_params = [{transform_indices = @transform_0, window_bounds = array<i64: 1, 8, 32>}, {transform_indices = @transform_1, window_bounds = array<i64: 1, 8, 32>}, {transform_indices = @transform_2, window_bounds = array<i64: 1, 8, 32>}, {pipeline_mode = #tpu.pipeline_mode<synchronous>, transform_indices = @transform_3, window_bounds = array<i64: 32, 96>}, {pipeline_mode = #tpu.pipeline_mode<synchronous>, transform_indices = @transform_4, window_bounds = array<i64: 1, 96>}, {pipeline_mode = #tpu.pipeline_mode<synchronous>, transform_indices = @transform_5, window_bounds = array<i64: 32, 32>}, {pipeline_mode = #tpu.pipeline_mode<synchronous>, transform_indices = @transform_6, window_bounds = array<i64: 1, 32>}, {transform_indices = @transform_7, window_bounds = array<i64: 1, 8, 32>}, {transform_indices = @transform_8, window_bounds = array<i64: 1, 4, 8, 8>}]} {
    %c0 = arith.constant 0 : index
    %c0_0 = arith.constant 0 : index
    %0 = vector.load %arg4[%c0, %c0_0] : memref<32x96xf32, #tpu.memory_space<vmem>>, vector<32x96xf32>
    %c0_1 = arith.constant 0 : index
    %c0_2 = arith.constant 0 : index
    %1 = vector.load %arg5[%c0_1, %c0_2] : memref<1x96xf32, #tpu.memory_space<vmem>>, vector<1x96xf32>
    %c0_3 = arith.constant 0 : index
    %c0_4 = arith.constant 0 : index
    %2 = vector.load %arg6[%c0_3, %c0_4] : memref<32x32xf32, #tpu.memory_space<vmem>>, vector<32x32xf32>
    %c0_5 = arith.constant 0 : index
    %c0_6 = arith.constant 0 : index
    %c0_7 = arith.constant 0 : index
    %3 = vector.load %arg1[%c0_5, %c0_6, %c0_7] : memref<1x8x32xf32, #tpu.memory_space<vmem>>, vector<1x8x32xf32>
    %4 = vector.shape_cast %3 : vector<1x8x32xf32> to vector<8x32xf32>
    %c0_8 = arith.constant 0 : index
    %c0_9 = arith.constant 0 : index
    %c0_10 = arith.constant 0 : index
    %5 = vector.load %arg2[%c0_8, %c0_9, %c0_10] : memref<1x8x32xf32, #tpu.memory_space<vmem>>, vector<1x8x32xf32>
    %6 = vector.shape_cast %5 : vector<1x8x32xf32> to vector<8x32xf32>
    %c0_11 = arith.constant 0 : index
    %c0_12 = arith.constant 0 : index
    %c0_13 = arith.constant 0 : index
    %7 = vector.load %arg3[%c0_11, %c0_12, %c0_13] : memref<1x8x32xf32, #tpu.memory_space<vmem>>, vector<1x8x32xf32>
    %8 = vector.shape_cast %7 : vector<1x8x32xf32> to vector<8x32xf32>
    %9 = vector.extract_strided_slice %0 {offsets = [0, 0], sizes = [32, 32], strides = [1, 1]} : vector<32x96xf32> to vector<32x32xf32>
    %cst = arith.constant dense<0.000000e+00> : vector<8x32xf32>
    %10 = tpu.matmul %4, %9, %cst {dimension_numbers = #tpu.dot_dimension_numbers<[1], [0], [0], [1], [0, 0, 1, 1], [], []>} : vector<8x32xf32>, vector<32x32xf32>, vector<8x32xf32> -> vector<8x32xf32>
    %11 = vector.extract_strided_slice %1 {offsets = [0, 0], sizes = [1, 32], strides = [1, 1]} : vector<1x96xf32> to vector<1x32xf32>
    %12 = vector.broadcast %11 : vector<1x32xf32> to vector<8x32xf32>
    %13 = arith.addf %10, %12 : vector<8x32xf32>
    %14 = vector.extract_strided_slice %0 {offsets = [0, 32], sizes = [32, 32], strides = [1, 1]} : vector<32x96xf32> to vector<32x32xf32>
    %cst_14 = arith.constant dense<0.000000e+00> : vector<8x32xf32>
    %15 = tpu.matmul %6, %14, %cst_14 {dimension_numbers = #tpu.dot_dimension_numbers<[1], [0], [0], [1], [0, 0, 1, 1], [], []>} : vector<8x32xf32>, vector<32x32xf32>, vector<8x32xf32> -> vector<8x32xf32>
    %16 = vector.extract_strided_slice %1 {offsets = [0, 32], sizes = [1, 32], strides = [1, 1]} : vector<1x96xf32> to vector<1x32xf32>
    %17 = vector.broadcast %16 : vector<1x32xf32> to vector<8x32xf32>
    %18 = arith.addf %15, %17 : vector<8x32xf32>
    %19 = vector.extract_strided_slice %0 {offsets = [0, 64], sizes = [32, 32], strides = [1, 1]} : vector<32x96xf32> to vector<32x32xf32>
    %cst_15 = arith.constant dense<0.000000e+00> : vector<8x32xf32>
    %20 = tpu.matmul %8, %19, %cst_15 {dimension_numbers = #tpu.dot_dimension_numbers<[1], [0], [0], [1], [0, 0, 1, 1], [], []>} : vector<8x32xf32>, vector<32x32xf32>, vector<8x32xf32> -> vector<8x32xf32>
    %21 = vector.extract_strided_slice %1 {offsets = [0, 64], sizes = [1, 32], strides = [1, 1]} : vector<1x96xf32> to vector<1x32xf32>
    %22 = vector.broadcast %21 : vector<1x32xf32> to vector<8x32xf32>
    %23 = arith.addf %20, %22 : vector<8x32xf32>
    %24 = vector.shape_cast %13 : vector<8x32xf32> to vector<1x8x32xf32>
    %25 = vector.shape_cast %18 : vector<8x32xf32> to vector<1x8x32xf32>
    %26 = vector.shape_cast %23 : vector<8x32xf32> to vector<1x8x32xf32>
    %cst_16 = arith.constant 0.000000e+00 : f32
    %27 = vector.broadcast %cst_16 : f32 to vector<8x32xf32>
    %28 = vector.extract_strided_slice %24 {offsets = [0, 0, 0], sizes = [1, 8, 8], strides = [1, 1, 1]} : vector<1x8x32xf32> to vector<1x8x8xf32>
    %cst_17 = arith.constant 0.353553385 : f32
    %29 = vector.broadcast %cst_17 : f32 to vector<1x8x8xf32>
    %30 = arith.mulf %28, %29 : vector<1x8x8xf32>
    %31 = vector.extract_strided_slice %25 {offsets = [0, 0, 0], sizes = [1, 8, 8], strides = [1, 1, 1]} : vector<1x8x32xf32> to vector<1x8x8xf32>
    %32 = vector.extract_strided_slice %26 {offsets = [0, 0, 0], sizes = [1, 8, 8], strides = [1, 1, 1]} : vector<1x8x32xf32> to vector<1x8x8xf32>
    "tpu.trace_start"() <{level = 10 : i32, message = "bqd,bkd->bqk"}> : () -> ()
    %cst_18 = arith.constant dense<0.000000e+00> : vector<1x8x8xf32>
    %33 = tpu.matmul %30, %31, %cst_18 {dimension_numbers = #tpu.dot_dimension_numbers<[2], [2], [1], [1], [0, 0, 0, 1, 1, 1], [0], [0]>} : vector<1x8x8xf32>, vector<1x8x8xf32>, vector<1x8x8xf32> -> vector<1x8x8xf32>
    "tpu.trace_stop"() : () -> ()
    %cst_19 = arith.constant dense<0xFF800000> : vector<1x8xf32>
    %34 = vector.multi_reduction <maximumf>, %33, %cst_19 [2] : vector<1x8x8xf32> to vector<1x8xf32>
    %35 = vector.shape_cast %34 : vector<1x8xf32> to vector<1x8x1xf32>
    %36 = vector.broadcast %35 : vector<1x8x1xf32> to vector<1x8x8xf32>
    %37 = arith.subf %33, %36 : vector<1x8x8xf32>
    %38 = math.exp %37 : vector<1x8x8xf32>
    %cst_20 = arith.constant dense<0.000000e+00> : vector<1x8xf32>
    %39 = vector.multi_reduction <add>, %38, %cst_20 [2] : vector<1x8x8xf32> to vector<1x8xf32>
    %40 = vector.shape_cast %39 : vector<1x8xf32> to vector<1x8x1xf32>
    %41 = tpu.reciprocal %40 {approx = true} : vector<1x8x1xf32> -> vector<1x8x1xf32>
    %42 = vector.broadcast %41 : vector<1x8x1xf32> to vector<1x8x8xf32>
    %43 = arith.mulf %38, %42 : vector<1x8x8xf32>
    %c0_21 = arith.constant 0 : index
    %c0_22 = arith.constant 0 : index
    %c0_23 = arith.constant 0 : index
    %c0_24 = arith.constant 0 : index
    %44 = vector.load %arg9[%c0_21, %c0_22, %c0_23, %c0_24] : memref<1x4x8x8xf32, #tpu.memory_space<vmem>>, vector<1x1x8x8xf32>
    %45 = vector.shape_cast %44 : vector<1x1x8x8xf32> to vector<1x8x8xf32>
    %46 = vector.shape_cast %43 : vector<1x8x8xf32> to vector<1x1x8x8xf32>
    tpu.vector_store %arg9[%c0_21, %c0_22, %c0_23, %c0_24], %46 {strides = array<i32>} : memref<1x4x8x8xf32, #tpu.memory_space<vmem>>, vector<1x1x8x8xf32>,
    "tpu.trace_start"() <{level = 10 : i32, message = "bqk,bkd->bqd"}> : () -> ()
    %cst_25 = arith.constant dense<0.000000e+00> : vector<1x8x8xf32>
    %47 = tpu.matmul %43, %32, %cst_25 {dimension_numbers = #tpu.dot_dimension_numbers<[2], [1], [1], [2], [0, 0, 0, 1, 1, 2], [0], [0]>} : vector<1x8x8xf32>, vector<1x8x8xf32>, vector<1x8x8xf32> -> vector<1x8x8xf32>
    "tpu.trace_stop"() : () -> ()
    %48 = vector.shape_cast %47 : vector<1x8x8xf32> to vector<8x8xf32>
    %49 = vector.extract_strided_slice %2 {offsets = [0, 0], sizes = [8, 32], strides = [1, 1]} : vector<32x32xf32> to vector<8x32xf32>
    %cst_26 = arith.constant dense<0.000000e+00> : vector<8x32xf32>
    %50 = tpu.matmul %48, %49, %cst_26 {dimension_numbers = #tpu.dot_dimension_numbers<[1], [0], [0], [1], [0, 0, 1, 1], [], []>} : vector<8x8xf32>, vector<8x32xf32>, vector<8x32xf32> -> vector<8x32xf32>
    %51 = arith.addf %27, %50 : vector<8x32xf32>
    %52 = vector.extract_strided_slice %24 {offsets = [0, 0, 8], sizes = [1, 8, 8], strides = [1, 1, 1]} : vector<1x8x32xf32> to vector<1x8x8xf32>
    %cst_27 = arith.constant 0.353553385 : f32
    %53 = vector.broadcast %cst_27 : f32 to vector<1x8x8xf32>
    %54 = arith.mulf %52, %53 : vector<1x8x8xf32>
    %55 = vector.extract_strided_slice %25 {offsets = [0, 0, 8], sizes = [1, 8, 8], strides = [1, 1, 1]} : vector<1x8x32xf32> to vector<1x8x8xf32>
    %56 = vector.extract_strided_slice %26 {offsets = [0, 0, 8], sizes = [1, 8, 8], strides = [1, 1, 1]} : vector<1x8x32xf32> to vector<1x8x8xf32>
    "tpu.trace_start"() <{level = 10 : i32, message = "bqd,bkd->bqk"}> : () -> ()
    %cst_28 = arith.constant dense<0.000000e+00> : vector<1x8x8xf32>
    %57 = tpu.matmul %54, %55, %cst_28 {dimension_numbers = #tpu.dot_dimension_numbers<[2], [2], [1], [1], [0, 0, 0, 1, 1, 1], [0], [0]>} : vector<1x8x8xf32>, vector<1x8x8xf32>, vector<1x8x8xf32> -> vector<1x8x8xf32>
    "tpu.trace_stop"() : () -> ()
    %cst_29 = arith.constant dense<0xFF800000> : vector<1x8xf32>
    %58 = vector.multi_reduction <maximumf>, %57, %cst_29 [2] : vector<1x8x8xf32> to vector<1x8xf32>
    %59 = vector.shape_cast %58 : vector<1x8xf32> to vector<1x8x1xf32>
    %60 = vector.broadcast %59 : vector<1x8x1xf32> to vector<1x8x8xf32>
    %61 = arith.subf %57, %60 : vector<1x8x8xf32>
    %62 = math.exp %61 : vector<1x8x8xf32>
    %cst_30 = arith.constant dense<0.000000e+00> : vector<1x8xf32>
    %63 = vector.multi_reduction <add>, %62, %cst_30 [2] : vector<1x8x8xf32> to vector<1x8xf32>
    %64 = vector.shape_cast %63 : vector<1x8xf32> to vector<1x8x1xf32>
    %65 = tpu.reciprocal %64 {approx = true} : vector<1x8x1xf32> -> vector<1x8x1xf32>
    %66 = vector.broadcast %65 : vector<1x8x1xf32> to vector<1x8x8xf32>
    %67 = arith.mulf %62, %66 : vector<1x8x8xf32>
    %c0_31 = arith.constant 0 : index
    %c1 = arith.constant 1 : index
    %c0_32 = arith.constant 0 : index
    %c0_33 = arith.constant 0 : index
    %68 = vector.load %arg9[%c0_31, %c1, %c0_32, %c0_33] : memref<1x4x8x8xf32, #tpu.memory_space<vmem>>, vector<1x1x8x8xf32>
    %69 = vector.shape_cast %68 : vector<1x1x8x8xf32> to vector<1x8x8xf32>
    %70 = vector.shape_cast %67 : vector<1x8x8xf32> to vector<1x1x8x8xf32>
    tpu.vector_store %arg9[%c0_31, %c1, %c0_32, %c0_33], %70 {strides = array<i32>} : memref<1x4x8x8xf32, #tpu.memory_space<vmem>>, vector<1x1x8x8xf32>,
    "tpu.trace_start"() <{level = 10 : i32, message = "bqk,bkd->bqd"}> : () -> ()
    %cst_34 = arith.constant dense<0.000000e+00> : vector<1x8x8xf32>
    %71 = tpu.matmul %67, %56, %cst_34 {dimension_numbers = #tpu.dot_dimension_numbers<[2], [1], [1], [2], [0, 0, 0, 1, 1, 2], [0], [0]>} : vector<1x8x8xf32>, vector<1x8x8xf32>, vector<1x8x8xf32> -> vector<1x8x8xf32>
    "tpu.trace_stop"() : () -> ()
    %72 = vector.shape_cast %71 : vector<1x8x8xf32> to vector<8x8xf32>
    %73 = vector.extract_strided_slice %2 {offsets = [8, 0], sizes = [8, 32], strides = [1, 1]} : vector<32x32xf32> to vector<8x32xf32>
    %cst_35 = arith.constant dense<0.000000e+00> : vector<8x32xf32>
    %74 = tpu.matmul %72, %73, %cst_35 {dimension_numbers = #tpu.dot_dimension_numbers<[1], [0], [0], [1], [0, 0, 1, 1], [], []>} : vector<8x8xf32>, vector<8x32xf32>, vector<8x32xf32> -> vector<8x32xf32>
    %75 = arith.addf %51, %74 : vector<8x32xf32>
    %76 = vector.extract_strided_slice %24 {offsets = [0, 0, 16], sizes = [1, 8, 8], strides = [1, 1, 1]} : vector<1x8x32xf32> to vector<1x8x8xf32>
    %cst_36 = arith.constant 0.353553385 : f32
    %77 = vector.broadcast %cst_36 : f32 to vector<1x8x8xf32>
    %78 = arith.mulf %76, %77 : vector<1x8x8xf32>
    %79 = vector.extract_strided_slice %25 {offsets = [0, 0, 16], sizes = [1, 8, 8], strides = [1, 1, 1]} : vector<1x8x32xf32> to vector<1x8x8xf32>
    %80 = vector.extract_strided_slice %26 {offsets = [0, 0, 16], sizes = [1, 8, 8], strides = [1, 1, 1]} : vector<1x8x32xf32> to vector<1x8x8xf32>
    "tpu.trace_start"() <{level = 10 : i32, message = "bqd,bkd->bqk"}> : () -> ()
    %cst_37 = arith.constant dense<0.000000e+00> : vector<1x8x8xf32>
    %81 = tpu.matmul %78, %79, %cst_37 {dimension_numbers = #tpu.dot_dimension_numbers<[2], [2], [1], [1], [0, 0, 0, 1, 1, 1], [0], [0]>} : vector<1x8x8xf32>, vector<1x8x8xf32>, vector<1x8x8xf32> -> vector<1x8x8xf32>
    "tpu.trace_stop"() : () -> ()
    %cst_38 = arith.constant dense<0xFF800000> : vector<1x8xf32>
    %82 = vector.multi_reduction <maximumf>, %81, %cst_38 [2] : vector<1x8x8xf32> to vector<1x8xf32>
    %83 = vector.shape_cast %82 : vector<1x8xf32> to vector<1x8x1xf32>
    %84 = vector.broadcast %83 : vector<1x8x1xf32> to vector<1x8x8xf32>
    %85 = arith.subf %81, %84 : vector<1x8x8xf32>
    %86 = math.exp %85 : vector<1x8x8xf32>
    %cst_39 = arith.constant dense<0.000000e+00> : vector<1x8xf32>
    %87 = vector.multi_reduction <add>, %86, %cst_39 [2] : vector<1x8x8xf32> to vector<1x8xf32>
    %88 = vector.shape_cast %87 : vector<1x8xf32> to vector<1x8x1xf32>
    %89 = tpu.reciprocal %88 {approx = true} : vector<1x8x1xf32> -> vector<1x8x1xf32>
    %90 = vector.broadcast %89 : vector<1x8x1xf32> to vector<1x8x8xf32>
    %91 = arith.mulf %86, %90 : vector<1x8x8xf32>
    %c0_40 = arith.constant 0 : index
    %c2 = arith.constant 2 : index
    %c0_41 = arith.constant 0 : index
    %c0_42 = arith.constant 0 : index
    %92 = vector.load %arg9[%c0_40, %c2, %c0_41, %c0_42] : memref<1x4x8x8xf32, #tpu.memory_space<vmem>>, vector<1x1x8x8xf32>
    %93 = vector.shape_cast %92 : vector<1x1x8x8xf32> to vector<1x8x8xf32>
    %94 = vector.shape_cast %91 : vector<1x8x8xf32> to vector<1x1x8x8xf32>
    tpu.vector_store %arg9[%c0_40, %c2, %c0_41, %c0_42], %94 {strides = array<i32>} : memref<1x4x8x8xf32, #tpu.memory_space<vmem>>, vector<1x1x8x8xf32>,
    "tpu.trace_start"() <{level = 10 : i32, message = "bqk,bkd->bqd"}> : () -> ()
    %cst_43 = arith.constant dense<0.000000e+00> : vector<1x8x8xf32>
    %95 = tpu.matmul %91, %80, %cst_43 {dimension_numbers = #tpu.dot_dimension_numbers<[2], [1], [1], [2], [0, 0, 0, 1, 1, 2], [0], [0]>} : vector<1x8x8xf32>, vector<1x8x8xf32>, vector<1x8x8xf32> -> vector<1x8x8xf32>
    "tpu.trace_stop"() : () -> ()
    %96 = vector.shape_cast %95 : vector<1x8x8xf32> to vector<8x8xf32>
    %97 = vector.extract_strided_slice %2 {offsets = [16, 0], sizes = [8, 32], strides = [1, 1]} : vector<32x32xf32> to vector<8x32xf32>
    %cst_44 = arith.constant dense<0.000000e+00> : vector<8x32xf32>
    %98 = tpu.matmul %96, %97, %cst_44 {dimension_numbers = #tpu.dot_dimension_numbers<[1], [0], [0], [1], [0, 0, 1, 1], [], []>} : vector<8x8xf32>, vector<8x32xf32>, vector<8x32xf32> -> vector<8x32xf32>
    %99 = arith.addf %75, %98 : vector<8x32xf32>
    %100 = vector.extract_strided_slice %24 {offsets = [0, 0, 24], sizes = [1, 8, 8], strides = [1, 1, 1]} : vector<1x8x32xf32> to vector<1x8x8xf32>
    %cst_45 = arith.constant 0.353553385 : f32
    %101 = vector.broadcast %cst_45 : f32 to vector<1x8x8xf32>
    %102 = arith.mulf %100, %101 : vector<1x8x8xf32>
    %103 = vector.extract_strided_slice %25 {offsets = [0, 0, 24], sizes = [1, 8, 8], strides = [1, 1, 1]} : vector<1x8x32xf32> to vector<1x8x8xf32>
    %104 = vector.extract_strided_slice %26 {offsets = [0, 0, 24], sizes = [1, 8, 8], strides = [1, 1, 1]} : vector<1x8x32xf32> to vector<1x8x8xf32>
    "tpu.trace_start"() <{level = 10 : i32, message = "bqd,bkd->bqk"}> : () -> ()
    %cst_46 = arith.constant dense<0.000000e+00> : vector<1x8x8xf32>
    %105 = tpu.matmul %102, %103, %cst_46 {dimension_numbers = #tpu.dot_dimension_numbers<[2], [2], [1], [1], [0, 0, 0, 1, 1, 1], [0], [0]>} : vector<1x8x8xf32>, vector<1x8x8xf32>, vector<1x8x8xf32> -> vector<1x8x8xf32>
    "tpu.trace_stop"() : () -> ()
    %cst_47 = arith.constant dense<0xFF800000> : vector<1x8xf32>
    %106 = vector.multi_reduction <maximumf>, %105, %cst_47 [2] : vector<1x8x8xf32> to vector<1x8xf32>
    %107 = vector.shape_cast %106 : vector<1x8xf32> to vector<1x8x1xf32>
    %108 = vector.broadcast %107 : vector<1x8x1xf32> to vector<1x8x8xf32>
    %109 = arith.subf %105, %108 : vector<1x8x8xf32>
    %110 = math.exp %109 : vector<1x8x8xf32>
    %cst_48 = arith.constant dense<0.000000e+00> : vector<1x8xf32>
    %111 = vector.multi_reduction <add>, %110, %cst_48 [2] : vector<1x8x8xf32> to vector<1x8xf32>
    %112 = vector.shape_cast %111 : vector<1x8xf32> to vector<1x8x1xf32>
    %113 = tpu.reciprocal %112 {approx = true} : vector<1x8x1xf32> -> vector<1x8x1xf32>
    %114 = vector.broadcast %113 : vector<1x8x1xf32> to vector<1x8x8xf32>
    %115 = arith.mulf %110, %114 : vector<1x8x8xf32>
    %c0_49 = arith.constant 0 : index
    %c3 = arith.constant 3 : index
    %c0_50 = arith.constant 0 : index
    %c0_51 = arith.constant 0 : index
    %116 = vector.load %arg9[%c0_49, %c3, %c0_50, %c0_51] : memref<1x4x8x8xf32, #tpu.memory_space<vmem>>, vector<1x1x8x8xf32>
    %117 = vector.shape_cast %116 : vector<1x1x8x8xf32> to vector<1x8x8xf32>
    %118 = vector.shape_cast %115 : vector<1x8x8xf32> to vector<1x1x8x8xf32>
    tpu.vector_store %arg9[%c0_49, %c3, %c0_50, %c0_51], %118 {strides = array<i32>} : memref<1x4x8x8xf32, #tpu.memory_space<vmem>>, vector<1x1x8x8xf32>,
    "tpu.trace_start"() <{level = 10 : i32, message = "bqk,bkd->bqd"}> : () -> ()
    %cst_52 = arith.constant dense<0.000000e+00> : vector<1x8x8xf32>
    %119 = tpu.matmul %115, %104, %cst_52 {dimension_numbers = #tpu.dot_dimension_numbers<[2], [1], [1], [2], [0, 0, 0, 1, 1, 2], [0], [0]>} : vector<1x8x8xf32>, vector<1x8x8xf32>, vector<1x8x8xf32> -> vector<1x8x8xf32>
    "tpu.trace_stop"() : () -> ()
    %120 = vector.shape_cast %119 : vector<1x8x8xf32> to vector<8x8xf32>
    %121 = vector.extract_strided_slice %2 {offsets = [24, 0], sizes = [8, 32], strides = [1, 1]} : vector<32x32xf32> to vector<8x32xf32>
    %cst_53 = arith.constant dense<0.000000e+00> : vector<8x32xf32>
    %122 = tpu.matmul %120, %121, %cst_53 {dimension_numbers = #tpu.dot_dimension_numbers<[1], [0], [0], [1], [0, 0, 1, 1], [], []>} : vector<8x8xf32>, vector<8x32xf32>, vector<8x32xf32> -> vector<8x32xf32>
    %123 = arith.addf %99, %122 : vector<8x32xf32>
    %c0_54 = arith.constant 0 : index
    %c0_55 = arith.constant 0 : index
    %124 = vector.load %arg7[%c0_54, %c0_55] : memref<1x32xf32, #tpu.memory_space<vmem>>, vector<1x32xf32>
    %125 = vector.broadcast %124 : vector<1x32xf32> to vector<8x32xf32>
    %126 = arith.addf %123, %125 : vector<8x32xf32>
    %127 = vector.shape_cast %126 : vector<8x32xf32> to vector<1x8x32xf32>
    %c0_56 = arith.constant 0 : index
    %c0_57 = arith.constant 0 : index
    %c0_58 = arith.constant 0 : index
    %128 = vector.load %arg8[%c0_56, %c0_57, %c0_58] : memref<1x8x32xf32, #tpu.memory_space<vmem>>, vector<1x8x32xf32>
    tpu.vector_store %arg8[%c0_56, %c0_57, %c0_58], %127 {strides = array<i32>} : memref<1x8x32xf32, #tpu.memory_space<vmem>>, vector<1x8x32xf32>,
    return
  }
  func.func @transform_0(%arg0: i32) -> (i32, i32, i32) {
    %c0_i32 = arith.constant 0 : i32
    %c0_i32_0 = arith.constant 0 : i32
    %c0_i32_1 = arith.constant 0 : i32
    return %arg0, %c0_i32, %c0_i32_0 : i32, i32, i32
  }
  func.func @transform_1(%arg0: i32) -> (i32, i32, i32) {
    %c0_i32 = arith.constant 0 : i32
    %c0_i32_0 = arith.constant 0 : i32
    %c0_i32_1 = arith.constant 0 : i32
    return %arg0, %c0_i32, %c0_i32_0 : i32, i32, i32
  }
  func.func @transform_2(%arg0: i32) -> (i32, i32, i32) {
    %c0_i32 = arith.constant 0 : i32
    %c0_i32_0 = arith.constant 0 : i32
    %c0_i32_1 = arith.constant 0 : i32
    return %arg0, %c0_i32, %c0_i32_0 : i32, i32, i32
  }
  func.func @transform_3(%arg0: i32) -> (i32, i32) {
    %c0_i32 = arith.constant 0 : i32
    %c0_i32_0 = arith.constant 0 : i32
    %c0_i32_1 = arith.constant 0 : i32
    return %c0_i32, %c0_i32_0 : i32, i32
  }
  func.func @transform_4(%arg0: i32) -> (i32, i32) {
    %c0_i32 = arith.constant 0 : i32
    %c0_i32_0 = arith.constant 0 : i32
    %c0_i32_1 = arith.constant 0 : i32
    return %c0_i32, %c0_i32_0 : i32, i32
  }
  func.func @transform_5(%arg0: i32) -> (i32, i32) {
    %c0_i32 = arith.constant 0 : i32
    %c0_i32_0 = arith.constant 0 : i32
    %c0_i32_1 = arith.constant 0 : i32
    return %c0_i32, %c0_i32_0 : i32, i32
  }
  func.func @transform_6(%arg0: i32) -> (i32, i32) {
    %c0_i32 = arith.constant 0 : i32
    %c0_i32_0 = arith.constant 0 : i32
    %c0_i32_1 = arith.constant 0 : i32
    return %c0_i32, %c0_i32_0 : i32, i32
  }
  func.func @transform_7(%arg0: i32) -> (i32, i32, i32) {
    %c0_i32 = arith.constant 0 : i32
    %c0_i32_0 = arith.constant 0 : i32
    %c0_i32_1 = arith.constant 0 : i32
    return %arg0, %c0_i32, %c0_i32_0 : i32, i32, i32
  }
  func.func @transform_8(%arg0: i32) -> (i32, i32, i32, i32) {
    %c0_i32 = arith.constant 0 : i32
    %c0_i32_0 = arith.constant 0 : i32
    %c0_i32_1 = arith.constant 0 : i32
    %c0_i32_2 = arith.constant 0 : i32
    return %arg0, %c0_i32, %c0_i32_0, %c0_i32_1 : i32, i32, i32, i32
  }
}

module attributes {stable_mosaic.version = 11 : i64} {
  func.func @_mha_kernel(%arg0: i32, %arg1: memref<1x8x32xf32, #tpu.memory_space<vmem>>, %arg2: memref<1x8x32xf32, #tpu.memory_space<vmem>>, %arg3: memref<1x8x32xf32, #tpu.memory_space<vmem>>, %arg4: memref<32x96xf32, #tpu.memory_space<vmem>>, %arg5: memref<1x96xf32, #tpu.memory_space<vmem>>, %arg6: memref<32x32xf32, #tpu.memory_space<vmem>>, %arg7: memref<1x32xf32, #tpu.memory_space<vmem>>, %arg8: memref<1x8x32xf32, #tpu.memory_space<vmem>>, %arg9: memref<1x4x8x8xf32, #tpu.memory_space<vmem>>) attributes {dimension_semantics = [#tpu.dimension_semantics<parallel>], iteration_bounds = array<i64: 2>, scalar_prefetch = 0 : i64, scratch_operands = 0 : i64, tpu.core_type = #tpu.core_type<tc>, window_params = [{transform_indices = @transform_0, window_bounds = array<i64: 1, 8, 32>}, {transform_indices = @transform_1, window_bounds = array<i64: 1, 8, 32>}, {transform_indices = @transform_2, window_bounds = array<i64: 1, 8, 32>}, {pipeline_mode = #tpu.pipeline_mode<synchronous>, transform_indices = @transform_3, window_bounds = array<i64: 32, 96>}, {pipeline_mode = #tpu.pipeline_mode<synchronous>, transform_indices = @transform_4, window_bounds = array<i64: 1, 96>}, {pipeline_mode = #tpu.pipeline_mode<synchronous>, transform_indices = @transform_5, window_bounds = array<i64: 32, 32>}, {pipeline_mode = #tpu.pipeline_mode<synchronous>, transform_indices = @transform_6, window_bounds = array<i64: 1, 32>}, {transform_indices = @transform_7, window_bounds = array<i64: 1, 8, 32>}, {transform_indices = @transform_8, window_bounds = array<i64: 1, 4, 8, 8>}]} {
    %c0 = arith.constant 0 : index
    %c0_0 = arith.constant 0 : index
    %0 = vector.load %arg4[%c0, %c0_0] : memref<32x96xf32, #tpu.memory_space<vmem>>, vector<32x96xf32>
    %c0_1 = arith.constant 0 : index
    %c0_2 = arith.constant 0 : index
    %1 = vector.load %arg5[%c0_1, %c0_2] : memref<1x96xf32, #tpu.memory_space<vmem>>, vector<1x96xf32>
    %c0_3 = arith.constant 0 : index
    %c0_4 = arith.constant 0 : index
    %2 = vector.load %arg6[%c0_3, %c0_4] : memref<32x32xf32, #tpu.memory_space<vmem>>, vector<32x32xf32>
    %c0_5 = arith.constant 0 : index
    %c0_6 = arith.constant 0 : index
    %c0_7 = arith.constant 0 : index
    %3 = vector.load %arg1[%c0_5, %c0_6, %c0_7] : memref<1x8x32xf32, #tpu.memory_space<vmem>>, vector<1x8x32xf32>
    %4 = vector.shape_cast %3 : vector<1x8x32xf32> to vector<8x32xf32>
    %c0_8 = arith.constant 0 : index
    %c0_9 = arith.constant 0 : index
    %c0_10 = arith.constant 0 : index
    %5 = vector.load %arg2[%c0_8, %c0_9, %c0_10] : memref<1x8x32xf32, #tpu.memory_space<vmem>>, vector<1x8x32xf32>
    %6 = vector.shape_cast %5 : vector<1x8x32xf32> to vector<8x32xf32>
    %c0_11 = arith.constant 0 : index
    %c0_12 = arith.constant 0 : index
    %c0_13 = arith.constant 0 : index
    %7 = vector.load %arg3[%c0_11, %c0_12, %c0_13] : memref<1x8x32xf32, #tpu.memory_space<vmem>>, vector<1x8x32xf32>
    %8 = vector.shape_cast %7 : vector<1x8x32xf32> to vector<8x32xf32>
    %9 = vector.extract_strided_slice %0 {offsets = [0, 0], sizes = [32, 32], strides = [1, 1]} : vector<32x96xf32> to vector<32x32xf32>
    %cst = arith.constant dense<0.000000e+00> : vector<8x32xf32>
    %10 = tpu.matmul %4, %9, %cst {dimension_numbers = #tpu.dot_dimension_numbers<[1], [0], [0], [1], [0, 0, 1, 1], [], []>} : vector<8x32xf32>, vector<32x32xf32>, vector<8x32xf32> -> vector<8x32xf32>
    %11 = vector.extract_strided_slice %1 {offsets = [0, 0], sizes = [1, 32], strides = [1, 1]} : vector<1x96xf32> to vector<1x32xf32>
    %12 = vector.broadcast %11 : vector<1x32xf32> to vector<8x32xf32>
    %13 = arith.addf %10, %12 : vector<8x32xf32>
    %14 = vector.extract_strided_slice %0 {offsets = [0, 32], sizes = [32, 32], strides = [1, 1]} : vector<32x96xf32> to vector<32x32xf32>
    %cst_14 = arith.constant dense<0.000000e+00> : vector<8x32xf32>
    %15 = tpu.matmul %6, %14, %cst_14 {dimension_numbers = #tpu.dot_dimension_numbers<[1], [0], [0], [1], [0, 0, 1, 1], [], []>} : vector<8x32xf32>, vector<32x32xf32>, vector<8x32xf32> -> vector<8x32xf32>
    %16 = vector.extract_strided_slice %1 {offsets = [0, 32], sizes = [1, 32], strides = [1, 1]} : vector<1x96xf32> to vector<1x32xf32>
    %17 = vector.broadcast %16 : vector<1x32xf32> to vector<8x32xf32>
    %18 = arith.addf %15, %17 : vector<8x32xf32>
    %19 = vector.extract_strided_slice %0 {offsets = [0, 64], sizes = [32, 32], strides = [1, 1]} : vector<32x96xf32> to vector<32x32xf32>
    %cst_15 = arith.constant dense<0.000000e+00> : vector<8x32xf32>
    %20 = tpu.matmul %8, %19, %cst_15 {dimension_numbers = #tpu.dot_dimension_numbers<[1], [0], [0], [1], [0, 0, 1, 1], [], []>} : vector<8x32xf32>, vector<32x32xf32>, vector<8x32xf32> -> vector<8x32xf32>
    %21 = vector.extract_strided_slice %1 {offsets = [0, 64], sizes = [1, 32], strides = [1, 1]} : vector<1x96xf32> to vector<1x32xf32>
    %22 = vector.broadcast %21 : vector<1x32xf32> to vector<8x32xf32>
    %23 = arith.addf %20, %22 : vector<8x32xf32>
    %24 = vector.shape_cast %13 : vector<8x32xf32> to vector<1x8x32xf32>
    %25 = vector.shape_cast %18 : vector<8x32xf32> to vector<1x8x32xf32>
    %26 = vector.shape_cast %23 : vector<8x32xf32> to vector<1x8x32xf32>
    %cst_16 = arith.constant 0.000000e+00 : f32
    %27 = vector.broadcast %cst_16 : f32 to vector<8x32xf32>
    %28 = vector.extract_strided_slice %24 {offsets = [0, 0, 0], sizes = [1, 8, 8], strides = [1, 1, 1]} : vector<1x8x32xf32> to vector<1x8x8xf32>
    %cst_17 = arith.constant 0.353553385 : f32
    %29 = vector.broadcast %cst_17 : f32 to vector<1x8x8xf32>
    %30 = arith.mulf %28, %29 : vector<1x8x8xf32>
    %31 = vector.extract_strided_slice %25 {offsets = [0, 0, 0], sizes = [1, 8, 8], strides = [1, 1, 1]} : vector<1x8x32xf32> to vector<1x8x8xf32>
    %32 = vector.extract_strided_slice %26 {offsets = [0, 0, 0], sizes = [1, 8, 8], strides = [1, 1, 1]} : vector<1x8x32xf32> to vector<1x8x8xf32>
    "tpu.trace_start"() <{level = 10 : i32, message = "bqd,bkd->bqk"}> : () -> ()
    %cst_18 = arith.constant dense<0.000000e+00> : vector<1x8x8xf32>
    %33 = tpu.matmul %30, %31, %cst_18 {dimension_numbers = #tpu.dot_dimension_numbers<[2], [2], [1], [1], [0, 0, 0, 1, 1, 1], [0], [0]>} : vector<1x8x8xf32>, vector<1x8x8xf32>, vector<1x8x8xf32> -> vector<1x8x8xf32>
    "tpu.trace_stop"() : () -> ()
    %cst_19 = arith.constant dense<0xFF800000> : vector<1x8xf32>
    %34 = vector.multi_reduction <maximumf>, %33, %cst_19 [2] : vector<1x8x8xf32> to vector<1x8xf32>
    %35 = vector.shape_cast %34 : vector<1x8xf32> to vector<1x8x1xf32>
    %36 = vector.broadcast %35 : vector<1x8x1xf32> to vector<1x8x8xf32>
    %37 = arith.subf %33, %36 : vector<1x8x8xf32>
    %38 = math.exp %37 : vector<1x8x8xf32>
    %cst_20 = arith.constant dense<0.000000e+00> : vector<1x8xf32>
    %39 = vector.multi_reduction <add>, %38, %cst_20 [2] : vector<1x8x8xf32> to vector<1x8xf32>
    %40 = vector.shape_cast %39 : vector<1x8xf32> to vector<1x8x1xf32>
    %41 = tpu.reciprocal %40 {approx = true} : vector<1x8x1xf32> -> vector<1x8x1xf32>
    %42 = vector.broadcast %41 : vector<1x8x1xf32> to vector<1x8x8xf32>
    %43 = arith.mulf %38, %42 : vector<1x8x8xf32>
    %c0_21 = arith.constant 0 : index
    %c0_22 = arith.constant 0 : index
    %c0_23 = arith.constant 0 : index
    %c0_24 = arith.constant 0 : index
    %44 = vector.load %arg9[%c0_21, %c0_22, %c0_23, %c0_24] : memref<1x4x8x8xf32, #tpu.memory_space<vmem>>, vector<1x1x8x8xf32>
    %45 = vector.shape_cast %44 : vector<1x1x8x8xf32> to vector<1x8x8xf32>
    %46 = vector.shape_cast %43 : vector<1x8x8xf32> to vector<1x1x8x8xf32>
    tpu.vector_store %arg9[%c0_21, %c0_22, %c0_23, %c0_24], %46 {strides = array<i32>} : memref<1x4x8x8xf32, #tpu.memory_space<vmem>>, vector<1x1x8x8xf32>,
    "tpu.trace_start"() <{level = 10 : i32, message = "bqk,bkd->bqd"}> : () -> ()
    %cst_25 = arith.constant dense<0.000000e+00> : vector<1x8x8xf32>
    %47 = tpu.matmul %43, %32, %cst_25 {dimension_numbers = #tpu.dot_dimension_numbers<[2], [1], [1], [2], [0, 0, 0, 1, 1, 2], [0], [0]>} : vector<1x8x8xf32>, vector<1x8x8xf32>, vector<1x8x8xf32> -> vector<1x8x8xf32>
    "tpu.trace_stop"() : () -> ()
    %48 = vector.shape_cast %47 : vector<1x8x8xf32> to vector<8x8xf32>
    %49 = vector.extract_strided_slice %2 {offsets = [0, 0], sizes = [8, 32], strides = [1, 1]} : vector<32x32xf32> to vector<8x32xf32>
    %cst_26 = arith.constant dense<0.000000e+00> : vector<8x32xf32>
    %50 = tpu.matmul %48, %49, %cst_26 {dimension_numbers = #tpu.dot_dimension_numbers<[1], [0], [0], [1], [0, 0, 1, 1], [], []>} : vector<8x8xf32>, vector<8x32xf32>, vector<8x32xf32> -> vector<8x32xf32>
    %51 = arith.addf %27, %50 : vector<8x32xf32>
    %52 = vector.extract_strided_slice %24 {offsets = [0, 0, 8], sizes = [1, 8, 8], strides = [1, 1, 1]} : vector<1x8x32xf32> to vector<1x8x8xf32>
    %cst_27 = arith.constant 0.353553385 : f32
    %53 = vector.broadcast %cst_27 : f32 to vector<1x8x8xf32>
    %54 = arith.mulf %52, %53 : vector<1x8x8xf32>
    %55 = vector.extract_strided_slice %25 {offsets = [0, 0, 8], sizes = [1, 8, 8], strides = [1, 1, 1]} : vector<1x8x32xf32> to vector<1x8x8xf32>
    %56 = vector.extract_strided_slice %26 {offsets = [0, 0, 8], sizes = [1, 8, 8], strides = [1, 1, 1]} : vector<1x8x32xf32> to vector<1x8x8xf32>
    "tpu.trace_start"() <{level = 10 : i32, message = "bqd,bkd->bqk"}> : () -> ()
    %cst_28 = arith.constant dense<0.000000e+00> : vector<1x8x8xf32>
    %57 = tpu.matmul %54, %55, %cst_28 {dimension_numbers = #tpu.dot_dimension_numbers<[2], [2], [1], [1], [0, 0, 0, 1, 1, 1], [0], [0]>} : vector<1x8x8xf32>, vector<1x8x8xf32>, vector<1x8x8xf32> -> vector<1x8x8xf32>
    "tpu.trace_stop"() : () -> ()
    %cst_29 = arith.constant dense<0xFF800000> : vector<1x8xf32>
    %58 = vector.multi_reduction <maximumf>, %57, %cst_29 [2] : vector<1x8x8xf32> to vector<1x8xf32>
    %59 = vector.shape_cast %58 : vector<1x8xf32> to vector<1x8x1xf32>
    %60 = vector.broadcast %59 : vector<1x8x1xf32> to vector<1x8x8xf32>
    %61 = arith.subf %57, %60 : vector<1x8x8xf32>
    %62 = math.exp %61 : vector<1x8x8xf32>
    %cst_30 = arith.constant dense<0.000000e+00> : vector<1x8xf32>
    %63 = vector.multi_reduction <add>, %62, %cst_30 [2] : vector<1x8x8xf32> to vector<1x8xf32>
    %64 = vector.shape_cast %63 : vector<1x8xf32> to vector<1x8x1xf32>
    %65 = tpu.reciprocal %64 {approx = true} : vector<1x8x1xf32> -> vector<1x8x1xf32>
    %66 = vector.broadcast %65 : vector<1x8x1xf32> to vector<1x8x8xf32>
    %67 = arith.mulf %62, %66 : vector<1x8x8xf32>
    %c0_31 = arith.constant 0 : index
    %c1 = arith.constant 1 : index
    %c0_32 = arith.constant 0 : index
    %c0_33 = arith.constant 0 : index
    %68 = vector.load %arg9[%c0_31, %c1, %c0_32, %c0_33] : memref<1x4x8x8xf32, #tpu.memory_space<vmem>>, vector<1x1x8x8xf32>
    %69 = vector.shape_cast %68 : vector<1x1x8x8xf32> to vector<1x8x8xf32>
    %70 = vector.shape_cast %67 : vector<1x8x8xf32> to vector<1x1x8x8xf32>
    tpu.vector_store %arg9[%c0_31, %c1, %c0_32, %c0_33], %70 {strides = array<i32>} : memref<1x4x8x8xf32, #tpu.memory_space<vmem>>, vector<1x1x8x8xf32>,
    "tpu.trace_start"() <{level = 10 : i32, message = "bqk,bkd->bqd"}> : () -> ()
    %cst_34 = arith.constant dense<0.000000e+00> : vector<1x8x8xf32>
    %71 = tpu.matmul %67, %56, %cst_34 {dimension_numbers = #tpu.dot_dimension_numbers<[2], [1], [1], [2], [0, 0, 0, 1, 1, 2], [0], [0]>} : vector<1x8x8xf32>, vector<1x8x8xf32>, vector<1x8x8xf32> -> vector<1x8x8xf32>
    "tpu.trace_stop"() : () -> ()
    %72 = vector.shape_cast %71 : vector<1x8x8xf32> to vector<8x8xf32>
    %73 = vector.extract_strided_slice %2 {offsets = [8, 0], sizes = [8, 32], strides = [1, 1]} : vector<32x32xf32> to vector<8x32xf32>
    %cst_35 = arith.constant dense<0.000000e+00> : vector<8x32xf32>
    %74 = tpu.matmul %72, %73, %cst_35 {dimension_numbers = #tpu.dot_dimension_numbers<[1], [0], [0], [1], [0, 0, 1, 1], [], []>} : vector<8x8xf32>, vector<8x32xf32>, vector<8x32xf32> -> vector<8x32xf32>
    %75 = arith.addf %51, %74 : vector<8x32xf32>
    %76 = vector.extract_strided_slice %24 {offsets = [0, 0, 16], sizes = [1, 8, 8], strides = [1, 1, 1]} : vector<1x8x32xf32> to vector<1x8x8xf32>
    %cst_36 = arith.constant 0.353553385 : f32
    %77 = vector.broadcast %cst_36 : f32 to vector<1x8x8xf32>
    %78 = arith.mulf %76, %77 : vector<1x8x8xf32>
    %79 = vector.extract_strided_slice %25 {offsets = [0, 0, 16], sizes = [1, 8, 8], strides = [1, 1, 1]} : vector<1x8x32xf32> to vector<1x8x8xf32>
    %80 = vector.extract_strided_slice %26 {offsets = [0, 0, 16], sizes = [1, 8, 8], strides = [1, 1, 1]} : vector<1x8x32xf32> to vector<1x8x8xf32>
    "tpu.trace_start"() <{level = 10 : i32, message = "bqd,bkd->bqk"}> : () -> ()
    %cst_37 = arith.constant dense<0.000000e+00> : vector<1x8x8xf32>
    %81 = tpu.matmul %78, %79, %cst_37 {dimension_numbers = #tpu.dot_dimension_numbers<[2], [2], [1], [1], [0, 0, 0, 1, 1, 1], [0], [0]>} : vector<1x8x8xf32>, vector<1x8x8xf32>, vector<1x8x8xf32> -> vector<1x8x8xf32>
    "tpu.trace_stop"() : () -> ()
    %cst_38 = arith.constant dense<0xFF800000> : vector<1x8xf32>
    %82 = vector.multi_reduction <maximumf>, %81, %cst_38 [2] : vector<1x8x8xf32> to vector<1x8xf32>
    %83 = vector.shape_cast %82 : vector<1x8xf32> to vector<1x8x1xf32>
    %84 = vector.broadcast %83 : vector<1x8x1xf32> to vector<1x8x8xf32>
    %85 = arith.subf %81, %84 : vector<1x8x8xf32>
    %86 = math.exp %85 : vector<1x8x8xf32>
    %cst_39 = arith.constant dense<0.000000e+00> : vector<1x8xf32>
    %87 = vector.multi_reduction <add>, %86, %cst_39 [2] : vector<1x8x8xf32> to vector<1x8xf32>
    %88 = vector.shape_cast %87 : vector<1x8xf32> to vector<1x8x1xf32>
    %89 = tpu.reciprocal %88 {approx = true} : vector<1x8x1xf32> -> vector<1x8x1xf32>
    %90 = vector.broadcast %89 : vector<1x8x1xf32> to vector<1x8x8xf32>
    %91 = arith.mulf %86, %90 : vector<1x8x8xf32>
    %c0_40 = arith.constant 0 : index
    %c2 = arith.constant 2 : index
    %c0_41 = arith.constant 0 : index
    %c0_42 = arith.constant 0 : index
    %92 = vector.load %arg9[%c0_40, %c2, %c0_41, %c0_42] : memref<1x4x8x8xf32, #tpu.memory_space<vmem>>, vector<1x1x8x8xf32>
    %93 = vector.shape_cast %92 : vector<1x1x8x8xf32> to vector<1x8x8xf32>
    %94 = vector.shape_cast %91 : vector<1x8x8xf32> to vector<1x1x8x8xf32>
    tpu.vector_store %arg9[%c0_40, %c2, %c0_41, %c0_42], %94 {strides = array<i32>} : memref<1x4x8x8xf32, #tpu.memory_space<vmem>>, vector<1x1x8x8xf32>,
    "tpu.trace_start"() <{level = 10 : i32, message = "bqk,bkd->bqd"}> : () -> ()
    %cst_43 = arith.constant dense<0.000000e+00> : vector<1x8x8xf32>
    %95 = tpu.matmul %91, %80, %cst_43 {dimension_numbers = #tpu.dot_dimension_numbers<[2], [1], [1], [2], [0, 0, 0, 1, 1, 2], [0], [0]>} : vector<1x8x8xf32>, vector<1x8x8xf32>, vector<1x8x8xf32> -> vector<1x8x8xf32>
    "tpu.trace_stop"() : () -> ()
    %96 = vector.shape_cast %95 : vector<1x8x8xf32> to vector<8x8xf32>
    %97 = vector.extract_strided_slice %2 {offsets = [16, 0], sizes = [8, 32], strides = [1, 1]} : vector<32x32xf32> to vector<8x32xf32>
    %cst_44 = arith.constant dense<0.000000e+00> : vector<8x32xf32>
    %98 = tpu.matmul %96, %97, %cst_44 {dimension_numbers = #tpu.dot_dimension_numbers<[1], [0], [0], [1], [0, 0, 1, 1], [], []>} : vector<8x8xf32>, vector<8x32xf32>, vector<8x32xf32> -> vector<8x32xf32>
    %99 = arith.addf %75, %98 : vector<8x32xf32>
    %100 = vector.extract_strided_slice %24 {offsets = [0, 0, 24], sizes = [1, 8, 8], strides = [1, 1, 1]} : vector<1x8x32xf32> to vector<1x8x8xf32>
    %cst_45 = arith.constant 0.353553385 : f32
    %101 = vector.broadcast %cst_45 : f32 to vector<1x8x8xf32>
    %102 = arith.mulf %100, %101 : vector<1x8x8xf32>
    %103 = vector.extract_strided_slice %25 {offsets = [0, 0, 24], sizes = [1, 8, 8], strides = [1, 1, 1]} : vector<1x8x32xf32> to vector<1x8x8xf32>
    %104 = vector.extract_strided_slice %26 {offsets = [0, 0, 24], sizes = [1, 8, 8], strides = [1, 1, 1]} : vector<1x8x32xf32> to vector<1x8x8xf32>
    "tpu.trace_start"() <{level = 10 : i32, message = "bqd,bkd->bqk"}> : () -> ()
    %cst_46 = arith.constant dense<0.000000e+00> : vector<1x8x8xf32>
    %105 = tpu.matmul %102, %103, %cst_46 {dimension_numbers = #tpu.dot_dimension_numbers<[2], [2], [1], [1], [0, 0, 0, 1, 1, 1], [0], [0]>} : vector<1x8x8xf32>, vector<1x8x8xf32>, vector<1x8x8xf32> -> vector<1x8x8xf32>
    "tpu.trace_stop"() : () -> ()
    %cst_47 = arith.constant dense<0xFF800000> : vector<1x8xf32>
    %106 = vector.multi_reduction <maximumf>, %105, %cst_47 [2] : vector<1x8x8xf32> to vector<1x8xf32>
    %107 = vector.shape_cast %106 : vector<1x8xf32> to vector<1x8x1xf32>
    %108 = vector.broadcast %107 : vector<1x8x1xf32> to vector<1x8x8xf32>
    %109 = arith.subf %105, %108 : vector<1x8x8xf32>
    %110 = math.exp %109 : vector<1x8x8xf32>
    %cst_48 = arith.constant dense<0.000000e+00> : vector<1x8xf32>
    %111 = vector.multi_reduction <add>, %110, %cst_48 [2] : vector<1x8x8xf32> to vector<1x8xf32>
    %112 = vector.shape_cast %111 : vector<1x8xf32> to vector<1x8x1xf32>
    %113 = tpu.reciprocal %112 {approx = true} : vector<1x8x1xf32> -> vector<1x8x1xf32>
    %114 = vector.broadcast %113 : vector<1x8x1xf32> to vector<1x8x8xf32>
    %115 = arith.mulf %110, %114 : vector<1x8x8xf32>
    %c0_49 = arith.constant 0 : index
    %c3 = arith.constant 3 : index
    %c0_50 = arith.constant 0 : index
    %c0_51 = arith.constant 0 : index
    %116 = vector.load %arg9[%c0_49, %c3, %c0_50, %c0_51] : memref<1x4x8x8xf32, #tpu.memory_space<vmem>>, vector<1x1x8x8xf32>
    %117 = vector.shape_cast %116 : vector<1x1x8x8xf32> to vector<1x8x8xf32>
    %118 = vector.shape_cast %115 : vector<1x8x8xf32> to vector<1x1x8x8xf32>
    tpu.vector_store %arg9[%c0_49, %c3, %c0_50, %c0_51], %118 {strides = array<i32>} : memref<1x4x8x8xf32, #tpu.memory_space<vmem>>, vector<1x1x8x8xf32>,
    "tpu.trace_start"() <{level = 10 : i32, message = "bqk,bkd->bqd"}> : () -> ()
    %cst_52 = arith.constant dense<0.000000e+00> : vector<1x8x8xf32>
    %119 = tpu.matmul %115, %104, %cst_52 {dimension_numbers = #tpu.dot_dimension_numbers<[2], [1], [1], [2], [0, 0, 0, 1, 1, 2], [0], [0]>} : vector<1x8x8xf32>, vector<1x8x8xf32>, vector<1x8x8xf32> -> vector<1x8x8xf32>
    "tpu.trace_stop"() : () -> ()
    %120 = vector.shape_cast %119 : vector<1x8x8xf32> to vector<8x8xf32>
    %121 = vector.extract_strided_slice %2 {offsets = [24, 0], sizes = [8, 32], strides = [1, 1]} : vector<32x32xf32> to vector<8x32xf32>
    %cst_53 = arith.constant dense<0.000000e+00> : vector<8x32xf32>
    %122 = tpu.matmul %120, %121, %cst_53 {dimension_numbers = #tpu.dot_dimension_numbers<[1], [0], [0], [1], [0, 0, 1, 1], [], []>} : vector<8x8xf32>, vector<8x32xf32>, vector<8x32xf32> -> vector<8x32xf32>
    %123 = arith.addf %99, %122 : vector<8x32xf32>
    %c0_54 = arith.constant 0 : index
    %c0_55 = arith.constant 0 : index
    %124 = vector.load %arg7[%c0_54, %c0_55] : memref<1x32xf32, #tpu.memory_space<vmem>>, vector<1x32xf32>
    %125 = vector.broadcast %124 : vector<1x32xf32> to vector<8x32xf32>
    %126 = arith.addf %123, %125 : vector<8x32xf32>
    %127 = vector.shape_cast %126 : vector<8x32xf32> to vector<1x8x32xf32>
    %c0_56 = arith.constant 0 : index
    %c0_57 = arith.constant 0 : index
    %c0_58 = arith.constant 0 : index
    %128 = vector.load %arg8[%c0_56, %c0_57, %c0_58] : memref<1x8x32xf32, #tpu.memory_space<vmem>>, vector<1x8x32xf32>
    tpu.vector_store %arg8[%c0_56, %c0_57, %c0_58], %127 {strides = array<i32>} : memref<1x8x32xf32, #tpu.memory_space<vmem>>, vector<1x8x32xf32>,
    return
  }
  func.func @transform_0(%arg0: i32) -> (i32, i32, i32) {
    %c0_i32 = arith.constant 0 : i32
    %c0_i32_0 = arith.constant 0 : i32
    %c0_i32_1 = arith.constant 0 : i32
    return %arg0, %c0_i32, %c0_i32_0 : i32, i32, i32
  }
  func.func @transform_1(%arg0: i32) -> (i32, i32, i32) {
    %c0_i32 = arith.constant 0 : i32
    %c0_i32_0 = arith.constant 0 : i32
    %c0_i32_1 = arith.constant 0 : i32
    return %arg0, %c0_i32, %c0_i32_0 : i32, i32, i32
  }
  func.func @transform_2(%arg0: i32) -> (i32, i32, i32) {
    %c0_i32 = arith.constant 0 : i32
    %c0_i32_0 = arith.constant 0 : i32
    %c0_i32_1 = arith.constant 0 : i32
    return %arg0, %c0_i32, %c0_i32_0 : i32, i32, i32
  }
  func.func @transform_3(%arg0: i32) -> (i32, i32) {
    %c0_i32 = arith.constant 0 : i32
    %c0_i32_0 = arith.constant 0 : i32
    %c0_i32_1 = arith.constant 0 : i32
    return %c0_i32, %c0_i32_0 : i32, i32
  }
  func.func @transform_4(%arg0: i32) -> (i32, i32) {
    %c0_i32 = arith.constant 0 : i32
    %c0_i32_0 = arith.constant 0 : i32
    %c0_i32_1 = arith.constant 0 : i32
    return %c0_i32, %c0_i32_0 : i32, i32
  }
  func.func @transform_5(%arg0: i32) -> (i32, i32) {
    %c0_i32 = arith.constant 0 : i32
    %c0_i32_0 = arith.constant 0 : i32
    %c0_i32_1 = arith.constant 0 : i32
    return %c0_i32, %c0_i32_0 : i32, i32
  }
  func.func @transform_6(%arg0: i32) -> (i32, i32) {
    %c0_i32 = arith.constant 0 : i32
    %c0_i32_0 = arith.constant 0 : i32
    %c0_i32_1 = arith.constant 0 : i32
    return %c0_i32, %c0_i32_0 : i32, i32
  }
  func.func @transform_7(%arg0: i32) -> (i32, i32, i32) {
    %c0_i32 = arith.constant 0 : i32
    %c0_i32_0 = arith.constant 0 : i32
    %c0_i32_1 = arith.constant 0 : i32
    return %arg0, %c0_i32, %c0_i32_0 : i32, i32, i32
  }
  func.func @transform_8(%arg0: i32) -> (i32, i32, i32, i32) {
    %c0_i32 = arith.constant 0 : i32
    %c0_i32_0 = arith.constant 0 : i32
    %c0_i32_1 = arith.constant 0 : i32
    %c0_i32_2 = arith.constant 0 : i32
    return %arg0, %c0_i32, %c0_i32_0, %c0_i32_1 : i32, i32, i32, i32
  }
}

</mosaic_0001>

<llo_original>
// kernel: tpu_custom_call.1
$region0: #{tpu_custom_call.1}
  #allocation0 [shape = 'u32[]', space=smem, size = 0x4, offset = 0x4, fixed_abs, tag = 'smem constant byte address 0x4 - core index']
  #allocation1 [shape = 'u32[144,128]{1,0:T(1,128)}', space=vmem, size = 0x12000, scoped, tag = 'internal scratch']
  %s0 = inlined_call_operand.hbm [shape: f32[2,8,32], index: 0, kind: input, shape index: {}]
  %s1 = inlined_call_operand.hbm [shape: f32[2,8,32], index: 1, kind: input, shape index: {}]
  %s2 = inlined_call_operand.hbm [shape: f32[2,8,32], index: 2, kind: input, shape index: {}]
  %s3 = inlined_call_operand.hbm [shape: f32[32,96], index: 3, kind: input, shape index: {}]
  %s4 = inlined_call_operand.vmem [shape: f32[1,96], index: 4, kind: input, shape index: {}]
  %s5 = inlined_call_operand.hbm [shape: f32[32,32], index: 5, kind: input, shape index: {}]
  %s6 = inlined_call_operand.vmem [shape: f32[1,32], index: 6, kind: input, shape index: {}]
  %s7 = inlined_call_operand.hbm [shape: f32[2,8,32], index: 7, kind: output, shape index: {0}]
  %s8 = inlined_call_operand.hbm [shape: f32[2,4,8,8], index: 8, kind: output, shape index: {1}]
  %9 = xla_tuple %s7, %s8
  %s10 = sld [smem:[#allocation0]]
  $region89: #{tpu_custom_call.1} parent=0
    _
  %s12 = ssub.s32 1, %s10
  %s13 = scalar_select 0, %s12, %s10
  $region1: #{tpu_custom_call.1} parent=0
    #allocation2 [shape = 'u8[8192]{0}', space=vmem, size = 0x2000, scoped, tag = 'input window, operand 0']
    #allocation3 [shape = 's32[2]{0}', space=sflag, size = 0x8, scoped, tag = 'scoped memory for tpu_custom_call.1']
    #allocation4 [shape = 's32[2]{0}', space=sflag, size = 0x8, scoped, tag = 'scoped memory for tpu_custom_call.1']
    #allocation5 [shape = 'u8[8192]{0}', space=vmem, size = 0x2000, scoped, tag = 'input window, operand 1']
    #allocation6 [shape = 's32[2]{0}', space=sflag, size = 0x8, scoped, tag = 'scoped memory for tpu_custom_call.1']
    #allocation7 [shape = 'u8[8192]{0}', space=vmem, size = 0x2000, scoped, tag = 'input window, operand 2']
    #allocation8 [shape = 'u8[16384]{0}', space=vmem, size = 0x4000, scoped, tag = 'input window, operand 3, single buffered']
    #allocation9 [shape = 's32[1]{0}', space=sflag, size = 0x4, scoped, tag = 'scoped memory for tpu_custom_call.1']
    #allocation10 [shape = 'u8[16384]{0}', space=vmem, size = 0x4000, scoped, tag = 'input window, operand 5, single buffered']
    #allocation11 [shape = 'u8[8192]{0}', space=vmem, size = 0x2000, scoped, tag = 'output window, operand 0']
    #allocation12 [shape = 'u8[32768]{0}', space=vmem, size = 0x8000, scoped, tag = 'output window, operand 1']
    #allocation13 [shape = 's32[2]{0}', space=sflag, size = 0x8, scoped, tag = 'scoped memory for tpu_custom_call.1']
    %14 = vsyncpa [#allocation3], 0
    %s15 = scalar_lea.sflag [#allocation3], 1
    %16 = vsyncpa %s15, 0
    %17 = vsyncpa [#allocation6], 0
    %s18 = scalar_lea.sflag [#allocation6], 1
    %19 = vsyncpa %s18, 0
    %20 = vsyncpa [#allocation9], 0
    %21 = vsyncpa [#allocation4], 0
    %s22 = scalar_lea.sflag [#allocation4], 1
    %23 = vsyncpa %s22, 0
    %24 = vsyncpa [#allocation13], 0
    %s25 = scalar_lea.sflag [#allocation13], 1
    %26 = vsyncpa %s25, 0
    loop: start=0, step=1, limit=4
    $region2: #{tpu_custom_call.1} parent=1 // loop_pre_header
      _
    $region3: #{tpu_custom_call.1} parent=1 // loop_header
      %s28 = sphi 0, %s32
      %p29 = scmp.ge.s32.totalorder %s28, 4
      %s38 = sphi 0, %s40
      %s41 = sphi 0, %s38
      %s42 = sphi 0, %s41
      %s58 = sphi 0, %s42
      %s64 = sphi 0, %s66
      %s67 = sphi 0, %s64
      %s68 = sphi 0, %s67
      %s84 = sphi 0, %s68
      %s90 = sphi 0, %s92
      %s93 = sphi 0, %s90
      %s94 = sphi 0, %s93
      %s110 = sphi 0, %s94
      %s114 = sphi 0, %s114
      %s116 = sphi 0, %s114
      %s117 = sphi 0, %s116
      %s131 = sphi 0, %s117
      %s135 = sphi 0, %s135
      %s137 = sphi 0, %s135
      %s138 = sphi 0, %s137
      %s152 = sphi 0, %s138
      %s156 = sphi 0, %s156
      %s158 = sphi 0, %s156
      %s159 = sphi 0, %s158
      %s173 = sphi 0, %s159
      %s177 = sphi 0, %s177
      %s179 = sphi 0, %s177
      %s180 = sphi 0, %s179
      %s194 = sphi 0, %s180
      %s200 = sphi 0, %s202
      %s203 = sphi 0, %s200
      %s204 = sphi 0, %s203
      %s220 = sphi 0, %s204
      %s226 = sphi 0, %s228
      %s229 = sphi 0, %s226
      %s230 = sphi 0, %s229
      %s246 = sphi 0, %s230
    $region4: #{tpu_custom_call.1} parent=1 // loop_header_branch
      %31 = sbr.rel (%p29) target = $region8
    $region5: #{tpu_custom_call.1} parent=1 // loop_body
      %s33 = ssub.s32 %s28, 1
      %s34 = ssub.s32 %s28, 2
      %s35 = sadd.s32 %s28, 1
      %s36 = ssub.s32 %s28, %s35
      %p37 = scmp.eq.s32.totalorder %s36, 0
      %s39 = sadd.s32 %s38, 1
      %s40 = scalar_select %p37, %s38, %s39
      %p43 = pneg %p37
      %p44 = scmp.eq.s32.totalorder %s28, 1
      %p45 = por %p43, %p44
      %p46 = scmp.ne.s32.totalorder %s38, %s41
      %p47 = scmp.eq.s32.totalorder %s28, 0
      %p48 = por %p46, %p47
      %p49 = scmp.ne.s32.totalorder %s38, %s41
      %p50 = scmp.eq.s32.totalorder %s33, 1
      %p51 = por %p49, %p50
      %p52 = scmp.ne.s32.totalorder %s41, %s42
      %p53 = scmp.eq.s32.totalorder %s33, 0
      %p54 = por %p52, %p53
      %p55 = scmp.ne.s32.totalorder %s41, %s42
      %p56 = scmp.eq.s32.totalorder %s34, 1
      %p57 = por %p55, %p56
      %p59 = scmp.ne.s32.totalorder %s42, %s58
      %p60 = scmp.eq.s32.totalorder %s34, 0
      %p61 = por %p59, %p60
      %s62 = ssub.s32 %s28, %s35
      %p63 = scmp.eq.s32.totalorder %s62, 0
      %s65 = sadd.s32 %s64, 1
      %s66 = scalar_select %p63, %s64, %s65
      %p69 = pneg %p63
      %p70 = scmp.eq.s32.totalorder %s28, 1
      %p71 = por %p69, %p70
      %p72 = scmp.ne.s32.totalorder %s64, %s67
      %p73 = scmp.eq.s32.totalorder %s28, 0
      %p74 = por %p72, %p73
      %p75 = scmp.ne.s32.totalorder %s64, %s67
      %p76 = scmp.eq.s32.totalorder %s33, 1
      %p77 = por %p75, %p76
      %p78 = scmp.ne.s32.totalorder %s67, %s68
      %p79 = scmp.eq.s32.totalorder %s33, 0
      %p80 = por %p78, %p79
      %p81 = scmp.ne.s32.totalorder %s67, %s68
      %p82 = scmp.eq.s32.totalorder %s34, 1
      %p83 = por %p81, %p82
      %p85 = scmp.ne.s32.totalorder %s68, %s84
      %p86 = scmp.eq.s32.totalorder %s34, 0
      %p87 = por %p85, %p86
      %s88 = ssub.s32 %s28, %s35
      %p89 = scmp.eq.s32.totalorder %s88, 0
      %s91 = sadd.s32 %s90, 1
      %s92 = scalar_select %p89, %s90, %s91
      %p95 = pneg %p89
      %p96 = scmp.eq.s32.totalorder %s28, 1
      %p97 = por %p95, %p96
      %p98 = scmp.ne.s32.totalorder %s90, %s93
      %p99 = scmp.eq.s32.totalorder %s28, 0
      %p100 = por %p98, %p99
      %p101 = scmp.ne.s32.totalorder %s90, %s93
      %p102 = scmp.eq.s32.totalorder %s33, 1
      %p103 = por %p101, %p102
      %p104 = scmp.ne.s32.totalorder %s93, %s94
      %p105 = scmp.eq.s32.totalorder %s33, 0
      %p106 = por %p104, %p105
      %p107 = scmp.ne.s32.totalorder %s93, %s94
      %p108 = scmp.eq.s32.totalorder %s34, 1
      %p109 = por %p107, %p108
      %p111 = scmp.ne.s32.totalorder %s94, %s110
      %p112 = scmp.eq.s32.totalorder %s34, 0
      %p113 = por %p111, %p112
      %s115 = sadd.s32 %s114, 1
      %p118 = scmp.eq.s32.totalorder %s28, 1
      %p119 = scmp.ne.s32.totalorder %s114, %s116
      %p120 = scmp.eq.s32.totalorder %s28, 0
      %p121 = por %p119, %p120
      %p122 = scmp.ne.s32.totalorder %s114, %s116
      %p123 = scmp.eq.s32.totalorder %s33, 1
      %p124 = por %p122, %p123
      %p125 = scmp.ne.s32.totalorder %s116, %s117
      %p126 = scmp.eq.s32.totalorder %s33, 0
      %p127 = por %p125, %p126
      %p128 = scmp.ne.s32.totalorder %s116, %s117
      %p129 = scmp.eq.s32.totalorder %s34, 1
      %p130 = por %p128, %p129
      %p132 = scmp.ne.s32.totalorder %s117, %s131
      %p133 = scmp.eq.s32.totalorder %s34, 0
      %p134 = por %p132, %p133
      %s136 = sadd.s32 %s135, 1
      %p139 = scmp.eq.s32.totalorder %s28, 1
      %p140 = scmp.ne.s32.totalorder %s135, %s137
      %p141 = scmp.eq.s32.totalorder %s28, 0
      %p142 = por %p140, %p141
      %p143 = scmp.ne.s32.totalorder %s135, %s137
      %p144 = scmp.eq.s32.totalorder %s33, 1
      %p145 = por %p143, %p144
      %p146 = scmp.ne.s32.totalorder %s137, %s138
      %p147 = scmp.eq.s32.totalorder %s33, 0
      %p148 = por %p146, %p147
      %p149 = scmp.ne.s32.totalorder %s137, %s138
      %p150 = scmp.eq.s32.totalorder %s34, 1
      %p151 = por %p149, %p150
      %p153 = scmp.ne.s32.totalorder %s138, %s152
      %p154 = scmp.eq.s32.totalorder %s34, 0
      %p155 = por %p153, %p154
      %s157 = sadd.s32 %s156, 1
      %p160 = scmp.eq.s32.totalorder %s28, 1
      %p161 = scmp.ne.s32.totalorder %s156, %s158
      %p162 = scmp.eq.s32.totalorder %s28, 0
      %p163 = por %p161, %p162
      %p164 = scmp.ne.s32.totalorder %s156, %s158
      %p165 = scmp.eq.s32.totalorder %s33, 1
      %p166 = por %p164, %p165
      %p167 = scmp.ne.s32.totalorder %s158, %s159
      %p168 = scmp.eq.s32.totalorder %s33, 0
      %p169 = por %p167, %p168
      %p170 = scmp.ne.s32.totalorder %s158, %s159
      %p171 = scmp.eq.s32.totalorder %s34, 1
      %p172 = por %p170, %p171
      %p174 = scmp.ne.s32.totalorder %s159, %s173
      %p175 = scmp.eq.s32.totalorder %s34, 0
      %p176 = por %p174, %p175
      %s178 = sadd.s32 %s177, 1
      %p181 = scmp.eq.s32.totalorder %s28, 1
      %p182 = scmp.ne.s32.totalorder %s177, %s179
      %p183 = scmp.eq.s32.totalorder %s28, 0
      %p184 = por %p182, %p183
      %p185 = scmp.ne.s32.totalorder %s177, %s179
      %p186 = scmp.eq.s32.totalorder %s33, 1
      %p187 = por %p185, %p186
      %p188 = scmp.ne.s32.totalorder %s179, %s180
      %p189 = scmp.eq.s32.totalorder %s33, 0
      %p190 = por %p188, %p189
      %p191 = scmp.ne.s32.totalorder %s179, %s180
      %p192 = scmp.eq.s32.totalorder %s34, 1
      %p193 = por %p191, %p192
      %p195 = scmp.ne.s32.totalorder %s180, %s194
      %p196 = scmp.eq.s32.totalorder %s34, 0
      %p197 = por %p195, %p196
      %s198 = ssub.s32 %s28, %s35
      %p199 = scmp.eq.s32.totalorder %s198, 0
      %s201 = sadd.s32 %s200, 1
      %s202 = scalar_select %p199, %s200, %s201
      %p205 = pneg %p199
      %p206 = scmp.eq.s32.totalorder %s28, 1
      %p207 = por %p205, %p206
      %p208 = scmp.ne.s32.totalorder %s200, %s203
      %p209 = scmp.eq.s32.totalorder %s28, 0
      %p210 = por %p208, %p209
      %p211 = scmp.ne.s32.totalorder %s200, %s203
      %p212 = scmp.eq.s32.totalorder %s33, 1
      %p213 = por %p211, %p212
      %p214 = scmp.ne.s32.totalorder %s203, %s204
      %p215 = scmp.eq.s32.totalorder %s33, 0
      %p216 = por %p214, %p215
      %p217 = scmp.ne.s32.totalorder %s203, %s204
      %p218 = scmp.eq.s32.totalorder %s34, 1
      %p219 = por %p217, %p218
      %p221 = scmp.ne.s32.totalorder %s204, %s220
      %p222 = scmp.eq.s32.totalorder %s34, 0
      %p223 = por %p221, %p222
      %s224 = ssub.s32 %s28, %s35
      %p225 = scmp.eq.s32.totalorder %s224, 0
      %s227 = sadd.s32 %s226, 1
      %s228 = scalar_select %p225, %s226, %s227
      %p231 = pneg %p225
      %p232 = scmp.eq.s32.totalorder %s28, 1
      %p233 = por %p231, %p232
      %p234 = scmp.ne.s32.totalorder %s226, %s229
      %p235 = scmp.eq.s32.totalorder %s28, 0
      %p236 = por %p234, %p235
      %p237 = scmp.ne.s32.totalorder %s226, %s229
      %p238 = scmp.eq.s32.totalorder %s33, 1
      %p239 = por %p237, %p238
      %p240 = scmp.ne.s32.totalorder %s229, %s230
      %p241 = scmp.eq.s32.totalorder %s33, 0
      %p242 = por %p240, %p241
      %p243 = scmp.ne.s32.totalorder %s229, %s230
      %p244 = scmp.eq.s32.totalorder %s34, 1
      %p245 = por %p243, %p244
      %p247 = scmp.ne.s32.totalorder %s230, %s246
      %p248 = scmp.eq.s32.totalorder %s34, 0
      %p249 = por %p247, %p248
      %p250 = scmp.le.s32.totalorder 1, %s28
      %p251 = scmp.lt.s32.totalorder %s28, 3
      %p252 = pnand %p250, %p251
      %p253 = pneg %p252
      // Predicated region
      $region9: #{tpu_custom_call.1} parent=5 // pred_check
        _
      $region10: #{tpu_custom_call.1} parent=5 // pred_check_branch
        %255 = sbr.rel (%p252) target = $region12
      $region11: #{tpu_custom_call.1} parent=5 // pred_region
        %s256 = ssub.s32 %s28, 1
        // Predicated region
        $region13: #{tpu_custom_call.1} parent=11 // pred_check
          %p257 = pneg %p127
        $region14: #{tpu_custom_call.1} parent=11 // pred_check_branch
          %259 = sbr.rel (%p257) target = $region16
        $region15: #{tpu_custom_call.1} parent=11 // pred_region
          %s261 = ssub.s32 512, 512
          %262 = vsyncadd [#allocation9], %s261
          %s263 = sshll.u32 [#allocation8], 4
          %s264 = int_to_ptr.vmem [resolvable:$true] %s263
          %269 = dma.hbm_to_vmem [thread:$0]  %s3, 512, %s264, [#allocation9], 128, 128, 8
        $region16: #{tpu_custom_call.1} parent=11 // pred_fallthru
          _
        // Predicated region
        $region17: #{tpu_custom_call.1} parent=11 // pred_check
          %p270 = pneg %p148
        $region18: #{tpu_custom_call.1} parent=11 // pred_check_branch
          %272 = sbr.rel (%p270) target = $region20
        $region19: #{tpu_custom_call.1} parent=11 // pred_region
          _
        $region20: #{tpu_custom_call.1} parent=11 // pred_fallthru
          _
        // Predicated region
        $region21: #{tpu_custom_call.1} parent=11 // pred_check
          %p273 = pneg %p169
        $region22: #{tpu_custom_call.1} parent=11 // pred_check_branch
          %275 = sbr.rel (%p273) target = $region24
        $region23: #{tpu_custom_call.1} parent=11 // pred_region
          %s277 = ssub.s32 512, 512
          %278 = vsyncadd [#allocation9], %s277
          %s279 = sshll.u32 [#allocation10], 4
          %s280 = int_to_ptr.vmem [resolvable:$true] %s279
          %285 = dma.hbm_to_vmem [thread:$0]  %s5, 512, %s280, [#allocation9], 128, 128, 8
        $region24: #{tpu_custom_call.1} parent=11 // pred_fallthru
          _
        // Predicated region
        $region25: #{tpu_custom_call.1} parent=11 // pred_check
          %p286 = pneg %p190
        $region26: #{tpu_custom_call.1} parent=11 // pred_check_branch
          %288 = sbr.rel (%p286) target = $region28
        $region27: #{tpu_custom_call.1} parent=11 // pred_region
          _
        $region28: #{tpu_custom_call.1} parent=11 // pred_fallthru
          _
      $region12: #{tpu_custom_call.1} parent=5 // pred_fallthru
        _
      %p289 = scmp.lt.s32.totalorder %s28, 2
      // Predicated region
      $region29: #{tpu_custom_call.1} parent=5 // pred_check
        %p290 = pneg %p289
      $region30: #{tpu_custom_call.1} parent=5 // pred_check_branch
        %292 = sbr.rel (%p290) target = $region32
      $region31: #{tpu_custom_call.1} parent=5 // pred_region
        // Predicated region
        $region33: #{tpu_custom_call.1} parent=31 // pred_check
          %p293 = pneg %p48
        $region34: #{tpu_custom_call.1} parent=31 // pred_check_branch
          %295 = sbr.rel (%p293) target = $region36
        $region35: #{tpu_custom_call.1} parent=31 // pred_region
          %s296 = sand.u32 %s38, 1
          %s297 = scalar_lea.sflag [#allocation3], %s296
          %s298 = sand.u32 %s38, 1
          %s299 = smul.addr %s298, 8
          %s300 = scalar_lea.vmem [#allocation2], %s299
          %s302 = ssub.s32 128, 128
          %303 = vsyncadd %s297, %s302
          %s304 = smul.addr %s28, 128
          %s305 = scalar_lea.hbm %s0, %s304
          %s307 = sshll.u32 %s300, 4
          %s308 = int_to_ptr.vmem [resolvable:$true] %s307
          %310 = dma.hbm_to_vmem [thread:$0]  %s305, 128, %s308, %s297
        $region36: #{tpu_custom_call.1} parent=31 // pred_fallthru
          _
        // Predicated region
        $region37: #{tpu_custom_call.1} parent=31 // pred_check
          %p311 = pneg %p74
        $region38: #{tpu_custom_call.1} parent=31 // pred_check_branch
          %313 = sbr.rel (%p311) target = $region40
        $region39: #{tpu_custom_call.1} parent=31 // pred_region
          %s314 = sand.u32 %s28, 1
          %s315 = scalar_lea.sflag [#allocation6], %s314
          %s316 = sand.u32 %s64, 1
          %s317 = smul.addr %s316, 8
          %s318 = scalar_lea.vmem [#allocation5], %s317
          %s320 = ssub.s32 128, 128
          %321 = vsyncadd %s315, %s320
          %s322 = smul.addr %s28, 128
          %s323 = scalar_lea.hbm %s1, %s322
          %s325 = sshll.u32 %s318, 4
          %s326 = int_to_ptr.vmem [resolvable:$true] %s325
          %328 = dma.hbm_to_vmem [thread:$0]  %s323, 128, %s326, %s315
        $region40: #{tpu_custom_call.1} parent=31 // pred_fallthru
          _
        // Predicated region
        $region41: #{tpu_custom_call.1} parent=31 // pred_check
          %p329 = pneg %p100
        $region42: #{tpu_custom_call.1} parent=31 // pred_check_branch
          %331 = sbr.rel (%p329) target = $region44
        $region43: #{tpu_custom_call.1} parent=31 // pred_region
          %s332 = sand.u32 %s28, 1
          %s333 = scalar_lea.sflag [#allocation6], %s332
          %s334 = sand.u32 %s90, 1
          %s335 = smul.addr %s334, 8
          %s336 = scalar_lea.vmem [#allocation7], %s335
          %s338 = ssub.s32 128, 128
          %339 = vsyncadd %s333, %s338
          %s340 = smul.addr %s28, 128
          %s341 = scalar_lea.hbm %s2, %s340
          %s343 = sshll.u32 %s336, 4
          %s344 = int_to_ptr.vmem [resolvable:$true] %s343
          %346 = dma.hbm_to_vmem [thread:$0]  %s341, 128, %s344, %s333
        $region44: #{tpu_custom_call.1} parent=31 // pred_fallthru
          _
      $region32: #{tpu_custom_call.1} parent=5 // pred_fallthru
        _
      %p347 = scmp.le.s32.totalorder 1, %s28
      %p348 = scmp.lt.s32.totalorder %s28, 3
      %p349 = pnand %p347, %p348
      %p350 = pneg %p349
      // Predicated region
      $region45: #{tpu_custom_call.1} parent=5 // pred_check
        _
      $region46: #{tpu_custom_call.1} parent=5 // pred_check_branch
        %352 = sbr.rel (%p349) target = $region48
      $region47: #{tpu_custom_call.1} parent=5 // pred_region
        %s353 = ssub.s32 %s28, 1
        %s354 = sand.u32 %s41, 1
        %s355 = scalar_lea.sflag [#allocation3], %s354
        %s356 = sand.u32 %s41, 1
        %s357 = smul.addr %s356, 8
        %s358 = scalar_lea.vmem [#allocation2], %s357
        // Predicated region
        $region49: #{tpu_custom_call.1} parent=47 // pred_check
          %p359 = pneg %p54
        $region50: #{tpu_custom_call.1} parent=47 // pred_check_branch
          %361 = sbr.rel (%p359) target = $region52
        $region51: #{tpu_custom_call.1} parent=47 // pred_region
          %362 = dma.done %s355, 128
        $region52: #{tpu_custom_call.1} parent=47 // pred_fallthru
          _
        %s363 = sand.u32 %s33, 1
        %s364 = scalar_lea.sflag [#allocation6], %s363
        %s365 = sand.u32 %s67, 1
        %s366 = smul.addr %s365, 8
        %s367 = scalar_lea.vmem [#allocation5], %s366
        // Predicated region
        $region53: #{tpu_custom_call.1} parent=47 // pred_check
          %p368 = pneg %p80
        $region54: #{tpu_custom_call.1} parent=47 // pred_check_branch
          %370 = sbr.rel (%p368) target = $region56
        $region55: #{tpu_custom_call.1} parent=47 // pred_region
          %371 = dma.done %s364, 128
        $region56: #{tpu_custom_call.1} parent=47 // pred_fallthru
          _
        %s372 = sand.u32 %s33, 1
        %s373 = scalar_lea.sflag [#allocation6], %s372
        %s374 = sand.u32 %s93, 1
        %s375 = smul.addr %s374, 8
        %s376 = scalar_lea.vmem [#allocation7], %s375
        // Predicated region
        $region57: #{tpu_custom_call.1} parent=47 // pred_check
          %p377 = pneg %p106
        $region58: #{tpu_custom_call.1} parent=47 // pred_check_branch
          %379 = sbr.rel (%p377) target = $region60
        $region59: #{tpu_custom_call.1} parent=47 // pred_region
          %380 = dma.done %s373, 128
        $region60: #{tpu_custom_call.1} parent=47 // pred_fallthru
          _
        // Predicated region
        $region61: #{tpu_custom_call.1} parent=47 // pred_check
          %p381 = pneg %p127
        $region62: #{tpu_custom_call.1} parent=47 // pred_check_branch
          %383 = sbr.rel (%p381) target = $region64
        $region63: #{tpu_custom_call.1} parent=47 // pred_region
          %384 = dma.done [#allocation9], 512
        $region64: #{tpu_custom_call.1} parent=47 // pred_fallthru
          _
        // Predicated region
        $region65: #{tpu_custom_call.1} parent=47 // pred_check
          %p385 = pneg %p169
        $region66: #{tpu_custom_call.1} parent=47 // pred_check_branch
          %387 = sbr.rel (%p385) target = $region68
        $region67: #{tpu_custom_call.1} parent=47 // pred_region
          %388 = dma.done [#allocation9], 512
        $region68: #{tpu_custom_call.1} parent=47 // pred_fallthru
          _
        %s389 = sand.u32 %s41, 1
        %s390 = scalar_lea.sflag [#allocation3], %s389
        %s391 = sand.u32 %s41, 1
        %s392 = smul.addr %s391, 8
        %s393 = scalar_lea.vmem [#allocation2], %s392
        %p394 = pneg %p54
        %p395 = pneg %p51
        %s396 = sand.u32 %s33, 1
        %s397 = scalar_lea.sflag [#allocation6], %s396
        %s398 = sand.u32 %s67, 1
        %s399 = smul.addr %s398, 8
        %s400 = scalar_lea.vmem [#allocation5], %s399
        %p401 = pneg %p80
        %p402 = pneg %p77
        %s403 = sand.u32 %s33, 1
        %s404 = scalar_lea.sflag [#allocation6], %s403
        %s405 = sand.u32 %s93, 1
        %s406 = smul.addr %s405, 8
        %s407 = scalar_lea.vmem [#allocation7], %s406
        %p408 = pneg %p106
        %p409 = pneg %p103
        %p410 = pneg %p127
        %p411 = pneg %p124
        %p412 = pneg %p148
        %p413 = pneg %p145
        %p414 = pneg %p169
        %p415 = pneg %p166
        %p416 = pneg %p190
        %p417 = pneg %p187
        %p418 = pneg %p216
        %p419 = pneg %p213
        %s420 = sand.u32 %s203, 1
        %s421 = scalar_lea.sflag [#allocation4], %s420
        %s422 = sand.u32 %s203, 1
        %s423 = smul.addr %s422, 8
        %s424 = scalar_lea.vmem [#allocation11], %s423
        %p425 = pneg %p242
        %p426 = pneg %p239
        %s427 = sand.u32 %s229, 1
        %s428 = scalar_lea.sflag [#allocation13], %s427
        %s429 = sand.u32 %s229, 1
        %s430 = smul.addr %s429, 32
        %s431 = scalar_lea.vmem [#allocation12], %s430
        %v432 = vld [vmem:[#allocation8] sm:$0xff]
        %v433 = vld [vmem:[#allocation8 + $0x8] sm:$0xff]
        %v434 = vld [vmem:[#allocation8 + $0x10] sm:$0xff]
        %v435 = vld [vmem:[#allocation8 + $0x18] sm:$0xff]
        %v436 = vld [vmem:[%s4] sm:$0x1]
        %v437 = vld [vmem:[#allocation10] sm:$0xff]
        %v438 = vld [vmem:[#allocation10 + $0x8] sm:$0xff]
        %v439 = vld [vmem:[#allocation10 + $0x10] sm:$0xff]
        %v440 = vld [vmem:[#allocation10 + $0x18] sm:$0xff]
        %v441 = vld [vmem:[%s358] sm:$0xff]
        %v442 = vld [vmem:[%s367] sm:$0xff]
        %v443 = vld [vmem:[%s376] sm:$0xff]
        %v445 = vlaneseq
        %v446 = vshrl.u32 %v445, 7
        %v447 = vsub.s32 0, %v446
        %v448 = vrot.slane %v436, %v447
        %vm450 = vcmask 261120
        %v452 = vsel %vm450, %v441, 0
        %454 = vmatprep.subr.mxu0 0.0
        %455 = vmatpush1.msra.mxu0 %v432
        %456 = vmatprep.subr.mxu0 0.0
        %457 = vmatpush1.msra.mxu0 %v433
        %458 = vmatprep.subr.mxu0 0.0
        %459 = vmatpush1.msra.mxu0 %v434
        %460 = vmatprep.subr.mxu0 0.0
        %461 = vmatpush1.msra.mxu0 %v435
        %462 = vmatprep.subr.mxu0 0.0
        %463 = vmatpush1.msra.mxu0 0.0
        %464 = vmatprep.subr.mxu0 0.0
        %465 = vmatpush1.msra.mxu0 0.0
        %466 = vmatprep.subr.mxu0 0.0
        %467 = vmatpush1.msra.mxu0 0.0
        %468 = vmatprep.subr.mxu0 0.0
        %469 = vmatpush1.msra.mxu0 0.0
        %470 = vmatprep.subr.mxu0 0.0
        %471 = vmatpush1.msra.mxu0 0.0
        %472 = vmatprep.subr.mxu0 0.0
        %473 = vmatpush1.msra.mxu0 0.0
        %474 = vmatprep.subr.mxu0 0.0
        %475 = vmatpush1.msra.mxu0 0.0
        %476 = vmatprep.subr.mxu0 0.0
        %477 = vmatpush1.msra.mxu0 0.0
        %478 = vmatprep.subr.mxu0 0.0
        %479 = vmatpush1.msra.mxu0 0.0
        %480 = vmatprep.subr.mxu0 0.0
        %481 = vmatpush1.msra.mxu0 0.0
        %482 = vmatprep.subr.mxu0 0.0
        %483 = vmatpush1.msra.mxu0 0.0
        %484 = vmatprep.subr.mxu0 0.0
        %485 = vmatpush1.msra.mxu0 0.0
        %486 = vmatprep.subr.mxu0 0.0
        %487 = vmatpush1.msra.mxu0 0.0
        %488 = vmatprep.subr.mxu0 0.0
        %489 = vmatpush1.msra.mxu0 0.0
        %490 = vmatprep.subr.mxu0 0.0
        %491 = vmatpush1.msra.mxu0 0.0
        %492 = vmatprep.subr.mxu0 0.0
        %493 = vmatpush1.msra.mxu0 0.0
        %494 = vmatprep.subr.mxu0 0.0
        %495 = vmatpush1.msra.mxu0 0.0
        %496 = vmatprep.subr.mxu0 0.0
        %497 = vmatpush1.msra.mxu0 0.0
        %498 = vmatprep.subr.mxu0 0.0
        %499 = vmatpush1.msra.mxu0 0.0
        %500 = vmatprep.subr.mxu0 0.0
        %501 = vmatpush1.msra.mxu0 0.0
        %502 = vmatprep.subr.mxu0 0.0
        %503 = vmatpush1.msra.mxu0 0.0
        %504 = vmatprep.subr.mxu0 0.0
        %505 = vmatpush1.msra.mxu0 0.0
        %506 = vmatprep.subr.mxu0 0.0
        %507 = vmatpush1.msra.mxu0 0.0
        %508 = vmatprep.subr.mxu0 0.0
        %509 = vmatpush1.msra.mxu0 0.0
        %510 = vmatprep.subr.mxu0 0.0
        %511 = vmatpush1.msra.mxu0 0.0
        %512 = vmatprep.subr.mxu0 0.0
        %513 = vmatpush1.msra.mxu0 0.0
        %514 = vmatprep.subr.mxu0 0.0
        %515 = vmatpush1.msra.mxu0 0.0
        %516 = vmatprep.subr.mxu0 0.0
        %517 = vmatpush1.msra.mxu0 0.0
        %518 = vmatprep.mubr.f32.mxu0 0.0
        %519 = vmatmul.mubr.f32.gmra.mrb[0].mxu0 %v452
        %v520 = vpop.f32.mrb[0].mxu0
        %v521 = vadd.f32 %v448, %v520
        %v522 = vpop.f32.mrb[0].mxu0
        %523 = vdwg.mxu0
        %528 = vrot.lane.b32.xlu0 %v432, 96
        %v529 = vpop.permute.xlu0 %528
        %530 = vrot.lane.b32.xlu0 %v433, 96
        %v531 = vpop.permute.xlu0 %530
        %532 = vrot.lane.b32.xlu0 %v434, 96
        %v533 = vpop.permute.xlu0 %532
        %534 = vrot.lane.b32.xlu0 %v435, 96
        %v535 = vpop.permute.xlu0 %534
        %540 = vrot.lane.b32.xlu0 %v448, 96
        %v541 = vpop.permute.xlu0 %540
        %v544 = vsel %vm450, %v442, 0
        %546 = vmatprep.subr.mxu0 0.0
        %547 = vmatpush1.msra.mxu0 %v529
        %548 = vmatprep.subr.mxu0 0.0
        %549 = vmatpush1.msra.mxu0 %v531
        %550 = vmatprep.subr.mxu0 0.0
        %551 = vmatpush1.msra.mxu0 %v533
        %552 = vmatprep.subr.mxu0 0.0
        %553 = vmatpush1.msra.mxu0 %v535
        %554 = vmatprep.subr.mxu0 0.0
        %555 = vmatpush1.msra.mxu0 0.0
        %556 = vmatprep.subr.mxu0 0.0
        %557 = vmatpush1.msra.mxu0 0.0
        %558 = vmatprep.subr.mxu0 0.0
        %559 = vmatpush1.msra.mxu0 0.0
        %560 = vmatprep.subr.mxu0 0.0
        %561 = vmatpush1.msra.mxu0 0.0
        %562 = vmatprep.subr.mxu0 0.0
        %563 = vmatpush1.msra.mxu0 0.0
        %564 = vmatprep.subr.mxu0 0.0
        %565 = vmatpush1.msra.mxu0 0.0
        %566 = vmatprep.subr.mxu0 0.0
        %567 = vmatpush1.msra.mxu0 0.0
        %568 = vmatprep.subr.mxu0 0.0
        %569 = vmatpush1.msra.mxu0 0.0
        %570 = vmatprep.subr.mxu0 0.0
        %571 = vmatpush1.msra.mxu0 0.0
        %572 = vmatprep.subr.mxu0 0.0
        %573 = vmatpush1.msra.mxu0 0.0
        %574 = vmatprep.subr.mxu0 0.0
        %575 = vmatpush1.msra.mxu0 0.0
        %576 = vmatprep.subr.mxu0 0.0
        %577 = vmatpush1.msra.mxu0 0.0
        %578 = vmatprep.subr.mxu0 0.0
        %579 = vmatpush1.msra.mxu0 0.0
        %580 = vmatprep.subr.mxu0 0.0
        %581 = vmatpush1.msra.mxu0 0.0
        %582 = vmatprep.subr.mxu0 0.0
        %583 = vmatpush1.msra.mxu0 0.0
        %584 = vmatprep.subr.mxu0 0.0
        %585 = vmatpush1.msra.mxu0 0.0
        %586 = vmatprep.subr.mxu0 0.0
        %587 = vmatpush1.msra.mxu0 0.0
        %588 = vmatprep.subr.mxu0 0.0
        %589 = vmatpush1.msra.mxu0 0.0
        %590 = vmatprep.subr.mxu0 0.0
        %591 = vmatpush1.msra.mxu0 0.0
        %592 = vmatprep.subr.mxu0 0.0
        %593 = vmatpush1.msra.mxu0 0.0
        %594 = vmatprep.subr.mxu0 0.0
        %595 = vmatpush1.msra.mxu0 0.0
        %596 = vmatprep.subr.mxu0 0.0
        %597 = vmatpush1.msra.mxu0 0.0
        %598 = vmatprep.subr.mxu0 0.0
        %599 = vmatpush1.msra.mxu0 0.0
        %600 = vmatprep.subr.mxu0 0.0
        %601 = vmatpush1.msra.mxu0 0.0
        %602 = vmatprep.subr.mxu0 0.0
        %603 = vmatpush1.msra.mxu0 0.0
        %604 = vmatprep.subr.mxu0 0.0
        %605 = vmatpush1.msra.mxu0 0.0
        %606 = vmatprep.subr.mxu0 0.0
        %607 = vmatpush1.msra.mxu0 0.0
        %608 = vmatprep.subr.mxu0 0.0
        %609 = vmatpush1.msra.mxu0 0.0
        %610 = vmatprep.mubr.f32.mxu0 0.0
        %611 = vmatmul.mubr.f32.gmra.mrb[0].mxu0 %v544
        %v612 = vpop.f32.mrb[0].mxu0
        %v613 = vadd.f32 %v541, %v612
        %v614 = vpop.f32.mrb[0].mxu0
        %615 = vdwg.mxu0
        %616 = vrot.lane.b32.xlu0 %v432, 64
        %v617 = vpop.permute.xlu0 %616
        %618 = vrot.lane.b32.xlu0 %v433, 64
        %v619 = vpop.permute.xlu0 %618
        %620 = vrot.lane.b32.xlu0 %v434, 64
        %v621 = vpop.permute.xlu0 %620
        %622 = vrot.lane.b32.xlu0 %v435, 64
        %v623 = vpop.permute.xlu0 %622
        %628 = vrot.lane.b32.xlu0 %v448, 64
        %v629 = vpop.permute.xlu0 %628
        %v632 = vsel %vm450, %v443, 0
        %634 = vmatprep.subr.mxu0 0.0
        %635 = vmatpush1.msra.mxu0 %v617
        %636 = vmatprep.subr.mxu0 0.0
        %637 = vmatpush1.msra.mxu0 %v619
        %638 = vmatprep.subr.mxu0 0.0
        %639 = vmatpush1.msra.mxu0 %v621
        %640 = vmatprep.subr.mxu0 0.0
        %641 = vmatpush1.msra.mxu0 %v623
        %642 = vmatprep.subr.mxu0 0.0
        %643 = vmatpush1.msra.mxu0 0.0
        %644 = vmatprep.subr.mxu0 0.0
        %645 = vmatpush1.msra.mxu0 0.0
        %646 = vmatprep.subr.mxu0 0.0
        %647 = vmatpush1.msra.mxu0 0.0
        %648 = vmatprep.subr.mxu0 0.0
        %649 = vmatpush1.msra.mxu0 0.0
        %650 = vmatprep.subr.mxu0 0.0
        %651 = vmatpush1.msra.mxu0 0.0
        %652 = vmatprep.subr.mxu0 0.0
        %653 = vmatpush1.msra.mxu0 0.0
        %654 = vmatprep.subr.mxu0 0.0
        %655 = vmatpush1.msra.mxu0 0.0
        %656 = vmatprep.subr.mxu0 0.0
        %657 = vmatpush1.msra.mxu0 0.0
        %658 = vmatprep.subr.mxu0 0.0
        %659 = vmatpush1.msra.mxu0 0.0
        %660 = vmatprep.subr.mxu0 0.0
        %661 = vmatpush1.msra.mxu0 0.0
        %662 = vmatprep.subr.mxu0 0.0
        %663 = vmatpush1.msra.mxu0 0.0
        %664 = vmatprep.subr.mxu0 0.0
        %665 = vmatpush1.msra.mxu0 0.0
        %666 = vmatprep.subr.mxu0 0.0
        %667 = vmatpush1.msra.mxu0 0.0
        %668 = vmatprep.subr.mxu0 0.0
        %669 = vmatpush1.msra.mxu0 0.0
        %670 = vmatprep.subr.mxu0 0.0
        %671 = vmatpush1.msra.mxu0 0.0
        %672 = vmatprep.subr.mxu0 0.0
        %673 = vmatpush1.msra.mxu0 0.0
        %674 = vmatprep.subr.mxu0 0.0
        %675 = vmatpush1.msra.mxu0 0.0
        %676 = vmatprep.subr.mxu0 0.0
        %677 = vmatpush1.msra.mxu0 0.0
        %678 = vmatprep.subr.mxu0 0.0
        %679 = vmatpush1.msra.mxu0 0.0
        %680 = vmatprep.subr.mxu0 0.0
        %681 = vmatpush1.msra.mxu0 0.0
        %682 = vmatprep.subr.mxu0 0.0
        %683 = vmatpush1.msra.mxu0 0.0
        %684 = vmatprep.subr.mxu0 0.0
        %685 = vmatpush1.msra.mxu0 0.0
        %686 = vmatprep.subr.mxu0 0.0
        %687 = vmatpush1.msra.mxu0 0.0
        %688 = vmatprep.subr.mxu0 0.0
        %689 = vmatpush1.msra.mxu0 0.0
        %690 = vmatprep.subr.mxu0 0.0
        %691 = vmatpush1.msra.mxu0 0.0
        %692 = vmatprep.subr.mxu0 0.0
        %693 = vmatpush1.msra.mxu0 0.0
        %694 = vmatprep.subr.mxu0 0.0
        %695 = vmatpush1.msra.mxu0 0.0
        %696 = vmatprep.subr.mxu0 0.0
        %697 = vmatpush1.msra.mxu0 0.0
        %698 = vmatprep.mubr.f32.mxu0 0.0
        %699 = vmatmul.mubr.f32.gmra.mrb[0].mxu0 %v632
        %v700 = vpop.f32.mrb[0].mxu0
        %v701 = vadd.f32 %v629, %v700
        %v702 = vpop.f32.mrb[0].mxu0
        %703 = vdwg.mxu0
        %v704 = vmul.f32 %v521, 0.35355338
        %vm705 = vcmask 64512
        %v707 = vsel %vm705, %v704, 0
        %v710 = vsel %vm705, %v613, 0
        %712 = vmatprep.subr.mxu0 0.0
        %713 = vmatpush1.xpose.msra.mxu0 %v710
        %714 = vmatprep.subr.mxu0 0.0
        %715 = vmatpush1.xpose.msra.mxu0 0.0
        %716 = vmatprep.subr.mxu0 0.0
        %717 = vmatpush1.xpose.msra.mxu0 0.0
        %718 = vmatprep.subr.mxu0 0.0
        %719 = vmatpush1.xpose.msra.mxu0 0.0
        %720 = vmatprep.subr.mxu0 0.0
        %721 = vmatpush1.xpose.msra.mxu0 0.0
        %722 = vmatprep.subr.mxu0 0.0
        %723 = vmatpush1.xpose.msra.mxu0 0.0
        %724 = vmatprep.subr.mxu0 0.0
        %725 = vmatpush1.xpose.msra.mxu0 0.0
        %726 = vmatprep.subr.mxu0 0.0
        %727 = vmatpush1.xpose.msra.mxu0 0.0
        %728 = vmatprep.subr.mxu0 0.0
        %729 = vmatpush1.xpose.msra.mxu0 0.0
        %730 = vmatprep.subr.mxu0 0.0
        %731 = vmatpush1.xpose.msra.mxu0 0.0
        %732 = vmatprep.subr.mxu0 0.0
        %733 = vmatpush1.xpose.msra.mxu0 0.0
        %734 = vmatprep.subr.mxu0 0.0
        %735 = vmatpush1.xpose.msra.mxu0 0.0
        %736 = vmatprep.subr.mxu0 0.0
        %737 = vmatpush1.xpose.msra.mxu0 0.0
        %738 = vmatprep.subr.mxu0 0.0
        %739 = vmatpush1.xpose.msra.mxu0 0.0
        %740 = vmatprep.subr.mxu0 0.0
        %741 = vmatpush1.xpose.msra.mxu0 0.0
        %742 = vmatprep.subr.mxu0 0.0
        %743 = vmatpush1.xpose.msra.mxu0 0.0
        %744 = vmatprep.subr.mxu0 0.0
        %745 = vmatpush1.xpose.msra.mxu0 0.0
        %746 = vmatprep.subr.mxu0 0.0
        %747 = vmatpush1.xpose.msra.mxu0 0.0
        %748 = vmatprep.subr.mxu0 0.0
        %749 = vmatpush1.xpose.msra.mxu0 0.0
        %750 = vmatprep.subr.mxu0 0.0
        %751 = vmatpush1.xpose.msra.mxu0 0.0
        %752 = vmatprep.subr.mxu0 0.0
        %753 = vmatpush1.xpose.msra.mxu0 0.0
        %754 = vmatprep.subr.mxu0 0.0
        %755 = vmatpush1.xpose.msra.mxu0 0.0
        %756 = vmatprep.subr.mxu0 0.0
        %757 = vmatpush1.xpose.msra.mxu0 0.0
        %758 = vmatprep.subr.mxu0 0.0
        %759 = vmatpush1.xpose.msra.mxu0 0.0
        %760 = vmatprep.subr.mxu0 0.0
        %761 = vmatpush1.xpose.msra.mxu0 0.0
        %762 = vmatprep.subr.mxu0 0.0
        %763 = vmatpush1.xpose.msra.mxu0 0.0
        %764 = vmatprep.subr.mxu0 0.0
        %765 = vmatpush1.xpose.msra.mxu0 0.0
        %766 = vmatprep.subr.mxu0 0.0
        %767 = vmatpush1.xpose.msra.mxu0 0.0
        %768 = vmatprep.subr.mxu0 0.0
        %769 = vmatpush1.xpose.msra.mxu0 0.0
        %770 = vmatprep.subr.mxu0 0.0
        %771 = vmatpush1.xpose.msra.mxu0 0.0
        %772 = vmatprep.subr.mxu0 0.0
        %773 = vmatpush1.xpose.msra.mxu0 0.0
        %774 = vmatprep.subr.mxu0 0.0
        %775 = vmatpush1.xpose.msra.mxu0 0.0
        %776 = vmatprep.mubr.f32.mxu0 0.0
        %777 = vmatmul.mubr.f32.gmra.mrb[0].mxu0 %v707
        %v778 = vpop.f32.mrb[0].mxu0
        %v779 = vadd.f32 0.0, %v778
        %v780 = vpop.f32.mrb[0].mxu0
        %781 = vdwg.mxu0
        %v782 = vsel %vm705, %v779, -inf
        %783 = vmax.xlane.f32.xlu0 %v782
        %v784 = vpop.xlane.xlu0 %783
        %v785 = vsub.f32 %v779, %v784
        %v786 = vmul.f32 %v785, 1.442695
        %v787 = vpow.pop %v786
        %v788 = vsel %vm705, %v787, 0.0
        %789 = vadd.xlane.f32.xlu0 %v788
        %v790 = vpop.xlane.xlu0 %789
        %v791 = vrcp.pop %v790
        %v792 = vmul.f32 %v787, %v791
        %793 = vst.msk [vmem:[%s431] sm:$0xff] %vm705, %v792
        %v795 = vsel %vm705, %v792, 0
        %797 = vmatprep.subr.mxu0 0.0
        %798 = vmatpush1.msra.mxu0 %v701
        %799 = vmatprep.subr.mxu0 0.0
        %800 = vmatpush1.msra.mxu0 0.0
        %801 = vmatprep.subr.mxu0 0.0
        %802 = vmatpush1.msra.mxu0 0.0
        %803 = vmatprep.subr.mxu0 0.0
        %804 = vmatpush1.msra.mxu0 0.0
        %805 = vmatprep.subr.mxu0 0.0
        %806 = vmatpush1.msra.mxu0 0.0
        %807 = vmatprep.subr.mxu0 0.0
        %808 = vmatpush1.msra.mxu0 0.0
        %809 = vmatprep.subr.mxu0 0.0
        %810 = vmatpush1.msra.mxu0 0.0
        %811 = vmatprep.subr.mxu0 0.0
        %812 = vmatpush1.msra.mxu0 0.0
        %813 = vmatprep.subr.mxu0 0.0
        %814 = vmatpush1.msra.mxu0 0.0
        %815 = vmatprep.subr.mxu0 0.0
        %816 = vmatpush1.msra.mxu0 0.0
        %817 = vmatprep.subr.mxu0 0.0
        %818 = vmatpush1.msra.mxu0 0.0
        %819 = vmatprep.subr.mxu0 0.0
        %820 = vmatpush1.msra.mxu0 0.0
        %821 = vmatprep.subr.mxu0 0.0
        %822 = vmatpush1.msra.mxu0 0.0
        %823 = vmatprep.subr.mxu0 0.0
        %824 = vmatpush1.msra.mxu0 0.0
        %825 = vmatprep.subr.mxu0 0.0
        %826 = vmatpush1.msra.mxu0 0.0
        %827 = vmatprep.subr.mxu0 0.0
        %828 = vmatpush1.msra.mxu0 0.0
        %829 = vmatprep.subr.mxu0 0.0
        %830 = vmatpush1.msra.mxu0 0.0
        %831 = vmatprep.subr.mxu0 0.0
        %832 = vmatpush1.msra.mxu0 0.0
        %833 = vmatprep.subr.mxu0 0.0
        %834 = vmatpush1.msra.mxu0 0.0
        %835 = vmatprep.subr.mxu0 0.0
        %836 = vmatpush1.msra.mxu0 0.0
        %837 = vmatprep.subr.mxu0 0.0
        %838 = vmatpush1.msra.mxu0 0.0
        %839 = vmatprep.subr.mxu0 0.0
        %840 = vmatpush1.msra.mxu0 0.0
        %841 = vmatprep.subr.mxu0 0.0
        %842 = vmatpush1.msra.mxu0 0.0
        %843 = vmatprep.subr.mxu0 0.0
        %844 = vmatpush1.msra.mxu0 0.0
        %845 = vmatprep.subr.mxu0 0.0
        %846 = vmatpush1.msra.mxu0 0.0
        %847 = vmatprep.subr.mxu0 0.0
        %848 = vmatpush1.msra.mxu0 0.0
        %849 = vmatprep.subr.mxu0 0.0
        %850 = vmatpush1.msra.mxu0 0.0
        %851 = vmatprep.subr.mxu0 0.0
        %852 = vmatpush1.msra.mxu0 0.0
        %853 = vmatprep.subr.mxu0 0.0
        %854 = vmatpush1.msra.mxu0 0.0
        %855 = vmatprep.subr.mxu0 0.0
        %856 = vmatpush1.msra.mxu0 0.0
        %857 = vmatprep.subr.mxu0 0.0
        %858 = vmatpush1.msra.mxu0 0.0
        %859 = vmatprep.subr.mxu0 0.0
        %860 = vmatpush1.msra.mxu0 0.0
        %861 = vmatprep.mubr.f32.mxu0 0.0
        %862 = vmatmul.mubr.f32.gmra.mrb[0].mxu0 %v795
        %v863 = vpop.f32.mrb[0].mxu0
        %v864 = vadd.f32 0.0, %v863
        %v865 = vpop.f32.mrb[0].mxu0
        %866 = vdwg.mxu0
        %867 = vrot.lane.b32.xlu0 %v704, 120
        %v868 = vpop.permute.xlu0 %867
        %869 = vrot.lane.b32.xlu0 %v613, 120
        %v870 = vpop.permute.xlu0 %869
        %v871 = vsel %vm705, %v868, 0
        %v873 = vsel %vm705, %v870, 0
        %875 = vmatprep.subr.mxu0 0.0
        %876 = vmatpush1.xpose.msra.mxu0 %v873
        %877 = vmatprep.subr.mxu0 0.0
        %878 = vmatpush1.xpose.msra.mxu0 0.0
        %879 = vmatprep.subr.mxu0 0.0
        %880 = vmatpush1.xpose.msra.mxu0 0.0
        %881 = vmatprep.subr.mxu0 0.0
        %882 = vmatpush1.xpose.msra.mxu0 0.0
        %883 = vmatprep.subr.mxu0 0.0
        %884 = vmatpush1.xpose.msra.mxu0 0.0
        %885 = vmatprep.subr.mxu0 0.0
        %886 = vmatpush1.xpose.msra.mxu0 0.0
        %887 = vmatprep.subr.mxu0 0.0
        %888 = vmatpush1.xpose.msra.mxu0 0.0
        %889 = vmatprep.subr.mxu0 0.0
        %890 = vmatpush1.xpose.msra.mxu0 0.0
        %891 = vmatprep.subr.mxu0 0.0
        %892 = vmatpush1.xpose.msra.mxu0 0.0
        %893 = vmatprep.subr.mxu0 0.0
        %894 = vmatpush1.xpose.msra.mxu0 0.0
        %895 = vmatprep.subr.mxu0 0.0
        %896 = vmatpush1.xpose.msra.mxu0 0.0
        %897 = vmatprep.subr.mxu0 0.0
        %898 = vmatpush1.xpose.msra.mxu0 0.0
        %899 = vmatprep.subr.mxu0 0.0
        %900 = vmatpush1.xpose.msra.mxu0 0.0
        %901 = vmatprep.subr.mxu0 0.0
        %902 = vmatpush1.xpose.msra.mxu0 0.0
        %903 = vmatprep.subr.mxu0 0.0
        %904 = vmatpush1.xpose.msra.mxu0 0.0
        %905 = vmatprep.subr.mxu0 0.0
        %906 = vmatpush1.xpose.msra.mxu0 0.0
        %907 = vmatprep.subr.mxu0 0.0
        %908 = vmatpush1.xpose.msra.mxu0 0.0
        %909 = vmatprep.subr.mxu0 0.0
        %910 = vmatpush1.xpose.msra.mxu0 0.0
        %911 = vmatprep.subr.mxu0 0.0
        %912 = vmatpush1.xpose.msra.mxu0 0.0
        %913 = vmatprep.subr.mxu0 0.0
        %914 = vmatpush1.xpose.msra.mxu0 0.0
        %915 = vmatprep.subr.mxu0 0.0
        %916 = vmatpush1.xpose.msra.mxu0 0.0
        %917 = vmatprep.subr.mxu0 0.0
        %918 = vmatpush1.xpose.msra.mxu0 0.0
        %919 = vmatprep.subr.mxu0 0.0
        %920 = vmatpush1.xpose.msra.mxu0 0.0
        %921 = vmatprep.subr.mxu0 0.0
        %922 = vmatpush1.xpose.msra.mxu0 0.0
        %923 = vmatprep.subr.mxu0 0.0
        %924 = vmatpush1.xpose.msra.mxu0 0.0
        %925 = vmatprep.subr.mxu0 0.0
        %926 = vmatpush1.xpose.msra.mxu0 0.0
        %927 = vmatprep.subr.mxu0 0.0
        %928 = vmatpush1.xpose.msra.mxu0 0.0
        %929 = vmatprep.subr.mxu0 0.0
        %930 = vmatpush1.xpose.msra.mxu0 0.0
        %931 = vmatprep.subr.mxu0 0.0
        %932 = vmatpush1.xpose.msra.mxu0 0.0
        %933 = vmatprep.subr.mxu0 0.0
        %934 = vmatpush1.xpose.msra.mxu0 0.0
        %935 = vmatprep.subr.mxu0 0.0
        %936 = vmatpush1.xpose.msra.mxu0 0.0
        %937 = vmatprep.subr.mxu0 0.0
        %938 = vmatpush1.xpose.msra.mxu0 0.0
        %939 = vmatprep.mubr.f32.mxu0 0.0
        %940 = vmatmul.mubr.f32.gmra.mrb[0].mxu0 %v871
        %v941 = vpop.f32.mrb[0].mxu0
        %v942 = vadd.f32 0.0, %v941
        %v943 = vpop.f32.mrb[0].mxu0
        %944 = vdwg.mxu0
        %v945 = vsel %vm705, %v942, -inf
        %946 = vmax.xlane.f32.xlu0 %v945
        %v947 = vpop.xlane.xlu0 %946
        %v948 = vsub.f32 %v942, %v947
        %v949 = vmul.f32 %v948, 1.442695
        %v950 = vpow.pop %v949
        %v951 = vsel %vm705, %v950, 0.0
        %952 = vadd.xlane.f32.xlu0 %v951
        %v953 = vpop.xlane.xlu0 %952
        %v954 = vrcp.pop %v953
        %v955 = vmul.f32 %v950, %v954
        %s956 = scalar_lea.vmem %s431, 8 [#allocation12]
        %957 = vst.msk [vmem:[%s956] sm:$0xff] %vm705, %v955
        %959 = vrot.lane.b32.xlu0 %v701, 120
        %v960 = vpop.permute.xlu0 %959
        %v963 = vsel %vm705, %v955, 0
        %965 = vmatprep.subr.mxu0 0.0
        %966 = vmatpush1.msra.mxu0 %v960
        %967 = vmatprep.subr.mxu0 0.0
        %968 = vmatpush1.msra.mxu0 0.0
        %969 = vmatprep.subr.mxu0 0.0
        %970 = vmatpush1.msra.mxu0 0.0
        %971 = vmatprep.subr.mxu0 0.0
        %972 = vmatpush1.msra.mxu0 0.0
        %973 = vmatprep.subr.mxu0 0.0
        %974 = vmatpush1.msra.mxu0 0.0
        %975 = vmatprep.subr.mxu0 0.0
        %976 = vmatpush1.msra.mxu0 0.0
        %977 = vmatprep.subr.mxu0 0.0
        %978 = vmatpush1.msra.mxu0 0.0
        %979 = vmatprep.subr.mxu0 0.0
        %980 = vmatpush1.msra.mxu0 0.0
        %981 = vmatprep.subr.mxu0 0.0
        %982 = vmatpush1.msra.mxu0 0.0
        %983 = vmatprep.subr.mxu0 0.0
        %984 = vmatpush1.msra.mxu0 0.0
        %985 = vmatprep.subr.mxu0 0.0
        %986 = vmatpush1.msra.mxu0 0.0
        %987 = vmatprep.subr.mxu0 0.0
        %988 = vmatpush1.msra.mxu0 0.0
        %989 = vmatprep.subr.mxu0 0.0
        %990 = vmatpush1.msra.mxu0 0.0
        %991 = vmatprep.subr.mxu0 0.0
        %992 = vmatpush1.msra.mxu0 0.0
        %993 = vmatprep.subr.mxu0 0.0
        %994 = vmatpush1.msra.mxu0 0.0
        %995 = vmatprep.subr.mxu0 0.0
        %996 = vmatpush1.msra.mxu0 0.0
        %997 = vmatprep.subr.mxu0 0.0
        %998 = vmatpush1.msra.mxu0 0.0
        %999 = vmatprep.subr.mxu0 0.0
        %1000 = vmatpush1.msra.mxu0 0.0
        %1001 = vmatprep.subr.mxu0 0.0
        %1002 = vmatpush1.msra.mxu0 0.0
        %1003 = vmatprep.subr.mxu0 0.0
        %1004 = vmatpush1.msra.mxu0 0.0
        %1005 = vmatprep.subr.mxu0 0.0
        %1006 = vmatpush1.msra.mxu0 0.0
        %1007 = vmatprep.subr.mxu0 0.0
        %1008 = vmatpush1.msra.mxu0 0.0
        %1009 = vmatprep.subr.mxu0 0.0
        %1010 = vmatpush1.msra.mxu0 0.0
        %1011 = vmatprep.subr.mxu0 0.0
        %1012 = vmatpush1.msra.mxu0 0.0
        %1013 = vmatprep.subr.mxu0 0.0
        %1014 = vmatpush1.msra.mxu0 0.0
        %1015 = vmatprep.subr.mxu0 0.0
        %1016 = vmatpush1.msra.mxu0 0.0
        %1017 = vmatprep.subr.mxu0 0.0
        %1018 = vmatpush1.msra.mxu0 0.0
        %1019 = vmatprep.subr.mxu0 0.0
        %1020 = vmatpush1.msra.mxu0 0.0
        %1021 = vmatprep.subr.mxu0 0.0
        %1022 = vmatpush1.msra.mxu0 0.0
        %1023 = vmatprep.subr.mxu0 0.0
        %1024 = vmatpush1.msra.mxu0 0.0
        %1025 = vmatprep.subr.mxu0 0.0
        %1026 = vmatpush1.msra.mxu0 0.0
        %1027 = vmatprep.subr.mxu0 0.0
        %1028 = vmatpush1.msra.mxu0 0.0
        %1029 = vmatprep.mubr.f32.mxu0 0.0
        %1030 = vmatmul.mubr.f32.gmra.mrb[0].mxu0 %v963
        %v1031 = vpop.f32.mrb[0].mxu0
        %v1032 = vadd.f32 0.0, %v1031
        %v1033 = vpop.f32.mrb[0].mxu0
        %1034 = vdwg.mxu0
        %v1036 = vsel %vm705, %v1032, 0
        %1038 = vmatprep.subr.mxu0 0.0
        %1039 = vmatpush1.msra.mxu0 %v438
        %1040 = vmatprep.subr.mxu0 0.0
        %1041 = vmatpush1.msra.mxu0 0.0
        %1042 = vmatprep.subr.mxu0 0.0
        %1043 = vmatpush1.msra.mxu0 0.0
        %1044 = vmatprep.subr.mxu0 0.0
        %1045 = vmatpush1.msra.mxu0 0.0
        %1046 = vmatprep.subr.mxu0 0.0
        %1047 = vmatpush1.msra.mxu0 0.0
        %1048 = vmatprep.subr.mxu0 0.0
        %1049 = vmatpush1.msra.mxu0 0.0
        %1050 = vmatprep.subr.mxu0 0.0
        %1051 = vmatpush1.msra.mxu0 0.0
        %1052 = vmatprep.subr.mxu0 0.0
        %1053 = vmatpush1.msra.mxu0 0.0
        %1054 = vmatprep.subr.mxu0 0.0
        %1055 = vmatpush1.msra.mxu0 0.0
        %1056 = vmatprep.subr.mxu0 0.0
        %1057 = vmatpush1.msra.mxu0 0.0
        %1058 = vmatprep.subr.mxu0 0.0
        %1059 = vmatpush1.msra.mxu0 0.0
        %1060 = vmatprep.subr.mxu0 0.0
        %1061 = vmatpush1.msra.mxu0 0.0
        %1062 = vmatprep.subr.mxu0 0.0
        %1063 = vmatpush1.msra.mxu0 0.0
        %1064 = vmatprep.subr.mxu0 0.0
        %1065 = vmatpush1.msra.mxu0 0.0
        %1066 = vmatprep.subr.mxu0 0.0
        %1067 = vmatpush1.msra.mxu0 0.0
        %1068 = vmatprep.subr.mxu0 0.0
        %1069 = vmatpush1.msra.mxu0 0.0
        %1070 = vmatprep.subr.mxu0 0.0
        %1071 = vmatpush1.msra.mxu0 0.0
        %1072 = vmatprep.subr.mxu0 0.0
        %1073 = vmatpush1.msra.mxu0 0.0
        %1074 = vmatprep.subr.mxu0 0.0
        %1075 = vmatpush1.msra.mxu0 0.0
        %1076 = vmatprep.subr.mxu0 0.0
        %1077 = vmatpush1.msra.mxu0 0.0
        %1078 = vmatprep.subr.mxu0 0.0
        %1079 = vmatpush1.msra.mxu0 0.0
        %1080 = vmatprep.subr.mxu0 0.0
        %1081 = vmatpush1.msra.mxu0 0.0
        %1082 = vmatprep.subr.mxu0 0.0
        %1083 = vmatpush1.msra.mxu0 0.0
        %1084 = vmatprep.subr.mxu0 0.0
        %1085 = vmatpush1.msra.mxu0 0.0
        %1086 = vmatprep.subr.mxu0 0.0
        %1087 = vmatpush1.msra.mxu0 0.0
        %1088 = vmatprep.subr.mxu0 0.0
        %1089 = vmatpush1.msra.mxu0 0.0
        %1090 = vmatprep.subr.mxu0 0.0
        %1091 = vmatpush1.msra.mxu0 0.0
        %1092 = vmatprep.subr.mxu0 0.0
        %1093 = vmatpush1.msra.mxu0 0.0
        %1094 = vmatprep.subr.mxu0 0.0
        %1095 = vmatpush1.msra.mxu0 0.0
        %1096 = vmatprep.subr.mxu0 0.0
        %1097 = vmatpush1.msra.mxu0 0.0
        %1098 = vmatprep.subr.mxu0 0.0
        %1099 = vmatpush1.msra.mxu0 0.0
        %1100 = vmatprep.subr.mxu0 0.0
        %1101 = vmatpush1.msra.mxu0 0.0
        %1102 = vmatprep.mubr.f32.mxu0 0.0
        %1103 = vmatmul.mubr.f32.gmra.mrb[0].mxu0 %v1036
        %v1104 = vpop.f32.mrb[0].mxu0
        %v1105 = vadd.f32 0.0, %v1104
        %v1106 = vpop.f32.mrb[0].mxu0
        %1107 = vdwg.mxu0
        %v1109 = vsel %vm705, %v864, 0
        %1111 = vmatprep.subr.mxu0 0.0
        %1112 = vmatpush1.msra.mxu0 %v437
        %1113 = vmatprep.subr.mxu0 0.0
        %1114 = vmatpush1.msra.mxu0 0.0
        %1115 = vmatprep.subr.mxu0 0.0
        %1116 = vmatpush1.msra.mxu0 0.0
        %1117 = vmatprep.subr.mxu0 0.0
        %1118 = vmatpush1.msra.mxu0 0.0
        %1119 = vmatprep.subr.mxu0 0.0
        %1120 = vmatpush1.msra.mxu0 0.0
        %1121 = vmatprep.subr.mxu0 0.0
        %1122 = vmatpush1.msra.mxu0 0.0
        %1123 = vmatprep.subr.mxu0 0.0
        %1124 = vmatpush1.msra.mxu0 0.0
        %1125 = vmatprep.subr.mxu0 0.0
        %1126 = vmatpush1.msra.mxu0 0.0
        %1127 = vmatprep.subr.mxu0 0.0
        %1128 = vmatpush1.msra.mxu0 0.0
        %1129 = vmatprep.subr.mxu0 0.0
        %1130 = vmatpush1.msra.mxu0 0.0
        %1131 = vmatprep.subr.mxu0 0.0
        %1132 = vmatpush1.msra.mxu0 0.0
        %1133 = vmatprep.subr.mxu0 0.0
        %1134 = vmatpush1.msra.mxu0 0.0
        %1135 = vmatprep.subr.mxu0 0.0
        %1136 = vmatpush1.msra.mxu0 0.0
        %1137 = vmatprep.subr.mxu0 0.0
        %1138 = vmatpush1.msra.mxu0 0.0
        %1139 = vmatprep.subr.mxu0 0.0
        %1140 = vmatpush1.msra.mxu0 0.0
        %1141 = vmatprep.subr.mxu0 0.0
        %1142 = vmatpush1.msra.mxu0 0.0
        %1143 = vmatprep.subr.mxu0 0.0
        %1144 = vmatpush1.msra.mxu0 0.0
        %1145 = vmatprep.subr.mxu0 0.0
        %1146 = vmatpush1.msra.mxu0 0.0
        %1147 = vmatprep.subr.mxu0 0.0
        %1148 = vmatpush1.msra.mxu0 0.0
        %1149 = vmatprep.subr.mxu0 0.0
        %1150 = vmatpush1.msra.mxu0 0.0
        %1151 = vmatprep.subr.mxu0 0.0
        %1152 = vmatpush1.msra.mxu0 0.0
        %1153 = vmatprep.subr.mxu0 0.0
        %1154 = vmatpush1.msra.mxu0 0.0
        %1155 = vmatprep.subr.mxu0 0.0
        %1156 = vmatpush1.msra.mxu0 0.0
        %1157 = vmatprep.subr.mxu0 0.0
        %1158 = vmatpush1.msra.mxu0 0.0
        %1159 = vmatprep.subr.mxu0 0.0
        %1160 = vmatpush1.msra.mxu0 0.0
        %1161 = vmatprep.subr.mxu0 0.0
        %1162 = vmatpush1.msra.mxu0 0.0
        %1163 = vmatprep.subr.mxu0 0.0
        %1164 = vmatpush1.msra.mxu0 0.0
        %1165 = vmatprep.subr.mxu0 0.0
        %1166 = vmatpush1.msra.mxu0 0.0
        %1167 = vmatprep.subr.mxu0 0.0
        %1168 = vmatpush1.msra.mxu0 0.0
        %1169 = vmatprep.subr.mxu0 0.0
        %1170 = vmatpush1.msra.mxu0 0.0
        %1171 = vmatprep.subr.mxu0 0.0
        %1172 = vmatpush1.msra.mxu0 0.0
        %1173 = vmatprep.subr.mxu0 0.0
        %1174 = vmatpush1.msra.mxu0 0.0
        %1175 = vmatprep.mubr.f32.mxu0 0.0
        %1176 = vmatmul.mubr.f32.gmra.mrb[0].mxu0 %v1109
        %v1177 = vpop.f32.mrb[0].mxu0
        %v1178 = vadd.f32 %v1105, %v1177
        %v1179 = vpop.f32.mrb[0].mxu0
        %1180 = vdwg.mxu0
        %1181 = vrot.lane.b32.xlu0 %v704, 112
        %v1182 = vpop.permute.xlu0 %1181
        %1183 = vrot.lane.b32.xlu0 %v613, 112
        %v1184 = vpop.permute.xlu0 %1183
        %v1185 = vsel %vm705, %v1182, 0
        %v1187 = vsel %vm705, %v1184, 0
        %1189 = vmatprep.subr.mxu0 0.0
        %1190 = vmatpush1.xpose.msra.mxu0 %v1187
        %1191 = vmatprep.subr.mxu0 0.0
        %1192 = vmatpush1.xpose.msra.mxu0 0.0
        %1193 = vmatprep.subr.mxu0 0.0
        %1194 = vmatpush1.xpose.msra.mxu0 0.0
        %1195 = vmatprep.subr.mxu0 0.0
        %1196 = vmatpush1.xpose.msra.mxu0 0.0
        %1197 = vmatprep.subr.mxu0 0.0
        %1198 = vmatpush1.xpose.msra.mxu0 0.0
        %1199 = vmatprep.subr.mxu0 0.0
        %1200 = vmatpush1.xpose.msra.mxu0 0.0
        %1201 = vmatprep.subr.mxu0 0.0
        %1202 = vmatpush1.xpose.msra.mxu0 0.0
        %1203 = vmatprep.subr.mxu0 0.0
        %1204 = vmatpush1.xpose.msra.mxu0 0.0
        %1205 = vmatprep.subr.mxu0 0.0
        %1206 = vmatpush1.xpose.msra.mxu0 0.0
        %1207 = vmatprep.subr.mxu0 0.0
        %1208 = vmatpush1.xpose.msra.mxu0 0.0
        %1209 = vmatprep.subr.mxu0 0.0
        %1210 = vmatpush1.xpose.msra.mxu0 0.0
        %1211 = vmatprep.subr.mxu0 0.0
        %1212 = vmatpush1.xpose.msra.mxu0 0.0
        %1213 = vmatprep.subr.mxu0 0.0
        %1214 = vmatpush1.xpose.msra.mxu0 0.0
        %1215 = vmatprep.subr.mxu0 0.0
        %1216 = vmatpush1.xpose.msra.mxu0 0.0
        %1217 = vmatprep.subr.mxu0 0.0
        %1218 = vmatpush1.xpose.msra.mxu0 0.0
        %1219 = vmatprep.subr.mxu0 0.0
        %1220 = vmatpush1.xpose.msra.mxu0 0.0
        %1221 = vmatprep.subr.mxu0 0.0
        %1222 = vmatpush1.xpose.msra.mxu0 0.0
        %1223 = vmatprep.subr.mxu0 0.0
        %1224 = vmatpush1.xpose.msra.mxu0 0.0
        %1225 = vmatprep.subr.mxu0 0.0
        %1226 = vmatpush1.xpose.msra.mxu0 0.0
        %1227 = vmatprep.subr.mxu0 0.0
        %1228 = vmatpush1.xpose.msra.mxu0 0.0
        %1229 = vmatprep.subr.mxu0 0.0
        %1230 = vmatpush1.xpose.msra.mxu0 0.0
        %1231 = vmatprep.subr.mxu0 0.0
        %1232 = vmatpush1.xpose.msra.mxu0 0.0
        %1233 = vmatprep.subr.mxu0 0.0
        %1234 = vmatpush1.xpose.msra.mxu0 0.0
        %1235 = vmatprep.subr.mxu0 0.0
        %1236 = vmatpush1.xpose.msra.mxu0 0.0
        %1237 = vmatprep.subr.mxu0 0.0
        %1238 = vmatpush1.xpose.msra.mxu0 0.0
        %1239 = vmatprep.subr.mxu0 0.0
        %1240 = vmatpush1.xpose.msra.mxu0 0.0
        %1241 = vmatprep.subr.mxu0 0.0
        %1242 = vmatpush1.xpose.msra.mxu0 0.0
        %1243 = vmatprep.subr.mxu0 0.0
        %1244 = vmatpush1.xpose.msra.mxu0 0.0
        %1245 = vmatprep.subr.mxu0 0.0
        %1246 = vmatpush1.xpose.msra.mxu0 0.0
        %1247 = vmatprep.subr.mxu0 0.0
        %1248 = vmatpush1.xpose.msra.mxu0 0.0
        %1249 = vmatprep.subr.mxu0 0.0
        %1250 = vmatpush1.xpose.msra.mxu0 0.0
        %1251 = vmatprep.subr.mxu0 0.0
        %1252 = vmatpush1.xpose.msra.mxu0 0.0
        %1253 = vmatprep.mubr.f32.mxu0 0.0
        %1254 = vmatmul.mubr.f32.gmra.mrb[0].mxu0 %v1185
        %v1255 = vpop.f32.mrb[0].mxu0
        %v1256 = vadd.f32 0.0, %v1255
        %v1257 = vpop.f32.mrb[0].mxu0
        %1258 = vdwg.mxu0
        %v1259 = vsel %vm705, %v1256, -inf
        %1260 = vmax.xlane.f32.xlu0 %v1259
        %v1261 = vpop.xlane.xlu0 %1260
        %v1262 = vsub.f32 %v1256, %v1261
        %v1263 = vmul.f32 %v1262, 1.442695
        %v1264 = vpow.pop %v1263
        %v1265 = vsel %vm705, %v1264, 0.0
        %1266 = vadd.xlane.f32.xlu0 %v1265
        %v1267 = vpop.xlane.xlu0 %1266
        %v1268 = vrcp.pop %v1267
        %v1269 = vmul.f32 %v1264, %v1268
        %s1270 = scalar_lea.vmem %s431, 16 [#allocation12]
        %1271 = vst.msk [vmem:[%s1270] sm:$0xff] %vm705, %v1269
        %1272 = vrot.lane.b32.xlu0 %v701, 112
        %v1273 = vpop.permute.xlu0 %1272
        %v1276 = vsel %vm705, %v1269, 0
        %1278 = vmatprep.subr.mxu0 0.0
        %1279 = vmatpush1.msra.mxu0 %v1273
        %1280 = vmatprep.subr.mxu0 0.0
        %1281 = vmatpush1.msra.mxu0 0.0
        %1282 = vmatprep.subr.mxu0 0.0
        %1283 = vmatpush1.msra.mxu0 0.0
        %1284 = vmatprep.subr.mxu0 0.0
        %1285 = vmatpush1.msra.mxu0 0.0
        %1286 = vmatprep.subr.mxu0 0.0
        %1287 = vmatpush1.msra.mxu0 0.0
        %1288 = vmatprep.subr.mxu0 0.0
        %1289 = vmatpush1.msra.mxu0 0.0
        %1290 = vmatprep.subr.mxu0 0.0
        %1291 = vmatpush1.msra.mxu0 0.0
        %1292 = vmatprep.subr.mxu0 0.0
        %1293 = vmatpush1.msra.mxu0 0.0
        %1294 = vmatprep.subr.mxu0 0.0
        %1295 = vmatpush1.msra.mxu0 0.0
        %1296 = vmatprep.subr.mxu0 0.0
        %1297 = vmatpush1.msra.mxu0 0.0
        %1298 = vmatprep.subr.mxu0 0.0
        %1299 = vmatpush1.msra.mxu0 0.0
        %1300 = vmatprep.subr.mxu0 0.0
        %1301 = vmatpush1.msra.mxu0 0.0
        %1302 = vmatprep.subr.mxu0 0.0
        %1303 = vmatpush1.msra.mxu0 0.0
        %1304 = vmatprep.subr.mxu0 0.0
        %1305 = vmatpush1.msra.mxu0 0.0
        %1306 = vmatprep.subr.mxu0 0.0
        %1307 = vmatpush1.msra.mxu0 0.0
        %1308 = vmatprep.subr.mxu0 0.0
        %1309 = vmatpush1.msra.mxu0 0.0
        %1310 = vmatprep.subr.mxu0 0.0
        %1311 = vmatpush1.msra.mxu0 0.0
        %1312 = vmatprep.subr.mxu0 0.0
        %1313 = vmatpush1.msra.mxu0 0.0
        %1314 = vmatprep.subr.mxu0 0.0
        %1315 = vmatpush1.msra.mxu0 0.0
        %1316 = vmatprep.subr.mxu0 0.0
        %1317 = vmatpush1.msra.mxu0 0.0
        %1318 = vmatprep.subr.mxu0 0.0
        %1319 = vmatpush1.msra.mxu0 0.0
        %1320 = vmatprep.subr.mxu0 0.0
        %1321 = vmatpush1.msra.mxu0 0.0
        %1322 = vmatprep.subr.mxu0 0.0
        %1323 = vmatpush1.msra.mxu0 0.0
        %1324 = vmatprep.subr.mxu0 0.0
        %1325 = vmatpush1.msra.mxu0 0.0
        %1326 = vmatprep.subr.mxu0 0.0
        %1327 = vmatpush1.msra.mxu0 0.0
        %1328 = vmatprep.subr.mxu0 0.0
        %1329 = vmatpush1.msra.mxu0 0.0
        %1330 = vmatprep.subr.mxu0 0.0
        %1331 = vmatpush1.msra.mxu0 0.0
        %1332 = vmatprep.subr.mxu0 0.0
        %1333 = vmatpush1.msra.mxu0 0.0
        %1334 = vmatprep.subr.mxu0 0.0
        %1335 = vmatpush1.msra.mxu0 0.0
        %1336 = vmatprep.subr.mxu0 0.0
        %1337 = vmatpush1.msra.mxu0 0.0
        %1338 = vmatprep.subr.mxu0 0.0
        %1339 = vmatpush1.msra.mxu0 0.0
        %1340 = vmatprep.subr.mxu0 0.0
        %1341 = vmatpush1.msra.mxu0 0.0
        %1342 = vmatprep.mubr.f32.mxu0 0.0
        %1343 = vmatmul.mubr.f32.gmra.mrb[0].mxu0 %v1276
        %v1344 = vpop.f32.mrb[0].mxu0
        %v1345 = vadd.f32 0.0, %v1344
        %v1346 = vpop.f32.mrb[0].mxu0
        %1347 = vdwg.mxu0
        %v1349 = vsel %vm705, %v1345, 0
        %1351 = vmatprep.subr.mxu0 0.0
        %1352 = vmatpush1.msra.mxu0 %v439
        %1353 = vmatprep.subr.mxu0 0.0
        %1354 = vmatpush1.msra.mxu0 0.0
        %1355 = vmatprep.subr.mxu0 0.0
        %1356 = vmatpush1.msra.mxu0 0.0
        %1357 = vmatprep.subr.mxu0 0.0
        %1358 = vmatpush1.msra.mxu0 0.0
        %1359 = vmatprep.subr.mxu0 0.0
        %1360 = vmatpush1.msra.mxu0 0.0
        %1361 = vmatprep.subr.mxu0 0.0
        %1362 = vmatpush1.msra.mxu0 0.0
        %1363 = vmatprep.subr.mxu0 0.0
        %1364 = vmatpush1.msra.mxu0 0.0
        %1365 = vmatprep.subr.mxu0 0.0
        %1366 = vmatpush1.msra.mxu0 0.0
        %1367 = vmatprep.subr.mxu0 0.0
        %1368 = vmatpush1.msra.mxu0 0.0
        %1369 = vmatprep.subr.mxu0 0.0
        %1370 = vmatpush1.msra.mxu0 0.0
        %1371 = vmatprep.subr.mxu0 0.0
        %1372 = vmatpush1.msra.mxu0 0.0
        %1373 = vmatprep.subr.mxu0 0.0
        %1374 = vmatpush1.msra.mxu0 0.0
        %1375 = vmatprep.subr.mxu0 0.0
        %1376 = vmatpush1.msra.mxu0 0.0
        %1377 = vmatprep.subr.mxu0 0.0
        %1378 = vmatpush1.msra.mxu0 0.0
        %1379 = vmatprep.subr.mxu0 0.0
        %1380 = vmatpush1.msra.mxu0 0.0
        %1381 = vmatprep.subr.mxu0 0.0
        %1382 = vmatpush1.msra.mxu0 0.0
        %1383 = vmatprep.subr.mxu0 0.0
        %1384 = vmatpush1.msra.mxu0 0.0
        %1385 = vmatprep.subr.mxu0 0.0
        %1386 = vmatpush1.msra.mxu0 0.0
        %1387 = vmatprep.subr.mxu0 0.0
        %1388 = vmatpush1.msra.mxu0 0.0
        %1389 = vmatprep.subr.mxu0 0.0
        %1390 = vmatpush1.msra.mxu0 0.0
        %1391 = vmatprep.subr.mxu0 0.0
        %1392 = vmatpush1.msra.mxu0 0.0
        %1393 = vmatprep.subr.mxu0 0.0
        %1394 = vmatpush1.msra.mxu0 0.0
        %1395 = vmatprep.subr.mxu0 0.0
        %1396 = vmatpush1.msra.mxu0 0.0
        %1397 = vmatprep.subr.mxu0 0.0
        %1398 = vmatpush1.msra.mxu0 0.0
        %1399 = vmatprep.subr.mxu0 0.0
        %1400 = vmatpush1.msra.mxu0 0.0
        %1401 = vmatprep.subr.mxu0 0.0
        %1402 = vmatpush1.msra.mxu0 0.0
        %1403 = vmatprep.subr.mxu0 0.0
        %1404 = vmatpush1.msra.mxu0 0.0
        %1405 = vmatprep.subr.mxu0 0.0
        %1406 = vmatpush1.msra.mxu0 0.0
        %1407 = vmatprep.subr.mxu0 0.0
        %1408 = vmatpush1.msra.mxu0 0.0
        %1409 = vmatprep.subr.mxu0 0.0
        %1410 = vmatpush1.msra.mxu0 0.0
        %1411 = vmatprep.subr.mxu0 0.0
        %1412 = vmatpush1.msra.mxu0 0.0
        %1413 = vmatprep.subr.mxu0 0.0
        %1414 = vmatpush1.msra.mxu0 0.0
        %1415 = vmatprep.mubr.f32.mxu0 0.0
        %1416 = vmatmul.mubr.f32.gmra.mrb[0].mxu0 %v1349
        %v1417 = vpop.f32.mrb[0].mxu0
        %v1418 = vadd.f32 0.0, %v1417
        %v1419 = vpop.f32.mrb[0].mxu0
        %1420 = vdwg.mxu0
        %v1421 = vadd.f32 %v1178, %v1418
        %1422 = vrot.lane.b32.xlu0 %v704, 104
        %v1423 = vpop.permute.xlu0 %1422
        %1424 = vrot.lane.b32.xlu0 %v613, 104
        %v1425 = vpop.permute.xlu0 %1424
        %v1426 = vsel %vm705, %v1423, 0
        %v1428 = vsel %vm705, %v1425, 0
        %1430 = vmatprep.subr.mxu0 0.0
        %1431 = vmatpush1.xpose.msra.mxu0 %v1428
        %1432 = vmatprep.subr.mxu0 0.0
        %1433 = vmatpush1.xpose.msra.mxu0 0.0
        %1434 = vmatprep.subr.mxu0 0.0
        %1435 = vmatpush1.xpose.msra.mxu0 0.0
        %1436 = vmatprep.subr.mxu0 0.0
        %1437 = vmatpush1.xpose.msra.mxu0 0.0
        %1438 = vmatprep.subr.mxu0 0.0
        %1439 = vmatpush1.xpose.msra.mxu0 0.0
        %1440 = vmatprep.subr.mxu0 0.0
        %1441 = vmatpush1.xpose.msra.mxu0 0.0
        %1442 = vmatprep.subr.mxu0 0.0
        %1443 = vmatpush1.xpose.msra.mxu0 0.0
        %1444 = vmatprep.subr.mxu0 0.0
        %1445 = vmatpush1.xpose.msra.mxu0 0.0
        %1446 = vmatprep.subr.mxu0 0.0
        %1447 = vmatpush1.xpose.msra.mxu0 0.0
        %1448 = vmatprep.subr.mxu0 0.0
        %1449 = vmatpush1.xpose.msra.mxu0 0.0
        %1450 = vmatprep.subr.mxu0 0.0
        %1451 = vmatpush1.xpose.msra.mxu0 0.0
        %1452 = vmatprep.subr.mxu0 0.0
        %1453 = vmatpush1.xpose.msra.mxu0 0.0
        %1454 = vmatprep.subr.mxu0 0.0
        %1455 = vmatpush1.xpose.msra.mxu0 0.0
        %1456 = vmatprep.subr.mxu0 0.0
        %1457 = vmatpush1.xpose.msra.mxu0 0.0
        %1458 = vmatprep.subr.mxu0 0.0
        %1459 = vmatpush1.xpose.msra.mxu0 0.0
        %1460 = vmatprep.subr.mxu0 0.0
        %1461 = vmatpush1.xpose.msra.mxu0 0.0
        %1462 = vmatprep.subr.mxu0 0.0
        %1463 = vmatpush1.xpose.msra.mxu0 0.0
        %1464 = vmatprep.subr.mxu0 0.0
        %1465 = vmatpush1.xpose.msra.mxu0 0.0
        %1466 = vmatprep.subr.mxu0 0.0
        %1467 = vmatpush1.xpose.msra.mxu0 0.0
        %1468 = vmatprep.subr.mxu0 0.0
        %1469 = vmatpush1.xpose.msra.mxu0 0.0
        %1470 = vmatprep.subr.mxu0 0.0
        %1471 = vmatpush1.xpose.msra.mxu0 0.0
        %1472 = vmatprep.subr.mxu0 0.0
        %1473 = vmatpush1.xpose.msra.mxu0 0.0
        %1474 = vmatprep.subr.mxu0 0.0
        %1475 = vmatpush1.xpose.msra.mxu0 0.0
        %1476 = vmatprep.subr.mxu0 0.0
        %1477 = vmatpush1.xpose.msra.mxu0 0.0
        %1478 = vmatprep.subr.mxu0 0.0
        %1479 = vmatpush1.xpose.msra.mxu0 0.0
        %1480 = vmatprep.subr.mxu0 0.0
        %1481 = vmatpush1.xpose.msra.mxu0 0.0
        %1482 = vmatprep.subr.mxu0 0.0
        %1483 = vmatpush1.xpose.msra.mxu0 0.0
        %1484 = vmatprep.subr.mxu0 0.0
        %1485 = vmatpush1.xpose.msra.mxu0 0.0
        %1486 = vmatprep.subr.mxu0 0.0
        %1487 = vmatpush1.xpose.msra.mxu0 0.0
        %1488 = vmatprep.subr.mxu0 0.0
        %1489 = vmatpush1.xpose.msra.mxu0 0.0
        %1490 = vmatprep.subr.mxu0 0.0
        %1491 = vmatpush1.xpose.msra.mxu0 0.0
        %1492 = vmatprep.subr.mxu0 0.0
        %1493 = vmatpush1.xpose.msra.mxu0 0.0
        %1494 = vmatprep.mubr.f32.mxu0 0.0
        %1495 = vmatmul.mubr.f32.gmra.mrb[0].mxu0 %v1426
        %v1496 = vpop.f32.mrb[0].mxu0
        %v1497 = vadd.f32 0.0, %v1496
        %v1498 = vpop.f32.mrb[0].mxu0
        %1499 = vdwg.mxu0
        %v1500 = vsel %vm705, %v1497, -inf
        %1501 = vmax.xlane.f32.xlu0 %v1500
        %v1502 = vpop.xlane.xlu0 %1501
        %v1503 = vsub.f32 %v1497, %v1502
        %v1504 = vmul.f32 %v1503, 1.442695
        %v1505 = vpow.pop %v1504
        %v1506 = vsel %vm705, %v1505, 0.0
        %1507 = vadd.xlane.f32.xlu0 %v1506
        %v1508 = vpop.xlane.xlu0 %1507
        %v1509 = vrcp.pop %v1508
        %v1510 = vmul.f32 %v1505, %v1509
        %s1511 = scalar_lea.vmem %s431, 24 [#allocation12]
        %1512 = vst.msk [vmem:[%s1511] sm:$0xff] %vm705, %v1510
        %1513 = vrot.lane.b32.xlu0 %v701, 104
        %v1514 = vpop.permute.xlu0 %1513
        %v1517 = vsel %vm705, %v1510, 0
        %1519 = vmatprep.subr.mxu0 0.0
        %1520 = vmatpush1.msra.mxu0 %v1514
        %1521 = vmatprep.subr.mxu0 0.0
        %1522 = vmatpush1.msra.mxu0 0.0
        %1523 = vmatprep.subr.mxu0 0.0
        %1524 = vmatpush1.msra.mxu0 0.0
        %1525 = vmatprep.subr.mxu0 0.0
        %1526 = vmatpush1.msra.mxu0 0.0
        %1527 = vmatprep.subr.mxu0 0.0
        %1528 = vmatpush1.msra.mxu0 0.0
        %1529 = vmatprep.subr.mxu0 0.0
        %1530 = vmatpush1.msra.mxu0 0.0
        %1531 = vmatprep.subr.mxu0 0.0
        %1532 = vmatpush1.msra.mxu0 0.0
        %1533 = vmatprep.subr.mxu0 0.0
        %1534 = vmatpush1.msra.mxu0 0.0
        %1535 = vmatprep.subr.mxu0 0.0
        %1536 = vmatpush1.msra.mxu0 0.0
        %1537 = vmatprep.subr.mxu0 0.0
        %1538 = vmatpush1.msra.mxu0 0.0
        %1539 = vmatprep.subr.mxu0 0.0
        %1540 = vmatpush1.msra.mxu0 0.0
        %1541 = vmatprep.subr.mxu0 0.0
        %1542 = vmatpush1.msra.mxu0 0.0
        %1543 = vmatprep.subr.mxu0 0.0
        %1544 = vmatpush1.msra.mxu0 0.0
        %1545 = vmatprep.subr.mxu0 0.0
        %1546 = vmatpush1.msra.mxu0 0.0
        %1547 = vmatprep.subr.mxu0 0.0
        %1548 = vmatpush1.msra.mxu0 0.0
        %1549 = vmatprep.subr.mxu0 0.0
        %1550 = vmatpush1.msra.mxu0 0.0
        %1551 = vmatprep.subr.mxu0 0.0
        %1552 = vmatpush1.msra.mxu0 0.0
        %1553 = vmatprep.subr.mxu0 0.0
        %1554 = vmatpush1.msra.mxu0 0.0
        %1555 = vmatprep.subr.mxu0 0.0
        %1556 = vmatpush1.msra.mxu0 0.0
        %1557 = vmatprep.subr.mxu0 0.0
        %1558 = vmatpush1.msra.mxu0 0.0
        %1559 = vmatprep.subr.mxu0 0.0
        %1560 = vmatpush1.msra.mxu0 0.0
        %1561 = vmatprep.subr.mxu0 0.0
        %1562 = vmatpush1.msra.mxu0 0.0
        %1563 = vmatprep.subr.mxu0 0.0
        %1564 = vmatpush1.msra.mxu0 0.0
        %1565 = vmatprep.subr.mxu0 0.0
        %1566 = vmatpush1.msra.mxu0 0.0
        %1567 = vmatprep.subr.mxu0 0.0
        %1568 = vmatpush1.msra.mxu0 0.0
        %1569 = vmatprep.subr.mxu0 0.0
        %1570 = vmatpush1.msra.mxu0 0.0
        %1571 = vmatprep.subr.mxu0 0.0
        %1572 = vmatpush1.msra.mxu0 0.0
        %1573 = vmatprep.subr.mxu0 0.0
        %1574 = vmatpush1.msra.mxu0 0.0
        %1575 = vmatprep.subr.mxu0 0.0
        %1576 = vmatpush1.msra.mxu0 0.0
        %1577 = vmatprep.subr.mxu0 0.0
        %1578 = vmatpush1.msra.mxu0 0.0
        %1579 = vmatprep.subr.mxu0 0.0
        %1580 = vmatpush1.msra.mxu0 0.0
        %1581 = vmatprep.subr.mxu0 0.0
        %1582 = vmatpush1.msra.mxu0 0.0
        %1583 = vmatprep.mubr.f32.mxu0 0.0
        %1584 = vmatmul.mubr.f32.gmra.mrb[0].mxu0 %v1517
        %v1585 = vpop.f32.mrb[0].mxu0
        %v1586 = vadd.f32 0.0, %v1585
        %v1587 = vpop.f32.mrb[0].mxu0
        %1588 = vdwg.mxu0
        %v1590 = vsel %vm705, %v1586, 0
        %1592 = vmatprep.subr.mxu0 0.0
        %1593 = vmatpush1.msra.mxu0 %v440
        %1594 = vmatprep.subr.mxu0 0.0
        %1595 = vmatpush1.msra.mxu0 0.0
        %1596 = vmatprep.subr.mxu0 0.0
        %1597 = vmatpush1.msra.mxu0 0.0
        %1598 = vmatprep.subr.mxu0 0.0
        %1599 = vmatpush1.msra.mxu0 0.0
        %1600 = vmatprep.subr.mxu0 0.0
        %1601 = vmatpush1.msra.mxu0 0.0
        %1602 = vmatprep.subr.mxu0 0.0
        %1603 = vmatpush1.msra.mxu0 0.0
        %1604 = vmatprep.subr.mxu0 0.0
        %1605 = vmatpush1.msra.mxu0 0.0
        %1606 = vmatprep.subr.mxu0 0.0
        %1607 = vmatpush1.msra.mxu0 0.0
        %1608 = vmatprep.subr.mxu0 0.0
        %1609 = vmatpush1.msra.mxu0 0.0
        %1610 = vmatprep.subr.mxu0 0.0
        %1611 = vmatpush1.msra.mxu0 0.0
        %1612 = vmatprep.subr.mxu0 0.0
        %1613 = vmatpush1.msra.mxu0 0.0
        %1614 = vmatprep.subr.mxu0 0.0
        %1615 = vmatpush1.msra.mxu0 0.0
        %1616 = vmatprep.subr.mxu0 0.0
        %1617 = vmatpush1.msra.mxu0 0.0
        %1618 = vmatprep.subr.mxu0 0.0
        %1619 = vmatpush1.msra.mxu0 0.0
        %1620 = vmatprep.subr.mxu0 0.0
        %1621 = vmatpush1.msra.mxu0 0.0
        %1622 = vmatprep.subr.mxu0 0.0
        %1623 = vmatpush1.msra.mxu0 0.0
        %1624 = vmatprep.subr.mxu0 0.0
        %1625 = vmatpush1.msra.mxu0 0.0
        %1626 = vmatprep.subr.mxu0 0.0
        %1627 = vmatpush1.msra.mxu0 0.0
        %1628 = vmatprep.subr.mxu0 0.0
        %1629 = vmatpush1.msra.mxu0 0.0
        %1630 = vmatprep.subr.mxu0 0.0
        %1631 = vmatpush1.msra.mxu0 0.0
        %1632 = vmatprep.subr.mxu0 0.0
        %1633 = vmatpush1.msra.mxu0 0.0
        %1634 = vmatprep.subr.mxu0 0.0
        %1635 = vmatpush1.msra.mxu0 0.0
        %1636 = vmatprep.subr.mxu0 0.0
        %1637 = vmatpush1.msra.mxu0 0.0
        %1638 = vmatprep.subr.mxu0 0.0
        %1639 = vmatpush1.msra.mxu0 0.0
        %1640 = vmatprep.subr.mxu0 0.0
        %1641 = vmatpush1.msra.mxu0 0.0
        %1642 = vmatprep.subr.mxu0 0.0
        %1643 = vmatpush1.msra.mxu0 0.0
        %1644 = vmatprep.subr.mxu0 0.0
        %1645 = vmatpush1.msra.mxu0 0.0
        %1646 = vmatprep.subr.mxu0 0.0
        %1647 = vmatpush1.msra.mxu0 0.0
        %1648 = vmatprep.subr.mxu0 0.0
        %1649 = vmatpush1.msra.mxu0 0.0
        %1650 = vmatprep.subr.mxu0 0.0
        %1651 = vmatpush1.msra.mxu0 0.0
        %1652 = vmatprep.subr.mxu0 0.0
        %1653 = vmatpush1.msra.mxu0 0.0
        %1654 = vmatprep.subr.mxu0 0.0
        %1655 = vmatpush1.msra.mxu0 0.0
        %1656 = vmatprep.mubr.f32.mxu0 0.0
        %1657 = vmatmul.mubr.f32.gmra.mrb[0].mxu0 %v1590
        %v1658 = vpop.f32.mrb[0].mxu0
        %v1659 = vadd.f32 0.0, %v1658
        %v1660 = vpop.f32.mrb[0].mxu0
        %1661 = vdwg.mxu0
        %v1662 = vadd.f32 %v1421, %v1659
        %v1663 = vld [vmem:[%s6] sm:$0x1]
        %v1665 = vlaneseq
        %v1666 = vshrl.u32 %v1665, 7
        %v1667 = vsub.s32 0, %v1666
        %v1668 = vrot.slane %v1663, %v1667
        %v1670 = vadd.f32 %v1662, %v1668
        %1671 = vst.msk [vmem:[%s424] sm:$0xff] %vm450, %v1670
        %s1672 = sand.u32 %s203, 1
        %s1673 = scalar_lea.sflag [#allocation4], %s1672
        %s1674 = sand.u32 %s203, 1
        %s1675 = smul.addr %s1674, 8
        %s1676 = scalar_lea.vmem [#allocation11], %s1675
        %s1677 = sand.u32 %s229, 1
        %s1678 = scalar_lea.sflag [#allocation13], %s1677
        %s1679 = sand.u32 %s229, 1
        %s1680 = smul.addr %s1679, 32
        %s1681 = scalar_lea.vmem [#allocation12], %s1680
        // Predicated region
        $region69: #{tpu_custom_call.1} parent=47 // pred_check
          %p1682 = pneg %p213
        $region70: #{tpu_custom_call.1} parent=47 // pred_check_branch
          %1684 = sbr.rel (%p1682) target = $region72
        $region71: #{tpu_custom_call.1} parent=47 // pred_region
          %s1686 = ssub.s32 128, 128
          %1687 = vsyncadd %s1673, %s1686
          %s1688 = smul.addr %s33, 128
          %s1689 = scalar_lea.hbm %s7, %s1688
          %s1691 = sshll.u32 %s1676, 4
          %s1692 = int_to_ptr.vmem [resolvable:$true] %s1691
          %1694 = dma.vmem_to_hbm [thread:$0]  %s1692, 128, %s1689, %s1673
        $region72: #{tpu_custom_call.1} parent=47 // pred_fallthru
          _
        // Predicated region
        $region73: #{tpu_custom_call.1} parent=47 // pred_check
          %p1695 = pneg %p239
        $region74: #{tpu_custom_call.1} parent=47 // pred_check_branch
          %1697 = sbr.rel (%p1695) target = $region76
        $region75: #{tpu_custom_call.1} parent=47 // pred_region
          %s1699 = ssub.s32 512, 512
          %1700 = vsyncadd %s1678, %s1699
          %s1701 = smul.addr %s33, 4
          %s1702 = smul.addr %s1701, 128
          %s1703 = scalar_lea.hbm %s8, %s1702
          %s1704 = sshll.u32 %s1681, 4
          %s1705 = int_to_ptr.vmem [resolvable:$true] %s1704
          %1710 = dma.vmem_to_hbm [thread:$0]  %s1705, 512, %s1703, %s1678, 128, 128, 8
        $region76: #{tpu_custom_call.1} parent=47 // pred_fallthru
          _
      $region48: #{tpu_custom_call.1} parent=5 // pred_fallthru
        _
      %p1711 = scmp.le.s32.totalorder 2, %s28
      // Predicated region
      $region77: #{tpu_custom_call.1} parent=5 // pred_check
        %p1712 = pneg %p1711
      $region78: #{tpu_custom_call.1} parent=5 // pred_check_branch
        %1714 = sbr.rel (%p1712) target = $region80
      $region79: #{tpu_custom_call.1} parent=5 // pred_region
        %s1715 = ssub.s32 %s28, 2
        // Predicated region
        $region81: #{tpu_custom_call.1} parent=79 // pred_check
          %p1716 = pneg %p219
        $region82: #{tpu_custom_call.1} parent=79 // pred_check_branch
          %1718 = sbr.rel (%p1716) target = $region84
        $region83: #{tpu_custom_call.1} parent=79 // pred_region
          %s1719 = sand.u32 %s204, 1
          %s1720 = scalar_lea.sflag [#allocation4], %s1719
          %s1721 = sand.u32 %s204, 1
          %s1722 = smul.addr %s1721, 8
          %s1723 = scalar_lea.vmem [#allocation11], %s1722
          %1724 = dma.done %s1720, 128
        $region84: #{tpu_custom_call.1} parent=79 // pred_fallthru
          _
        // Predicated region
        $region85: #{tpu_custom_call.1} parent=79 // pred_check
          %p1725 = pneg %p245
        $region86: #{tpu_custom_call.1} parent=79 // pred_check_branch
          %1727 = sbr.rel (%p1725) target = $region88
        $region87: #{tpu_custom_call.1} parent=79 // pred_region
          %s1728 = sand.u32 %s230, 1
          %s1729 = scalar_lea.sflag [#allocation13], %s1728
          %s1730 = sand.u32 %s230, 1
          %s1731 = smul.addr %s1730, 32
          %s1732 = scalar_lea.vmem [#allocation12], %s1731
          %1733 = dma.done %s1729, 512
        $region88: #{tpu_custom_call.1} parent=79 // pred_fallthru
          _
      $region80: #{tpu_custom_call.1} parent=5 // pred_fallthru
        _
    $region6: #{tpu_custom_call.1} parent=1 // loop_footer
      %s32 = sadd.s32 1, %s28
    $region7: #{tpu_custom_call.1} parent=1 // loop_footer_branch
      %27 = sbr.rel target = $region3
    $region8: #{tpu_custom_call.1} parent=1 // loop_exit
      _
    %1734 = vsyncpa [#allocation3], 1
    %s1735 = scalar_lea.sflag [#allocation3], 1
    %1736 = vsyncpa %s1735, 1
    %1737 = vsyncpa [#allocation6], 1
    %s1738 = scalar_lea.sflag [#allocation6], 1
    %1739 = vsyncpa %s1738, 1
    %1740 = vsyncpa [#allocation9], 1
    %1741 = vsyncpa [#allocation4], 1
    %s1742 = scalar_lea.sflag [#allocation4], 1
    %1743 = vsyncpa %s1742, 1
    %1744 = vsyncpa [#allocation13], 1
    %s1745 = scalar_lea.sflag [#allocation13], 1
    %1746 = vsyncpa %s1745, 1

// kernel: tpu_custom_call.1
$region0: #{tpu_custom_call.1}
  #allocation0 [shape = 'u32[]', space=smem, size = 0x4, offset = 0x4, fixed_abs, tag = 'smem constant byte address 0x4 - core index']
  #allocation1 [shape = 'u32[144,128]{1,0:T(1,128)}', space=vmem, size = 0x12000, scoped, tag = 'internal scratch']
  %s0 = inlined_call_operand.hbm [shape: f32[2,8,32], index: 0, kind: input, shape index: {}]
  %s1 = inlined_call_operand.hbm [shape: f32[2,8,32], index: 1, kind: input, shape index: {}]
  %s2 = inlined_call_operand.hbm [shape: f32[2,8,32], index: 2, kind: input, shape index: {}]
  %s3 = inlined_call_operand.hbm [shape: f32[32,96], index: 3, kind: input, shape index: {}]
  %s4 = inlined_call_operand.vmem [shape: f32[1,96], index: 4, kind: input, shape index: {}]
  %s5 = inlined_call_operand.hbm [shape: f32[32,32], index: 5, kind: input, shape index: {}]
  %s6 = inlined_call_operand.vmem [shape: f32[1,32], index: 6, kind: input, shape index: {}]
  %s7 = inlined_call_operand.hbm [shape: f32[2,8,32], index: 7, kind: output, shape index: {0}]
  %s8 = inlined_call_operand.hbm [shape: f32[2,4,8,8], index: 8, kind: output, shape index: {1}]
  %9 = xla_tuple %s7, %s8
  %s10 = sld [smem:[#allocation0]]
  $region89: #{tpu_custom_call.1} parent=0
    _
  %s12 = ssub.s32 1, %s10
  %s13 = scalar_select 0, %s12, %s10
  $region1: #{tpu_custom_call.1} parent=0
    #allocation2 [shape = 'u8[8192]{0}', space=vmem, size = 0x2000, scoped, tag = 'input window, operand 0']
    #allocation3 [shape = 's32[2]{0}', space=sflag, size = 0x8, scoped, tag = 'scoped memory for tpu_custom_call.1']
    #allocation4 [shape = 's32[2]{0}', space=sflag, size = 0x8, scoped, tag = 'scoped memory for tpu_custom_call.1']
    #allocation5 [shape = 'u8[8192]{0}', space=vmem, size = 0x2000, scoped, tag = 'input window, operand 1']
    #allocation6 [shape = 's32[2]{0}', space=sflag, size = 0x8, scoped, tag = 'scoped memory for tpu_custom_call.1']
    #allocation7 [shape = 'u8[8192]{0}', space=vmem, size = 0x2000, scoped, tag = 'input window, operand 2']
    #allocation8 [shape = 'u8[16384]{0}', space=vmem, size = 0x4000, scoped, tag = 'input window, operand 3, single buffered']
    #allocation9 [shape = 's32[1]{0}', space=sflag, size = 0x4, scoped, tag = 'scoped memory for tpu_custom_call.1']
    #allocation10 [shape = 'u8[16384]{0}', space=vmem, size = 0x4000, scoped, tag = 'input window, operand 5, single buffered']
    #allocation11 [shape = 'u8[8192]{0}', space=vmem, size = 0x2000, scoped, tag = 'output window, operand 0']
    #allocation12 [shape = 'u8[32768]{0}', space=vmem, size = 0x8000, scoped, tag = 'output window, operand 1']
    #allocation13 [shape = 's32[2]{0}', space=sflag, size = 0x8, scoped, tag = 'scoped memory for tpu_custom_call.1']
    %14 = vsyncpa [#allocation3], 0
    %s15 = scalar_lea.sflag [#allocation3], 1
    %16 = vsyncpa %s15, 0
    %17 = vsyncpa [#allocation6], 0
    %s18 = scalar_lea.sflag [#allocation6], 1
    %19 = vsyncpa %s18, 0
    %20 = vsyncpa [#allocation9], 0
    %21 = vsyncpa [#allocation4], 0
    %s22 = scalar_lea.sflag [#allocation4], 1
    %23 = vsyncpa %s22, 0
    %24 = vsyncpa [#allocation13], 0
    %s25 = scalar_lea.sflag [#allocation13], 1
    %26 = vsyncpa %s25, 0
    loop: start=0, step=1, limit=4
    $region2: #{tpu_custom_call.1} parent=1 // loop_pre_header
      _
    $region3: #{tpu_custom_call.1} parent=1 // loop_header
      %s28 = sphi 0, %s32
      %p29 = scmp.ge.s32.totalorder %s28, 4
      %s38 = sphi 0, %s40
      %s41 = sphi 0, %s38
      %s42 = sphi 0, %s41
      %s58 = sphi 0, %s42
      %s64 = sphi 0, %s66
      %s67 = sphi 0, %s64
      %s68 = sphi 0, %s67
      %s84 = sphi 0, %s68
      %s90 = sphi 0, %s92
      %s93 = sphi 0, %s90
      %s94 = sphi 0, %s93
      %s110 = sphi 0, %s94
      %s114 = sphi 0, %s114
      %s116 = sphi 0, %s114
      %s117 = sphi 0, %s116
      %s131 = sphi 0, %s117
      %s135 = sphi 0, %s135
      %s137 = sphi 0, %s135
      %s138 = sphi 0, %s137
      %s152 = sphi 0, %s138
      %s156 = sphi 0, %s156
      %s158 = sphi 0, %s156
      %s159 = sphi 0, %s158
      %s173 = sphi 0, %s159
      %s177 = sphi 0, %s177
      %s179 = sphi 0, %s177
      %s180 = sphi 0, %s179
      %s194 = sphi 0, %s180
      %s200 = sphi 0, %s202
      %s203 = sphi 0, %s200
      %s204 = sphi 0, %s203
      %s220 = sphi 0, %s204
      %s226 = sphi 0, %s228
      %s229 = sphi 0, %s226
      %s230 = sphi 0, %s229
      %s246 = sphi 0, %s230
    $region4: #{tpu_custom_call.1} parent=1 // loop_header_branch
      %31 = sbr.rel (%p29) target = $region8
    $region5: #{tpu_custom_call.1} parent=1 // loop_body
      %s33 = ssub.s32 %s28, 1
      %s34 = ssub.s32 %s28, 2
      %s35 = sadd.s32 %s28, 1
      %s36 = ssub.s32 %s28, %s35
      %p37 = scmp.eq.s32.totalorder %s36, 0
      %s39 = sadd.s32 %s38, 1
      %s40 = scalar_select %p37, %s38, %s39
      %p43 = pneg %p37
      %p44 = scmp.eq.s32.totalorder %s28, 1
      %p45 = por %p43, %p44
      %p46 = scmp.ne.s32.totalorder %s38, %s41
      %p47 = scmp.eq.s32.totalorder %s28, 0
      %p48 = por %p46, %p47
      %p49 = scmp.ne.s32.totalorder %s38, %s41
      %p50 = scmp.eq.s32.totalorder %s33, 1
      %p51 = por %p49, %p50
      %p52 = scmp.ne.s32.totalorder %s41, %s42
      %p53 = scmp.eq.s32.totalorder %s33, 0
      %p54 = por %p52, %p53
      %p55 = scmp.ne.s32.totalorder %s41, %s42
      %p56 = scmp.eq.s32.totalorder %s34, 1
      %p57 = por %p55, %p56
      %p59 = scmp.ne.s32.totalorder %s42, %s58
      %p60 = scmp.eq.s32.totalorder %s34, 0
      %p61 = por %p59, %p60
      %s62 = ssub.s32 %s28, %s35
      %p63 = scmp.eq.s32.totalorder %s62, 0
      %s65 = sadd.s32 %s64, 1
      %s66 = scalar_select %p63, %s64, %s65
      %p69 = pneg %p63
      %p70 = scmp.eq.s32.totalorder %s28, 1
      %p71 = por %p69, %p70
      %p72 = scmp.ne.s32.totalorder %s64, %s67
      %p73 = scmp.eq.s32.totalorder %s28, 0
      %p74 = por %p72, %p73
      %p75 = scmp.ne.s32.totalorder %s64, %s67
      %p76 = scmp.eq.s32.totalorder %s33, 1
      %p77 = por %p75, %p76
      %p78 = scmp.ne.s32.totalorder %s67, %s68
      %p79 = scmp.eq.s32.totalorder %s33, 0
      %p80 = por %p78, %p79
      %p81 = scmp.ne.s32.totalorder %s67, %s68
      %p82 = scmp.eq.s32.totalorder %s34, 1
      %p83 = por %p81, %p82
      %p85 = scmp.ne.s32.totalorder %s68, %s84
      %p86 = scmp.eq.s32.totalorder %s34, 0
      %p87 = por %p85, %p86
      %s88 = ssub.s32 %s28, %s35
      %p89 = scmp.eq.s32.totalorder %s88, 0
      %s91 = sadd.s32 %s90, 1
      %s92 = scalar_select %p89, %s90, %s91
      %p95 = pneg %p89
      %p96 = scmp.eq.s32.totalorder %s28, 1
      %p97 = por %p95, %p96
      %p98 = scmp.ne.s32.totalorder %s90, %s93
      %p99 = scmp.eq.s32.totalorder %s28, 0
      %p100 = por %p98, %p99
      %p101 = scmp.ne.s32.totalorder %s90, %s93
      %p102 = scmp.eq.s32.totalorder %s33, 1
      %p103 = por %p101, %p102
      %p104 = scmp.ne.s32.totalorder %s93, %s94
      %p105 = scmp.eq.s32.totalorder %s33, 0
      %p106 = por %p104, %p105
      %p107 = scmp.ne.s32.totalorder %s93, %s94
      %p108 = scmp.eq.s32.totalorder %s34, 1
      %p109 = por %p107, %p108
      %p111 = scmp.ne.s32.totalorder %s94, %s110
      %p112 = scmp.eq.s32.totalorder %s34, 0
      %p113 = por %p111, %p112
      %s115 = sadd.s32 %s114, 1
      %p118 = scmp.eq.s32.totalorder %s28, 1
      %p119 = scmp.ne.s32.totalorder %s114, %s116
      %p120 = scmp.eq.s32.totalorder %s28, 0
      %p121 = por %p119, %p120
      %p122 = scmp.ne.s32.totalorder %s114, %s116
      %p123 = scmp.eq.s32.totalorder %s33, 1
      %p124 = por %p122, %p123
      %p125 = scmp.ne.s32.totalorder %s116, %s117
      %p126 = scmp.eq.s32.totalorder %s33, 0
      %p127 = por %p125, %p126
      %p128 = scmp.ne.s32.totalorder %s116, %s117
      %p129 = scmp.eq.s32.totalorder %s34, 1
      %p130 = por %p128, %p129
      %p132 = scmp.ne.s32.totalorder %s117, %s131
      %p133 = scmp.eq.s32.totalorder %s34, 0
      %p134 = por %p132, %p133
      %s136 = sadd.s32 %s135, 1
      %p139 = scmp.eq.s32.totalorder %s28, 1
      %p140 = scmp.ne.s32.totalorder %s135, %s137
      %p141 = scmp.eq.s32.totalorder %s28, 0
      %p142 = por %p140, %p141
      %p143 = scmp.ne.s32.totalorder %s135, %s137
      %p144 = scmp.eq.s32.totalorder %s33, 1
      %p145 = por %p143, %p144
      %p146 = scmp.ne.s32.totalorder %s137, %s138
      %p147 = scmp.eq.s32.totalorder %s33, 0
      %p148 = por %p146, %p147
      %p149 = scmp.ne.s32.totalorder %s137, %s138
      %p150 = scmp.eq.s32.totalorder %s34, 1
      %p151 = por %p149, %p150
      %p153 = scmp.ne.s32.totalorder %s138, %s152
      %p154 = scmp.eq.s32.totalorder %s34, 0
      %p155 = por %p153, %p154
      %s157 = sadd.s32 %s156, 1
      %p160 = scmp.eq.s32.totalorder %s28, 1
      %p161 = scmp.ne.s32.totalorder %s156, %s158
      %p162 = scmp.eq.s32.totalorder %s28, 0
      %p163 = por %p161, %p162
      %p164 = scmp.ne.s32.totalorder %s156, %s158
      %p165 = scmp.eq.s32.totalorder %s33, 1
      %p166 = por %p164, %p165
      %p167 = scmp.ne.s32.totalorder %s158, %s159
      %p168 = scmp.eq.s32.totalorder %s33, 0
      %p169 = por %p167, %p168
      %p170 = scmp.ne.s32.totalorder %s158, %s159
      %p171 = scmp.eq.s32.totalorder %s34, 1
      %p172 = por %p170, %p171
      %p174 = scmp.ne.s32.totalorder %s159, %s173
      %p175 = scmp.eq.s32.totalorder %s34, 0
      %p176 = por %p174, %p175
      %s178 = sadd.s32 %s177, 1
      %p181 = scmp.eq.s32.totalorder %s28, 1
      %p182 = scmp.ne.s32.totalorder %s177, %s179
      %p183 = scmp.eq.s32.totalorder %s28, 0
      %p184 = por %p182, %p183
      %p185 = scmp.ne.s32.totalorder %s177, %s179
      %p186 = scmp.eq.s32.totalorder %s33, 1
      %p187 = por %p185, %p186
      %p188 = scmp.ne.s32.totalorder %s179, %s180
      %p189 = scmp.eq.s32.totalorder %s33, 0
      %p190 = por %p188, %p189
      %p191 = scmp.ne.s32.totalorder %s179, %s180
      %p192 = scmp.eq.s32.totalorder %s34, 1
      %p193 = por %p191, %p192
      %p195 = scmp.ne.s32.totalorder %s180, %s194
      %p196 = scmp.eq.s32.totalorder %s34, 0
      %p197 = por %p195, %p196
      %s198 = ssub.s32 %s28, %s35
      %p199 = scmp.eq.s32.totalorder %s198, 0
      %s201 = sadd.s32 %s200, 1
      %s202 = scalar_select %p199, %s200, %s201
      %p205 = pneg %p199
      %p206 = scmp.eq.s32.totalorder %s28, 1
      %p207 = por %p205, %p206
      %p208 = scmp.ne.s32.totalorder %s200, %s203
      %p209 = scmp.eq.s32.totalorder %s28, 0
      %p210 = por %p208, %p209
      %p211 = scmp.ne.s32.totalorder %s200, %s203
      %p212 = scmp.eq.s32.totalorder %s33, 1
      %p213 = por %p211, %p212
      %p214 = scmp.ne.s32.totalorder %s203, %s204
      %p215 = scmp.eq.s32.totalorder %s33, 0
      %p216 = por %p214, %p215
      %p217 = scmp.ne.s32.totalorder %s203, %s204
      %p218 = scmp.eq.s32.totalorder %s34, 1
      %p219 = por %p217, %p218
      %p221 = scmp.ne.s32.totalorder %s204, %s220
      %p222 = scmp.eq.s32.totalorder %s34, 0
      %p223 = por %p221, %p222
      %s224 = ssub.s32 %s28, %s35
      %p225 = scmp.eq.s32.totalorder %s224, 0
      %s227 = sadd.s32 %s226, 1
      %s228 = scalar_select %p225, %s226, %s227
      %p231 = pneg %p225
      %p232 = scmp.eq.s32.totalorder %s28, 1
      %p233 = por %p231, %p232
      %p234 = scmp.ne.s32.totalorder %s226, %s229
      %p235 = scmp.eq.s32.totalorder %s28, 0
      %p236 = por %p234, %p235
      %p237 = scmp.ne.s32.totalorder %s226, %s229
      %p238 = scmp.eq.s32.totalorder %s33, 1
      %p239 = por %p237, %p238
      %p240 = scmp.ne.s32.totalorder %s229, %s230
      %p241 = scmp.eq.s32.totalorder %s33, 0
      %p242 = por %p240, %p241
      %p243 = scmp.ne.s32.totalorder %s229, %s230
      %p244 = scmp.eq.s32.totalorder %s34, 1
      %p245 = por %p243, %p244
      %p247 = scmp.ne.s32.totalorder %s230, %s246
      %p248 = scmp.eq.s32.totalorder %s34, 0
      %p249 = por %p247, %p248
      %p250 = scmp.le.s32.totalorder 1, %s28
      %p251 = scmp.lt.s32.totalorder %s28, 3
      %p252 = pnand %p250, %p251
      %p253 = pneg %p252
      // Predicated region
      $region9: #{tpu_custom_call.1} parent=5 // pred_check
        _
      $region10: #{tpu_custom_call.1} parent=5 // pred_check_branch
        %255 = sbr.rel (%p252) target = $region12
      $region11: #{tpu_custom_call.1} parent=5 // pred_region
        %s256 = ssub.s32 %s28, 1
        // Predicated region
        $region13: #{tpu_custom_call.1} parent=11 // pred_check
          %p257 = pneg %p127
        $region14: #{tpu_custom_call.1} parent=11 // pred_check_branch
          %259 = sbr.rel (%p257) target = $region16
        $region15: #{tpu_custom_call.1} parent=11 // pred_region
          %s261 = ssub.s32 512, 512
          %262 = vsyncadd [#allocation9], %s261
          %s263 = sshll.u32 [#allocation8], 4
          %s264 = int_to_ptr.vmem [resolvable:$true] %s263
          %269 = dma.hbm_to_vmem [thread:$0]  %s3, 512, %s264, [#allocation9], 128, 128, 8
        $region16: #{tpu_custom_call.1} parent=11 // pred_fallthru
          _
        // Predicated region
        $region17: #{tpu_custom_call.1} parent=11 // pred_check
          %p270 = pneg %p148
        $region18: #{tpu_custom_call.1} parent=11 // pred_check_branch
          %272 = sbr.rel (%p270) target = $region20
        $region19: #{tpu_custom_call.1} parent=11 // pred_region
          _
        $region20: #{tpu_custom_call.1} parent=11 // pred_fallthru
          _
        // Predicated region
        $region21: #{tpu_custom_call.1} parent=11 // pred_check
          %p273 = pneg %p169
        $region22: #{tpu_custom_call.1} parent=11 // pred_check_branch
          %275 = sbr.rel (%p273) target = $region24
        $region23: #{tpu_custom_call.1} parent=11 // pred_region
          %s277 = ssub.s32 512, 512
          %278 = vsyncadd [#allocation9], %s277
          %s279 = sshll.u32 [#allocation10], 4
          %s280 = int_to_ptr.vmem [resolvable:$true] %s279
          %285 = dma.hbm_to_vmem [thread:$0]  %s5, 512, %s280, [#allocation9], 128, 128, 8
        $region24: #{tpu_custom_call.1} parent=11 // pred_fallthru
          _
        // Predicated region
        $region25: #{tpu_custom_call.1} parent=11 // pred_check
          %p286 = pneg %p190
        $region26: #{tpu_custom_call.1} parent=11 // pred_check_branch
          %288 = sbr.rel (%p286) target = $region28
        $region27: #{tpu_custom_call.1} parent=11 // pred_region
          _
        $region28: #{tpu_custom_call.1} parent=11 // pred_fallthru
          _
      $region12: #{tpu_custom_call.1} parent=5 // pred_fallthru
        _
      %p289 = scmp.lt.s32.totalorder %s28, 2
      // Predicated region
      $region29: #{tpu_custom_call.1} parent=5 // pred_check
        %p290 = pneg %p289
      $region30: #{tpu_custom_call.1} parent=5 // pred_check_branch
        %292 = sbr.rel (%p290) target = $region32
      $region31: #{tpu_custom_call.1} parent=5 // pred_region
        // Predicated region
        $region33: #{tpu_custom_call.1} parent=31 // pred_check
          %p293 = pneg %p48
        $region34: #{tpu_custom_call.1} parent=31 // pred_check_branch
          %295 = sbr.rel (%p293) target = $region36
        $region35: #{tpu_custom_call.1} parent=31 // pred_region
          %s296 = sand.u32 %s38, 1
          %s297 = scalar_lea.sflag [#allocation3], %s296
          %s298 = sand.u32 %s38, 1
          %s299 = smul.addr %s298, 8
          %s300 = scalar_lea.vmem [#allocation2], %s299
          %s302 = ssub.s32 128, 128
          %303 = vsyncadd %s297, %s302
          %s304 = smul.addr %s28, 128
          %s305 = scalar_lea.hbm %s0, %s304
          %s307 = sshll.u32 %s300, 4
          %s308 = int_to_ptr.vmem [resolvable:$true] %s307
          %310 = dma.hbm_to_vmem [thread:$0]  %s305, 128, %s308, %s297
        $region36: #{tpu_custom_call.1} parent=31 // pred_fallthru
          _
        // Predicated region
        $region37: #{tpu_custom_call.1} parent=31 // pred_check
          %p311 = pneg %p74
        $region38: #{tpu_custom_call.1} parent=31 // pred_check_branch
          %313 = sbr.rel (%p311) target = $region40
        $region39: #{tpu_custom_call.1} parent=31 // pred_region
          %s314 = sand.u32 %s28, 1
          %s315 = scalar_lea.sflag [#allocation6], %s314
          %s316 = sand.u32 %s64, 1
          %s317 = smul.addr %s316, 8
          %s318 = scalar_lea.vmem [#allocation5], %s317
          %s320 = ssub.s32 128, 128
          %321 = vsyncadd %s315, %s320
          %s322 = smul.addr %s28, 128
          %s323 = scalar_lea.hbm %s1, %s322
          %s325 = sshll.u32 %s318, 4
          %s326 = int_to_ptr.vmem [resolvable:$true] %s325
          %328 = dma.hbm_to_vmem [thread:$0]  %s323, 128, %s326, %s315
        $region40: #{tpu_custom_call.1} parent=31 // pred_fallthru
          _
        // Predicated region
        $region41: #{tpu_custom_call.1} parent=31 // pred_check
          %p329 = pneg %p100
        $region42: #{tpu_custom_call.1} parent=31 // pred_check_branch
          %331 = sbr.rel (%p329) target = $region44
        $region43: #{tpu_custom_call.1} parent=31 // pred_region
          %s332 = sand.u32 %s28, 1
          %s333 = scalar_lea.sflag [#allocation6], %s332
          %s334 = sand.u32 %s90, 1
          %s335 = smul.addr %s334, 8
          %s336 = scalar_lea.vmem [#allocation7], %s335
          %s338 = ssub.s32 128, 128
          %339 = vsyncadd %s333, %s338
          %s340 = smul.addr %s28, 128
          %s341 = scalar_lea.hbm %s2, %s340
          %s343 = sshll.u32 %s336, 4
          %s344 = int_to_ptr.vmem [resolvable:$true] %s343
          %346 = dma.hbm_to_vmem [thread:$0]  %s341, 128, %s344, %s333
        $region44: #{tpu_custom_call.1} parent=31 // pred_fallthru
          _
      $region32: #{tpu_custom_call.1} parent=5 // pred_fallthru
        _
      %p347 = scmp.le.s32.totalorder 1, %s28
      %p348 = scmp.lt.s32.totalorder %s28, 3
      %p349 = pnand %p347, %p348
      %p350 = pneg %p349
      // Predicated region
      $region45: #{tpu_custom_call.1} parent=5 // pred_check
        _
      $region46: #{tpu_custom_call.1} parent=5 // pred_check_branch
        %352 = sbr.rel (%p349) target = $region48
      $region47: #{tpu_custom_call.1} parent=5 // pred_region
        %s353 = ssub.s32 %s28, 1
        %s354 = sand.u32 %s41, 1
        %s355 = scalar_lea.sflag [#allocation3], %s354
        %s356 = sand.u32 %s41, 1
        %s357 = smul.addr %s356, 8
        %s358 = scalar_lea.vmem [#allocation2], %s357
        // Predicated region
        $region49: #{tpu_custom_call.1} parent=47 // pred_check
          %p359 = pneg %p54
        $region50: #{tpu_custom_call.1} parent=47 // pred_check_branch
          %361 = sbr.rel (%p359) target = $region52
        $region51: #{tpu_custom_call.1} parent=47 // pred_region
          %362 = dma.done %s355, 128
        $region52: #{tpu_custom_call.1} parent=47 // pred_fallthru
          _
        %s363 = sand.u32 %s33, 1
        %s364 = scalar_lea.sflag [#allocation6], %s363
        %s365 = sand.u32 %s67, 1
        %s366 = smul.addr %s365, 8
        %s367 = scalar_lea.vmem [#allocation5], %s366
        // Predicated region
        $region53: #{tpu_custom_call.1} parent=47 // pred_check
          %p368 = pneg %p80
        $region54: #{tpu_custom_call.1} parent=47 // pred_check_branch
          %370 = sbr.rel (%p368) target = $region56
        $region55: #{tpu_custom_call.1} parent=47 // pred_region
          %371 = dma.done %s364, 128
        $region56: #{tpu_custom_call.1} parent=47 // pred_fallthru
          _
        %s372 = sand.u32 %s33, 1
        %s373 = scalar_lea.sflag [#allocation6], %s372
        %s374 = sand.u32 %s93, 1
        %s375 = smul.addr %s374, 8
        %s376 = scalar_lea.vmem [#allocation7], %s375
        // Predicated region
        $region57: #{tpu_custom_call.1} parent=47 // pred_check
          %p377 = pneg %p106
        $region58: #{tpu_custom_call.1} parent=47 // pred_check_branch
          %379 = sbr.rel (%p377) target = $region60
        $region59: #{tpu_custom_call.1} parent=47 // pred_region
          %380 = dma.done %s373, 128
        $region60: #{tpu_custom_call.1} parent=47 // pred_fallthru
          _
        // Predicated region
        $region61: #{tpu_custom_call.1} parent=47 // pred_check
          %p381 = pneg %p127
        $region62: #{tpu_custom_call.1} parent=47 // pred_check_branch
          %383 = sbr.rel (%p381) target = $region64
        $region63: #{tpu_custom_call.1} parent=47 // pred_region
          %384 = dma.done [#allocation9], 512
        $region64: #{tpu_custom_call.1} parent=47 // pred_fallthru
          _
        // Predicated region
        $region65: #{tpu_custom_call.1} parent=47 // pred_check
          %p385 = pneg %p169
        $region66: #{tpu_custom_call.1} parent=47 // pred_check_branch
          %387 = sbr.rel (%p385) target = $region68
        $region67: #{tpu_custom_call.1} parent=47 // pred_region
          %388 = dma.done [#allocation9], 512
        $region68: #{tpu_custom_call.1} parent=47 // pred_fallthru
          _
        %s389 = sand.u32 %s41, 1
        %s390 = scalar_lea.sflag [#allocation3], %s389
        %s391 = sand.u32 %s41, 1
        %s392 = smul.addr %s391, 8
        %s393 = scalar_lea.vmem [#allocation2], %s392
        %p394 = pneg %p54
        %p395 = pneg %p51
        %s396 = sand.u32 %s33, 1
        %s397 = scalar_lea.sflag [#allocation6], %s396
        %s398 = sand.u32 %s67, 1
        %s399 = smul.addr %s398, 8
        %s400 = scalar_lea.vmem [#allocation5], %s399
        %p401 = pneg %p80
        %p402 = pneg %p77
        %s403 = sand.u32 %s33, 1
        %s404 = scalar_lea.sflag [#allocation6], %s403
        %s405 = sand.u32 %s93, 1
        %s406 = smul.addr %s405, 8
        %s407 = scalar_lea.vmem [#allocation7], %s406
        %p408 = pneg %p106
        %p409 = pneg %p103
        %p410 = pneg %p127
        %p411 = pneg %p124
        %p412 = pneg %p148
        %p413 = pneg %p145
        %p414 = pneg %p169
        %p415 = pneg %p166
        %p416 = pneg %p190
        %p417 = pneg %p187
        %p418 = pneg %p216
        %p419 = pneg %p213
        %s420 = sand.u32 %s203, 1
        %s421 = scalar_lea.sflag [#allocation4], %s420
        %s422 = sand.u32 %s203, 1
        %s423 = smul.addr %s422, 8
        %s424 = scalar_lea.vmem [#allocation11], %s423
        %p425 = pneg %p242
        %p426 = pneg %p239
        %s427 = sand.u32 %s229, 1
        %s428 = scalar_lea.sflag [#allocation13], %s427
        %s429 = sand.u32 %s229, 1
        %s430 = smul.addr %s429, 32
        %s431 = scalar_lea.vmem [#allocation12], %s430
        %v432 = vld [vmem:[#allocation8] sm:$0xff]
        %v433 = vld [vmem:[#allocation8 + $0x8] sm:$0xff]
        %v434 = vld [vmem:[#allocation8 + $0x10] sm:$0xff]
        %v435 = vld [vmem:[#allocation8 + $0x18] sm:$0xff]
        %v436 = vld [vmem:[%s4] sm:$0x1]
        %v437 = vld [vmem:[#allocation10] sm:$0xff]
        %v438 = vld [vmem:[#allocation10 + $0x8] sm:$0xff]
        %v439 = vld [vmem:[#allocation10 + $0x10] sm:$0xff]
        %v440 = vld [vmem:[#allocation10 + $0x18] sm:$0xff]
        %v441 = vld [vmem:[%s358] sm:$0xff]
        %v442 = vld [vmem:[%s367] sm:$0xff]
        %v443 = vld [vmem:[%s376] sm:$0xff]
        %v445 = vlaneseq
        %v446 = vshrl.u32 %v445, 7
        %v447 = vsub.s32 0, %v446
        %v448 = vrot.slane %v436, %v447
        %vm450 = vcmask 261120
        %v452 = vsel %vm450, %v441, 0
        %454 = vmatprep.subr.mxu0 0.0
        %455 = vmatpush1.msra.mxu0 %v432
        %456 = vmatprep.subr.mxu0 0.0
        %457 = vmatpush1.msra.mxu0 %v433
        %458 = vmatprep.subr.mxu0 0.0
        %459 = vmatpush1.msra.mxu0 %v434
        %460 = vmatprep.subr.mxu0 0.0
        %461 = vmatpush1.msra.mxu0 %v435
        %462 = vmatprep.subr.mxu0 0.0
        %463 = vmatpush1.msra.mxu0 0.0
        %464 = vmatprep.subr.mxu0 0.0
        %465 = vmatpush1.msra.mxu0 0.0
        %466 = vmatprep.subr.mxu0 0.0
        %467 = vmatpush1.msra.mxu0 0.0
        %468 = vmatprep.subr.mxu0 0.0
        %469 = vmatpush1.msra.mxu0 0.0
        %470 = vmatprep.subr.mxu0 0.0
        %471 = vmatpush1.msra.mxu0 0.0
        %472 = vmatprep.subr.mxu0 0.0
        %473 = vmatpush1.msra.mxu0 0.0
        %474 = vmatprep.subr.mxu0 0.0
        %475 = vmatpush1.msra.mxu0 0.0
        %476 = vmatprep.subr.mxu0 0.0
        %477 = vmatpush1.msra.mxu0 0.0
        %478 = vmatprep.subr.mxu0 0.0
        %479 = vmatpush1.msra.mxu0 0.0
        %480 = vmatprep.subr.mxu0 0.0
        %481 = vmatpush1.msra.mxu0 0.0
        %482 = vmatprep.subr.mxu0 0.0
        %483 = vmatpush1.msra.mxu0 0.0
        %484 = vmatprep.subr.mxu0 0.0
        %485 = vmatpush1.msra.mxu0 0.0
        %486 = vmatprep.subr.mxu0 0.0
        %487 = vmatpush1.msra.mxu0 0.0
        %488 = vmatprep.subr.mxu0 0.0
        %489 = vmatpush1.msra.mxu0 0.0
        %490 = vmatprep.subr.mxu0 0.0
        %491 = vmatpush1.msra.mxu0 0.0
        %492 = vmatprep.subr.mxu0 0.0
        %493 = vmatpush1.msra.mxu0 0.0
        %494 = vmatprep.subr.mxu0 0.0
        %495 = vmatpush1.msra.mxu0 0.0
        %496 = vmatprep.subr.mxu0 0.0
        %497 = vmatpush1.msra.mxu0 0.0
        %498 = vmatprep.subr.mxu0 0.0
        %499 = vmatpush1.msra.mxu0 0.0
        %500 = vmatprep.subr.mxu0 0.0
        %501 = vmatpush1.msra.mxu0 0.0
        %502 = vmatprep.subr.mxu0 0.0
        %503 = vmatpush1.msra.mxu0 0.0
        %504 = vmatprep.subr.mxu0 0.0
        %505 = vmatpush1.msra.mxu0 0.0
        %506 = vmatprep.subr.mxu0 0.0
        %507 = vmatpush1.msra.mxu0 0.0
        %508 = vmatprep.subr.mxu0 0.0
        %509 = vmatpush1.msra.mxu0 0.0
        %510 = vmatprep.subr.mxu0 0.0
        %511 = vmatpush1.msra.mxu0 0.0
        %512 = vmatprep.subr.mxu0 0.0
        %513 = vmatpush1.msra.mxu0 0.0
        %514 = vmatprep.subr.mxu0 0.0
        %515 = vmatpush1.msra.mxu0 0.0
        %516 = vmatprep.subr.mxu0 0.0
        %517 = vmatpush1.msra.mxu0 0.0
        %518 = vmatprep.mubr.f32.mxu0 0.0
        %519 = vmatmul.mubr.f32.gmra.mrb[0].mxu0 %v452
        %v520 = vpop.f32.mrb[0].mxu0
        %v521 = vadd.f32 %v448, %v520
        %v522 = vpop.f32.mrb[0].mxu0
        %523 = vdwg.mxu0
        %528 = vrot.lane.b32.xlu0 %v432, 96
        %v529 = vpop.permute.xlu0 %528
        %530 = vrot.lane.b32.xlu0 %v433, 96
        %v531 = vpop.permute.xlu0 %530
        %532 = vrot.lane.b32.xlu0 %v434, 96
        %v533 = vpop.permute.xlu0 %532
        %534 = vrot.lane.b32.xlu0 %v435, 96
        %v535 = vpop.permute.xlu0 %534
        %540 = vrot.lane.b32.xlu0 %v448, 96
        %v541 = vpop.permute.xlu0 %540
        %v544 = vsel %vm450, %v442, 0
        %546 = vmatprep.subr.mxu0 0.0
        %547 = vmatpush1.msra.mxu0 %v529
        %548 = vmatprep.subr.mxu0 0.0
        %549 = vmatpush1.msra.mxu0 %v531
        %550 = vmatprep.subr.mxu0 0.0
        %551 = vmatpush1.msra.mxu0 %v533
        %552 = vmatprep.subr.mxu0 0.0
        %553 = vmatpush1.msra.mxu0 %v535
        %554 = vmatprep.subr.mxu0 0.0
        %555 = vmatpush1.msra.mxu0 0.0
        %556 = vmatprep.subr.mxu0 0.0
        %557 = vmatpush1.msra.mxu0 0.0
        %558 = vmatprep.subr.mxu0 0.0
        %559 = vmatpush1.msra.mxu0 0.0
        %560 = vmatprep.subr.mxu0 0.0
        %561 = vmatpush1.msra.mxu0 0.0
        %562 = vmatprep.subr.mxu0 0.0
        %563 = vmatpush1.msra.mxu0 0.0
        %564 = vmatprep.subr.mxu0 0.0
        %565 = vmatpush1.msra.mxu0 0.0
        %566 = vmatprep.subr.mxu0 0.0
        %567 = vmatpush1.msra.mxu0 0.0
        %568 = vmatprep.subr.mxu0 0.0
        %569 = vmatpush1.msra.mxu0 0.0
        %570 = vmatprep.subr.mxu0 0.0
        %571 = vmatpush1.msra.mxu0 0.0
        %572 = vmatprep.subr.mxu0 0.0
        %573 = vmatpush1.msra.mxu0 0.0
        %574 = vmatprep.subr.mxu0 0.0
        %575 = vmatpush1.msra.mxu0 0.0
        %576 = vmatprep.subr.mxu0 0.0
        %577 = vmatpush1.msra.mxu0 0.0
        %578 = vmatprep.subr.mxu0 0.0
        %579 = vmatpush1.msra.mxu0 0.0
        %580 = vmatprep.subr.mxu0 0.0
        %581 = vmatpush1.msra.mxu0 0.0
        %582 = vmatprep.subr.mxu0 0.0
        %583 = vmatpush1.msra.mxu0 0.0
        %584 = vmatprep.subr.mxu0 0.0
        %585 = vmatpush1.msra.mxu0 0.0
        %586 = vmatprep.subr.mxu0 0.0
        %587 = vmatpush1.msra.mxu0 0.0
        %588 = vmatprep.subr.mxu0 0.0
        %589 = vmatpush1.msra.mxu0 0.0
        %590 = vmatprep.subr.mxu0 0.0
        %591 = vmatpush1.msra.mxu0 0.0
        %592 = vmatprep.subr.mxu0 0.0
        %593 = vmatpush1.msra.mxu0 0.0
        %594 = vmatprep.subr.mxu0 0.0
        %595 = vmatpush1.msra.mxu0 0.0
        %596 = vmatprep.subr.mxu0 0.0
        %597 = vmatpush1.msra.mxu0 0.0
        %598 = vmatprep.subr.mxu0 0.0
        %599 = vmatpush1.msra.mxu0 0.0
        %600 = vmatprep.subr.mxu0 0.0
        %601 = vmatpush1.msra.mxu0 0.0
        %602 = vmatprep.subr.mxu0 0.0
        %603 = vmatpush1.msra.mxu0 0.0
        %604 = vmatprep.subr.mxu0 0.0
        %605 = vmatpush1.msra.mxu0 0.0
        %606 = vmatprep.subr.mxu0 0.0
        %607 = vmatpush1.msra.mxu0 0.0
        %608 = vmatprep.subr.mxu0 0.0
        %609 = vmatpush1.msra.mxu0 0.0
        %610 = vmatprep.mubr.f32.mxu0 0.0
        %611 = vmatmul.mubr.f32.gmra.mrb[0].mxu0 %v544
        %v612 = vpop.f32.mrb[0].mxu0
        %v613 = vadd.f32 %v541, %v612
        %v614 = vpop.f32.mrb[0].mxu0
        %615 = vdwg.mxu0
        %616 = vrot.lane.b32.xlu0 %v432, 64
        %v617 = vpop.permute.xlu0 %616
        %618 = vrot.lane.b32.xlu0 %v433, 64
        %v619 = vpop.permute.xlu0 %618
        %620 = vrot.lane.b32.xlu0 %v434, 64
        %v621 = vpop.permute.xlu0 %620
        %622 = vrot.lane.b32.xlu0 %v435, 64
        %v623 = vpop.permute.xlu0 %622
        %628 = vrot.lane.b32.xlu0 %v448, 64
        %v629 = vpop.permute.xlu0 %628
        %v632 = vsel %vm450, %v443, 0
        %634 = vmatprep.subr.mxu0 0.0
        %635 = vmatpush1.msra.mxu0 %v617
        %636 = vmatprep.subr.mxu0 0.0
        %637 = vmatpush1.msra.mxu0 %v619
        %638 = vmatprep.subr.mxu0 0.0
        %639 = vmatpush1.msra.mxu0 %v621
        %640 = vmatprep.subr.mxu0 0.0
        %641 = vmatpush1.msra.mxu0 %v623
        %642 = vmatprep.subr.mxu0 0.0
        %643 = vmatpush1.msra.mxu0 0.0
        %644 = vmatprep.subr.mxu0 0.0
        %645 = vmatpush1.msra.mxu0 0.0
        %646 = vmatprep.subr.mxu0 0.0
        %647 = vmatpush1.msra.mxu0 0.0
        %648 = vmatprep.subr.mxu0 0.0
        %649 = vmatpush1.msra.mxu0 0.0
        %650 = vmatprep.subr.mxu0 0.0
        %651 = vmatpush1.msra.mxu0 0.0
        %652 = vmatprep.subr.mxu0 0.0
        %653 = vmatpush1.msra.mxu0 0.0
        %654 = vmatprep.subr.mxu0 0.0
        %655 = vmatpush1.msra.mxu0 0.0
        %656 = vmatprep.subr.mxu0 0.0
        %657 = vmatpush1.msra.mxu0 0.0
        %658 = vmatprep.subr.mxu0 0.0
        %659 = vmatpush1.msra.mxu0 0.0
        %660 = vmatprep.subr.mxu0 0.0
        %661 = vmatpush1.msra.mxu0 0.0
        %662 = vmatprep.subr.mxu0 0.0
        %663 = vmatpush1.msra.mxu0 0.0
        %664 = vmatprep.subr.mxu0 0.0
        %665 = vmatpush1.msra.mxu0 0.0
        %666 = vmatprep.subr.mxu0 0.0
        %667 = vmatpush1.msra.mxu0 0.0
        %668 = vmatprep.subr.mxu0 0.0
        %669 = vmatpush1.msra.mxu0 0.0
        %670 = vmatprep.subr.mxu0 0.0
        %671 = vmatpush1.msra.mxu0 0.0
        %672 = vmatprep.subr.mxu0 0.0
        %673 = vmatpush1.msra.mxu0 0.0
        %674 = vmatprep.subr.mxu0 0.0
        %675 = vmatpush1.msra.mxu0 0.0
        %676 = vmatprep.subr.mxu0 0.0
        %677 = vmatpush1.msra.mxu0 0.0
        %678 = vmatprep.subr.mxu0 0.0
        %679 = vmatpush1.msra.mxu0 0.0
        %680 = vmatprep.subr.mxu0 0.0
        %681 = vmatpush1.msra.mxu0 0.0
        %682 = vmatprep.subr.mxu0 0.0
        %683 = vmatpush1.msra.mxu0 0.0
        %684 = vmatprep.subr.mxu0 0.0
        %685 = vmatpush1.msra.mxu0 0.0
        %686 = vmatprep.subr.mxu0 0.0
        %687 = vmatpush1.msra.mxu0 0.0
        %688 = vmatprep.subr.mxu0 0.0
        %689 = vmatpush1.msra.mxu0 0.0
        %690 = vmatprep.subr.mxu0 0.0
        %691 = vmatpush1.msra.mxu0 0.0
        %692 = vmatprep.subr.mxu0 0.0
        %693 = vmatpush1.msra.mxu0 0.0
        %694 = vmatprep.subr.mxu0 0.0
        %695 = vmatpush1.msra.mxu0 0.0
        %696 = vmatprep.subr.mxu0 0.0
        %697 = vmatpush1.msra.mxu0 0.0
        %698 = vmatprep.mubr.f32.mxu0 0.0
        %699 = vmatmul.mubr.f32.gmra.mrb[0].mxu0 %v632
        %v700 = vpop.f32.mrb[0].mxu0
        %v701 = vadd.f32 %v629, %v700
        %v702 = vpop.f32.mrb[0].mxu0
        %703 = vdwg.mxu0
        %v704 = vmul.f32 %v521, 0.35355338
        %vm705 = vcmask 64512
        %v707 = vsel %vm705, %v704, 0
        %v710 = vsel %vm705, %v613, 0
        %712 = vmatprep.subr.mxu0 0.0
        %713 = vmatpush1.xpose.msra.mxu0 %v710
        %714 = vmatprep.subr.mxu0 0.0
        %715 = vmatpush1.xpose.msra.mxu0 0.0
        %716 = vmatprep.subr.mxu0 0.0
        %717 = vmatpush1.xpose.msra.mxu0 0.0
        %718 = vmatprep.subr.mxu0 0.0
        %719 = vmatpush1.xpose.msra.mxu0 0.0
        %720 = vmatprep.subr.mxu0 0.0
        %721 = vmatpush1.xpose.msra.mxu0 0.0
        %722 = vmatprep.subr.mxu0 0.0
        %723 = vmatpush1.xpose.msra.mxu0 0.0
        %724 = vmatprep.subr.mxu0 0.0
        %725 = vmatpush1.xpose.msra.mxu0 0.0
        %726 = vmatprep.subr.mxu0 0.0
        %727 = vmatpush1.xpose.msra.mxu0 0.0
        %728 = vmatprep.subr.mxu0 0.0
        %729 = vmatpush1.xpose.msra.mxu0 0.0
        %730 = vmatprep.subr.mxu0 0.0
        %731 = vmatpush1.xpose.msra.mxu0 0.0
        %732 = vmatprep.subr.mxu0 0.0
        %733 = vmatpush1.xpose.msra.mxu0 0.0
        %734 = vmatprep.subr.mxu0 0.0
        %735 = vmatpush1.xpose.msra.mxu0 0.0
        %736 = vmatprep.subr.mxu0 0.0
        %737 = vmatpush1.xpose.msra.mxu0 0.0
        %738 = vmatprep.subr.mxu0 0.0
        %739 = vmatpush1.xpose.msra.mxu0 0.0
        %740 = vmatprep.subr.mxu0 0.0
        %741 = vmatpush1.xpose.msra.mxu0 0.0
        %742 = vmatprep.subr.mxu0 0.0
        %743 = vmatpush1.xpose.msra.mxu0 0.0
        %744 = vmatprep.subr.mxu0 0.0
        %745 = vmatpush1.xpose.msra.mxu0 0.0
        %746 = vmatprep.subr.mxu0 0.0
        %747 = vmatpush1.xpose.msra.mxu0 0.0
        %748 = vmatprep.subr.mxu0 0.0
        %749 = vmatpush1.xpose.msra.mxu0 0.0
        %750 = vmatprep.subr.mxu0 0.0
        %751 = vmatpush1.xpose.msra.mxu0 0.0
        %752 = vmatprep.subr.mxu0 0.0
        %753 = vmatpush1.xpose.msra.mxu0 0.0
        %754 = vmatprep.subr.mxu0 0.0
        %755 = vmatpush1.xpose.msra.mxu0 0.0
        %756 = vmatprep.subr.mxu0 0.0
        %757 = vmatpush1.xpose.msra.mxu0 0.0
        %758 = vmatprep.subr.mxu0 0.0
        %759 = vmatpush1.xpose.msra.mxu0 0.0
        %760 = vmatprep.subr.mxu0 0.0
        %761 = vmatpush1.xpose.msra.mxu0 0.0
        %762 = vmatprep.subr.mxu0 0.0
        %763 = vmatpush1.xpose.msra.mxu0 0.0
        %764 = vmatprep.subr.mxu0 0.0
        %765 = vmatpush1.xpose.msra.mxu0 0.0
        %766 = vmatprep.subr.mxu0 0.0
        %767 = vmatpush1.xpose.msra.mxu0 0.0
        %768 = vmatprep.subr.mxu0 0.0
        %769 = vmatpush1.xpose.msra.mxu0 0.0
        %770 = vmatprep.subr.mxu0 0.0
        %771 = vmatpush1.xpose.msra.mxu0 0.0
        %772 = vmatprep.subr.mxu0 0.0
        %773 = vmatpush1.xpose.msra.mxu0 0.0
        %774 = vmatprep.subr.mxu0 0.0
        %775 = vmatpush1.xpose.msra.mxu0 0.0
        %776 = vmatprep.mubr.f32.mxu0 0.0
        %777 = vmatmul.mubr.f32.gmra.mrb[0].mxu0 %v707
        %v778 = vpop.f32.mrb[0].mxu0
        %v779 = vadd.f32 0.0, %v778
        %v780 = vpop.f32.mrb[0].mxu0
        %781 = vdwg.mxu0
        %v782 = vsel %vm705, %v779, -inf
        %783 = vmax.xlane.f32.xlu0 %v782
        %v784 = vpop.xlane.xlu0 %783
        %v785 = vsub.f32 %v779, %v784
        %v786 = vmul.f32 %v785, 1.442695
        %v787 = vpow.pop %v786
        %v788 = vsel %vm705, %v787, 0.0
        %789 = vadd.xlane.f32.xlu0 %v788
        %v790 = vpop.xlane.xlu0 %789
        %v791 = vrcp.pop %v790
        %v792 = vmul.f32 %v787, %v791
        %793 = vst.msk [vmem:[%s431] sm:$0xff] %vm705, %v792
        %v795 = vsel %vm705, %v792, 0
        %797 = vmatprep.subr.mxu0 0.0
        %798 = vmatpush1.msra.mxu0 %v701
        %799 = vmatprep.subr.mxu0 0.0
        %800 = vmatpush1.msra.mxu0 0.0
        %801 = vmatprep.subr.mxu0 0.0
        %802 = vmatpush1.msra.mxu0 0.0
        %803 = vmatprep.subr.mxu0 0.0
        %804 = vmatpush1.msra.mxu0 0.0
        %805 = vmatprep.subr.mxu0 0.0
        %806 = vmatpush1.msra.mxu0 0.0
        %807 = vmatprep.subr.mxu0 0.0
        %808 = vmatpush1.msra.mxu0 0.0
        %809 = vmatprep.subr.mxu0 0.0
        %810 = vmatpush1.msra.mxu0 0.0
        %811 = vmatprep.subr.mxu0 0.0
        %812 = vmatpush1.msra.mxu0 0.0
        %813 = vmatprep.subr.mxu0 0.0
        %814 = vmatpush1.msra.mxu0 0.0
        %815 = vmatprep.subr.mxu0 0.0
        %816 = vmatpush1.msra.mxu0 0.0
        %817 = vmatprep.subr.mxu0 0.0
        %818 = vmatpush1.msra.mxu0 0.0
        %819 = vmatprep.subr.mxu0 0.0
        %820 = vmatpush1.msra.mxu0 0.0
        %821 = vmatprep.subr.mxu0 0.0
        %822 = vmatpush1.msra.mxu0 0.0
        %823 = vmatprep.subr.mxu0 0.0
        %824 = vmatpush1.msra.mxu0 0.0
        %825 = vmatprep.subr.mxu0 0.0
        %826 = vmatpush1.msra.mxu0 0.0
        %827 = vmatprep.subr.mxu0 0.0
        %828 = vmatpush1.msra.mxu0 0.0
        %829 = vmatprep.subr.mxu0 0.0
        %830 = vmatpush1.msra.mxu0 0.0
        %831 = vmatprep.subr.mxu0 0.0
        %832 = vmatpush1.msra.mxu0 0.0
        %833 = vmatprep.subr.mxu0 0.0
        %834 = vmatpush1.msra.mxu0 0.0
        %835 = vmatprep.subr.mxu0 0.0
        %836 = vmatpush1.msra.mxu0 0.0
        %837 = vmatprep.subr.mxu0 0.0
        %838 = vmatpush1.msra.mxu0 0.0
        %839 = vmatprep.subr.mxu0 0.0
        %840 = vmatpush1.msra.mxu0 0.0
        %841 = vmatprep.subr.mxu0 0.0
        %842 = vmatpush1.msra.mxu0 0.0
        %843 = vmatprep.subr.mxu0 0.0
        %844 = vmatpush1.msra.mxu0 0.0
        %845 = vmatprep.subr.mxu0 0.0
        %846 = vmatpush1.msra.mxu0 0.0
        %847 = vmatprep.subr.mxu0 0.0
        %848 = vmatpush1.msra.mxu0 0.0
        %849 = vmatprep.subr.mxu0 0.0
        %850 = vmatpush1.msra.mxu0 0.0
        %851 = vmatprep.subr.mxu0 0.0
        %852 = vmatpush1.msra.mxu0 0.0
        %853 = vmatprep.subr.mxu0 0.0
        %854 = vmatpush1.msra.mxu0 0.0
        %855 = vmatprep.subr.mxu0 0.0
        %856 = vmatpush1.msra.mxu0 0.0
        %857 = vmatprep.subr.mxu0 0.0
        %858 = vmatpush1.msra.mxu0 0.0
        %859 = vmatprep.subr.mxu0 0.0
        %860 = vmatpush1.msra.mxu0 0.0
        %861 = vmatprep.mubr.f32.mxu0 0.0
        %862 = vmatmul.mubr.f32.gmra.mrb[0].mxu0 %v795
        %v863 = vpop.f32.mrb[0].mxu0
        %v864 = vadd.f32 0.0, %v863
        %v865 = vpop.f32.mrb[0].mxu0
        %866 = vdwg.mxu0
        %867 = vrot.lane.b32.xlu0 %v704, 120
        %v868 = vpop.permute.xlu0 %867
        %869 = vrot.lane.b32.xlu0 %v613, 120
        %v870 = vpop.permute.xlu0 %869
        %v871 = vsel %vm705, %v868, 0
        %v873 = vsel %vm705, %v870, 0
        %875 = vmatprep.subr.mxu0 0.0
        %876 = vmatpush1.xpose.msra.mxu0 %v873
        %877 = vmatprep.subr.mxu0 0.0
        %878 = vmatpush1.xpose.msra.mxu0 0.0
        %879 = vmatprep.subr.mxu0 0.0
        %880 = vmatpush1.xpose.msra.mxu0 0.0
        %881 = vmatprep.subr.mxu0 0.0
        %882 = vmatpush1.xpose.msra.mxu0 0.0
        %883 = vmatprep.subr.mxu0 0.0
        %884 = vmatpush1.xpose.msra.mxu0 0.0
        %885 = vmatprep.subr.mxu0 0.0
        %886 = vmatpush1.xpose.msra.mxu0 0.0
        %887 = vmatprep.subr.mxu0 0.0
        %888 = vmatpush1.xpose.msra.mxu0 0.0
        %889 = vmatprep.subr.mxu0 0.0
        %890 = vmatpush1.xpose.msra.mxu0 0.0
        %891 = vmatprep.subr.mxu0 0.0
        %892 = vmatpush1.xpose.msra.mxu0 0.0
        %893 = vmatprep.subr.mxu0 0.0
        %894 = vmatpush1.xpose.msra.mxu0 0.0
        %895 = vmatprep.subr.mxu0 0.0
        %896 = vmatpush1.xpose.msra.mxu0 0.0
        %897 = vmatprep.subr.mxu0 0.0
        %898 = vmatpush1.xpose.msra.mxu0 0.0
        %899 = vmatprep.subr.mxu0 0.0
        %900 = vmatpush1.xpose.msra.mxu0 0.0
        %901 = vmatprep.subr.mxu0 0.0
        %902 = vmatpush1.xpose.msra.mxu0 0.0
        %903 = vmatprep.subr.mxu0 0.0
        %904 = vmatpush1.xpose.msra.mxu0 0.0
        %905 = vmatprep.subr.mxu0 0.0
        %906 = vmatpush1.xpose.msra.mxu0 0.0
        %907 = vmatprep.subr.mxu0 0.0
        %908 = vmatpush1.xpose.msra.mxu0 0.0
        %909 = vmatprep.subr.mxu0 0.0
        %910 = vmatpush1.xpose.msra.mxu0 0.0
        %911 = vmatprep.subr.mxu0 0.0
        %912 = vmatpush1.xpose.msra.mxu0 0.0
        %913 = vmatprep.subr.mxu0 0.0
        %914 = vmatpush1.xpose.msra.mxu0 0.0
        %915 = vmatprep.subr.mxu0 0.0
        %916 = vmatpush1.xpose.msra.mxu0 0.0
        %917 = vmatprep.subr.mxu0 0.0
        %918 = vmatpush1.xpose.msra.mxu0 0.0
        %919 = vmatprep.subr.mxu0 0.0
        %920 = vmatpush1.xpose.msra.mxu0 0.0
        %921 = vmatprep.subr.mxu0 0.0
        %922 = vmatpush1.xpose.msra.mxu0 0.0
        %923 = vmatprep.subr.mxu0 0.0
        %924 = vmatpush1.xpose.msra.mxu0 0.0
        %925 = vmatprep.subr.mxu0 0.0
        %926 = vmatpush1.xpose.msra.mxu0 0.0
        %927 = vmatprep.subr.mxu0 0.0
        %928 = vmatpush1.xpose.msra.mxu0 0.0
        %929 = vmatprep.subr.mxu0 0.0
        %930 = vmatpush1.xpose.msra.mxu0 0.0
        %931 = vmatprep.subr.mxu0 0.0
        %932 = vmatpush1.xpose.msra.mxu0 0.0
        %933 = vmatprep.subr.mxu0 0.0
        %934 = vmatpush1.xpose.msra.mxu0 0.0
        %935 = vmatprep.subr.mxu0 0.0
        %936 = vmatpush1.xpose.msra.mxu0 0.0
        %937 = vmatprep.subr.mxu0 0.0
        %938 = vmatpush1.xpose.msra.mxu0 0.0
        %939 = vmatprep.mubr.f32.mxu0 0.0
        %940 = vmatmul.mubr.f32.gmra.mrb[0].mxu0 %v871
        %v941 = vpop.f32.mrb[0].mxu0
        %v942 = vadd.f32 0.0, %v941
        %v943 = vpop.f32.mrb[0].mxu0
        %944 = vdwg.mxu0
        %v945 = vsel %vm705, %v942, -inf
        %946 = vmax.xlane.f32.xlu0 %v945
        %v947 = vpop.xlane.xlu0 %946
        %v948 = vsub.f32 %v942, %v947
        %v949 = vmul.f32 %v948, 1.442695
        %v950 = vpow.pop %v949
        %v951 = vsel %vm705, %v950, 0.0
        %952 = vadd.xlane.f32.xlu0 %v951
        %v953 = vpop.xlane.xlu0 %952
        %v954 = vrcp.pop %v953
        %v955 = vmul.f32 %v950, %v954
        %s956 = scalar_lea.vmem %s431, 8 [#allocation12]
        %957 = vst.msk [vmem:[%s956] sm:$0xff] %vm705, %v955
        %959 = vrot.lane.b32.xlu0 %v701, 120
        %v960 = vpop.permute.xlu0 %959
        %v963 = vsel %vm705, %v955, 0
        %965 = vmatprep.subr.mxu0 0.0
        %966 = vmatpush1.msra.mxu0 %v960
        %967 = vmatprep.subr.mxu0 0.0
        %968 = vmatpush1.msra.mxu0 0.0
        %969 = vmatprep.subr.mxu0 0.0
        %970 = vmatpush1.msra.mxu0 0.0
        %971 = vmatprep.subr.mxu0 0.0
        %972 = vmatpush1.msra.mxu0 0.0
        %973 = vmatprep.subr.mxu0 0.0
        %974 = vmatpush1.msra.mxu0 0.0
        %975 = vmatprep.subr.mxu0 0.0
        %976 = vmatpush1.msra.mxu0 0.0
        %977 = vmatprep.subr.mxu0 0.0
        %978 = vmatpush1.msra.mxu0 0.0
        %979 = vmatprep.subr.mxu0 0.0
        %980 = vmatpush1.msra.mxu0 0.0
        %981 = vmatprep.subr.mxu0 0.0
        %982 = vmatpush1.msra.mxu0 0.0
        %983 = vmatprep.subr.mxu0 0.0
        %984 = vmatpush1.msra.mxu0 0.0
        %985 = vmatprep.subr.mxu0 0.0
        %986 = vmatpush1.msra.mxu0 0.0
        %987 = vmatprep.subr.mxu0 0.0
        %988 = vmatpush1.msra.mxu0 0.0
        %989 = vmatprep.subr.mxu0 0.0
        %990 = vmatpush1.msra.mxu0 0.0
        %991 = vmatprep.subr.mxu0 0.0
        %992 = vmatpush1.msra.mxu0 0.0
        %993 = vmatprep.subr.mxu0 0.0
        %994 = vmatpush1.msra.mxu0 0.0
        %995 = vmatprep.subr.mxu0 0.0
        %996 = vmatpush1.msra.mxu0 0.0
        %997 = vmatprep.subr.mxu0 0.0
        %998 = vmatpush1.msra.mxu0 0.0
        %999 = vmatprep.subr.mxu0 0.0
        %1000 = vmatpush1.msra.mxu0 0.0
        %1001 = vmatprep.subr.mxu0 0.0
        %1002 = vmatpush1.msra.mxu0 0.0
        %1003 = vmatprep.subr.mxu0 0.0
        %1004 = vmatpush1.msra.mxu0 0.0
        %1005 = vmatprep.subr.mxu0 0.0
        %1006 = vmatpush1.msra.mxu0 0.0
        %1007 = vmatprep.subr.mxu0 0.0
        %1008 = vmatpush1.msra.mxu0 0.0
        %1009 = vmatprep.subr.mxu0 0.0
        %1010 = vmatpush1.msra.mxu0 0.0
        %1011 = vmatprep.subr.mxu0 0.0
        %1012 = vmatpush1.msra.mxu0 0.0
        %1013 = vmatprep.subr.mxu0 0.0
        %1014 = vmatpush1.msra.mxu0 0.0
        %1015 = vmatprep.subr.mxu0 0.0
        %1016 = vmatpush1.msra.mxu0 0.0
        %1017 = vmatprep.subr.mxu0 0.0
        %1018 = vmatpush1.msra.mxu0 0.0
        %1019 = vmatprep.subr.mxu0 0.0
        %1020 = vmatpush1.msra.mxu0 0.0
        %1021 = vmatprep.subr.mxu0 0.0
        %1022 = vmatpush1.msra.mxu0 0.0
        %1023 = vmatprep.subr.mxu0 0.0
        %1024 = vmatpush1.msra.mxu0 0.0
        %1025 = vmatprep.subr.mxu0 0.0
        %1026 = vmatpush1.msra.mxu0 0.0
        %1027 = vmatprep.subr.mxu0 0.0
        %1028 = vmatpush1.msra.mxu0 0.0
        %1029 = vmatprep.mubr.f32.mxu0 0.0
        %1030 = vmatmul.mubr.f32.gmra.mrb[0].mxu0 %v963
        %v1031 = vpop.f32.mrb[0].mxu0
        %v1032 = vadd.f32 0.0, %v1031
        %v1033 = vpop.f32.mrb[0].mxu0
        %1034 = vdwg.mxu0
        %v1036 = vsel %vm705, %v1032, 0
        %1038 = vmatprep.subr.mxu0 0.0
        %1039 = vmatpush1.msra.mxu0 %v438
        %1040 = vmatprep.subr.mxu0 0.0
        %1041 = vmatpush1.msra.mxu0 0.0
        %1042 = vmatprep.subr.mxu0 0.0
        %1043 = vmatpush1.msra.mxu0 0.0
        %1044 = vmatprep.subr.mxu0 0.0
        %1045 = vmatpush1.msra.mxu0 0.0
        %1046 = vmatprep.subr.mxu0 0.0
        %1047 = vmatpush1.msra.mxu0 0.0
        %1048 = vmatprep.subr.mxu0 0.0
        %1049 = vmatpush1.msra.mxu0 0.0
        %1050 = vmatprep.subr.mxu0 0.0
        %1051 = vmatpush1.msra.mxu0 0.0
        %1052 = vmatprep.subr.mxu0 0.0
        %1053 = vmatpush1.msra.mxu0 0.0
        %1054 = vmatprep.subr.mxu0 0.0
        %1055 = vmatpush1.msra.mxu0 0.0
        %1056 = vmatprep.subr.mxu0 0.0
        %1057 = vmatpush1.msra.mxu0 0.0
        %1058 = vmatprep.subr.mxu0 0.0
        %1059 = vmatpush1.msra.mxu0 0.0
        %1060 = vmatprep.subr.mxu0 0.0
        %1061 = vmatpush1.msra.mxu0 0.0
        %1062 = vmatprep.subr.mxu0 0.0
        %1063 = vmatpush1.msra.mxu0 0.0
        %1064 = vmatprep.subr.mxu0 0.0
        %1065 = vmatpush1.msra.mxu0 0.0
        %1066 = vmatprep.subr.mxu0 0.0
        %1067 = vmatpush1.msra.mxu0 0.0
        %1068 = vmatprep.subr.mxu0 0.0
        %1069 = vmatpush1.msra.mxu0 0.0
        %1070 = vmatprep.subr.mxu0 0.0
        %1071 = vmatpush1.msra.mxu0 0.0
        %1072 = vmatprep.subr.mxu0 0.0
        %1073 = vmatpush1.msra.mxu0 0.0
        %1074 = vmatprep.subr.mxu0 0.0
        %1075 = vmatpush1.msra.mxu0 0.0
        %1076 = vmatprep.subr.mxu0 0.0
        %1077 = vmatpush1.msra.mxu0 0.0
        %1078 = vmatprep.subr.mxu0 0.0
        %1079 = vmatpush1.msra.mxu0 0.0
        %1080 = vmatprep.subr.mxu0 0.0
        %1081 = vmatpush1.msra.mxu0 0.0
        %1082 = vmatprep.subr.mxu0 0.0
        %1083 = vmatpush1.msra.mxu0 0.0
        %1084 = vmatprep.subr.mxu0 0.0
        %1085 = vmatpush1.msra.mxu0 0.0
        %1086 = vmatprep.subr.mxu0 0.0
        %1087 = vmatpush1.msra.mxu0 0.0
        %1088 = vmatprep.subr.mxu0 0.0
        %1089 = vmatpush1.msra.mxu0 0.0
        %1090 = vmatprep.subr.mxu0 0.0
        %1091 = vmatpush1.msra.mxu0 0.0
        %1092 = vmatprep.subr.mxu0 0.0
        %1093 = vmatpush1.msra.mxu0 0.0
        %1094 = vmatprep.subr.mxu0 0.0
        %1095 = vmatpush1.msra.mxu0 0.0
        %1096 = vmatprep.subr.mxu0 0.0
        %1097 = vmatpush1.msra.mxu0 0.0
        %1098 = vmatprep.subr.mxu0 0.0
        %1099 = vmatpush1.msra.mxu0 0.0
        %1100 = vmatprep.subr.mxu0 0.0
        %1101 = vmatpush1.msra.mxu0 0.0
        %1102 = vmatprep.mubr.f32.mxu0 0.0
        %1103 = vmatmul.mubr.f32.gmra.mrb[0].mxu0 %v1036
        %v1104 = vpop.f32.mrb[0].mxu0
        %v1105 = vadd.f32 0.0, %v1104
        %v1106 = vpop.f32.mrb[0].mxu0
        %1107 = vdwg.mxu0
        %v1109 = vsel %vm705, %v864, 0
        %1111 = vmatprep.subr.mxu0 0.0
        %1112 = vmatpush1.msra.mxu0 %v437
        %1113 = vmatprep.subr.mxu0 0.0
        %1114 = vmatpush1.msra.mxu0 0.0
        %1115 = vmatprep.subr.mxu0 0.0
        %1116 = vmatpush1.msra.mxu0 0.0
        %1117 = vmatprep.subr.mxu0 0.0
        %1118 = vmatpush1.msra.mxu0 0.0
        %1119 = vmatprep.subr.mxu0 0.0
        %1120 = vmatpush1.msra.mxu0 0.0
        %1121 = vmatprep.subr.mxu0 0.0
        %1122 = vmatpush1.msra.mxu0 0.0
        %1123 = vmatprep.subr.mxu0 0.0
        %1124 = vmatpush1.msra.mxu0 0.0
        %1125 = vmatprep.subr.mxu0 0.0
        %1126 = vmatpush1.msra.mxu0 0.0
        %1127 = vmatprep.subr.mxu0 0.0
        %1128 = vmatpush1.msra.mxu0 0.0
        %1129 = vmatprep.subr.mxu0 0.0
        %1130 = vmatpush1.msra.mxu0 0.0
        %1131 = vmatprep.subr.mxu0 0.0
        %1132 = vmatpush1.msra.mxu0 0.0
        %1133 = vmatprep.subr.mxu0 0.0
        %1134 = vmatpush1.msra.mxu0 0.0
        %1135 = vmatprep.subr.mxu0 0.0
        %1136 = vmatpush1.msra.mxu0 0.0
        %1137 = vmatprep.subr.mxu0 0.0
        %1138 = vmatpush1.msra.mxu0 0.0
        %1139 = vmatprep.subr.mxu0 0.0
        %1140 = vmatpush1.msra.mxu0 0.0
        %1141 = vmatprep.subr.mxu0 0.0
        %1142 = vmatpush1.msra.mxu0 0.0
        %1143 = vmatprep.subr.mxu0 0.0
        %1144 = vmatpush1.msra.mxu0 0.0
        %1145 = vmatprep.subr.mxu0 0.0
        %1146 = vmatpush1.msra.mxu0 0.0
        %1147 = vmatprep.subr.mxu0 0.0
        %1148 = vmatpush1.msra.mxu0 0.0
        %1149 = vmatprep.subr.mxu0 0.0
        %1150 = vmatpush1.msra.mxu0 0.0
        %1151 = vmatprep.subr.mxu0 0.0
        %1152 = vmatpush1.msra.mxu0 0.0
        %1153 = vmatprep.subr.mxu0 0.0
        %1154 = vmatpush1.msra.mxu0 0.0
        %1155 = vmatprep.subr.mxu0 0.0
        %1156 = vmatpush1.msra.mxu0 0.0
        %1157 = vmatprep.subr.mxu0 0.0
        %1158 = vmatpush1.msra.mxu0 0.0
        %1159 = vmatprep.subr.mxu0 0.0
        %1160 = vmatpush1.msra.mxu0 0.0
        %1161 = vmatprep.subr.mxu0 0.0
        %1162 = vmatpush1.msra.mxu0 0.0
        %1163 = vmatprep.subr.mxu0 0.0
        %1164 = vmatpush1.msra.mxu0 0.0
        %1165 = vmatprep.subr.mxu0 0.0
        %1166 = vmatpush1.msra.mxu0 0.0
        %1167 = vmatprep.subr.mxu0 0.0
        %1168 = vmatpush1.msra.mxu0 0.0
        %1169 = vmatprep.subr.mxu0 0.0
        %1170 = vmatpush1.msra.mxu0 0.0
        %1171 = vmatprep.subr.mxu0 0.0
        %1172 = vmatpush1.msra.mxu0 0.0
        %1173 = vmatprep.subr.mxu0 0.0
        %1174 = vmatpush1.msra.mxu0 0.0
        %1175 = vmatprep.mubr.f32.mxu0 0.0
        %1176 = vmatmul.mubr.f32.gmra.mrb[0].mxu0 %v1109
        %v1177 = vpop.f32.mrb[0].mxu0
        %v1178 = vadd.f32 %v1105, %v1177
        %v1179 = vpop.f32.mrb[0].mxu0
        %1180 = vdwg.mxu0
        %1181 = vrot.lane.b32.xlu0 %v704, 112
        %v1182 = vpop.permute.xlu0 %1181
        %1183 = vrot.lane.b32.xlu0 %v613, 112
        %v1184 = vpop.permute.xlu0 %1183
        %v1185 = vsel %vm705, %v1182, 0
        %v1187 = vsel %vm705, %v1184, 0
        %1189 = vmatprep.subr.mxu0 0.0
        %1190 = vmatpush1.xpose.msra.mxu0 %v1187
        %1191 = vmatprep.subr.mxu0 0.0
        %1192 = vmatpush1.xpose.msra.mxu0 0.0
        %1193 = vmatprep.subr.mxu0 0.0
        %1194 = vmatpush1.xpose.msra.mxu0 0.0
        %1195 = vmatprep.subr.mxu0 0.0
        %1196 = vmatpush1.xpose.msra.mxu0 0.0
        %1197 = vmatprep.subr.mxu0 0.0
        %1198 = vmatpush1.xpose.msra.mxu0 0.0
        %1199 = vmatprep.subr.mxu0 0.0
        %1200 = vmatpush1.xpose.msra.mxu0 0.0
        %1201 = vmatprep.subr.mxu0 0.0
        %1202 = vmatpush1.xpose.msra.mxu0 0.0
        %1203 = vmatprep.subr.mxu0 0.0
        %1204 = vmatpush1.xpose.msra.mxu0 0.0
        %1205 = vmatprep.subr.mxu0 0.0
        %1206 = vmatpush1.xpose.msra.mxu0 0.0
        %1207 = vmatprep.subr.mxu0 0.0
        %1208 = vmatpush1.xpose.msra.mxu0 0.0
        %1209 = vmatprep.subr.mxu0 0.0
        %1210 = vmatpush1.xpose.msra.mxu0 0.0
        %1211 = vmatprep.subr.mxu0 0.0
        %1212 = vmatpush1.xpose.msra.mxu0 0.0
        %1213 = vmatprep.subr.mxu0 0.0
        %1214 = vmatpush1.xpose.msra.mxu0 0.0
        %1215 = vmatprep.subr.mxu0 0.0
        %1216 = vmatpush1.xpose.msra.mxu0 0.0
        %1217 = vmatprep.subr.mxu0 0.0
        %1218 = vmatpush1.xpose.msra.mxu0 0.0
        %1219 = vmatprep.subr.mxu0 0.0
        %1220 = vmatpush1.xpose.msra.mxu0 0.0
        %1221 = vmatprep.subr.mxu0 0.0
        %1222 = vmatpush1.xpose.msra.mxu0 0.0
        %1223 = vmatprep.subr.mxu0 0.0
        %1224 = vmatpush1.xpose.msra.mxu0 0.0
        %1225 = vmatprep.subr.mxu0 0.0
        %1226 = vmatpush1.xpose.msra.mxu0 0.0
        %1227 = vmatprep.subr.mxu0 0.0
        %1228 = vmatpush1.xpose.msra.mxu0 0.0
        %1229 = vmatprep.subr.mxu0 0.0
        %1230 = vmatpush1.xpose.msra.mxu0 0.0
        %1231 = vmatprep.subr.mxu0 0.0
        %1232 = vmatpush1.xpose.msra.mxu0 0.0
        %1233 = vmatprep.subr.mxu0 0.0
        %1234 = vmatpush1.xpose.msra.mxu0 0.0
        %1235 = vmatprep.subr.mxu0 0.0
        %1236 = vmatpush1.xpose.msra.mxu0 0.0
        %1237 = vmatprep.subr.mxu0 0.0
        %1238 = vmatpush1.xpose.msra.mxu0 0.0
        %1239 = vmatprep.subr.mxu0 0.0
        %1240 = vmatpush1.xpose.msra.mxu0 0.0
        %1241 = vmatprep.subr.mxu0 0.0
        %1242 = vmatpush1.xpose.msra.mxu0 0.0
        %1243 = vmatprep.subr.mxu0 0.0
        %1244 = vmatpush1.xpose.msra.mxu0 0.0
        %1245 = vmatprep.subr.mxu0 0.0
        %1246 = vmatpush1.xpose.msra.mxu0 0.0
        %1247 = vmatprep.subr.mxu0 0.0
        %1248 = vmatpush1.xpose.msra.mxu0 0.0
        %1249 = vmatprep.subr.mxu0 0.0
        %1250 = vmatpush1.xpose.msra.mxu0 0.0
        %1251 = vmatprep.subr.mxu0 0.0
        %1252 = vmatpush1.xpose.msra.mxu0 0.0
        %1253 = vmatprep.mubr.f32.mxu0 0.0
        %1254 = vmatmul.mubr.f32.gmra.mrb[0].mxu0 %v1185
        %v1255 = vpop.f32.mrb[0].mxu0
        %v1256 = vadd.f32 0.0, %v1255
        %v1257 = vpop.f32.mrb[0].mxu0
        %1258 = vdwg.mxu0
        %v1259 = vsel %vm705, %v1256, -inf
        %1260 = vmax.xlane.f32.xlu0 %v1259
        %v1261 = vpop.xlane.xlu0 %1260
        %v1262 = vsub.f32 %v1256, %v1261
        %v1263 = vmul.f32 %v1262, 1.442695
        %v1264 = vpow.pop %v1263
        %v1265 = vsel %vm705, %v1264, 0.0
        %1266 = vadd.xlane.f32.xlu0 %v1265
        %v1267 = vpop.xlane.xlu0 %1266
        %v1268 = vrcp.pop %v1267
        %v1269 = vmul.f32 %v1264, %v1268
        %s1270 = scalar_lea.vmem %s431, 16 [#allocation12]
        %1271 = vst.msk [vmem:[%s1270] sm:$0xff] %vm705, %v1269
        %1272 = vrot.lane.b32.xlu0 %v701, 112
        %v1273 = vpop.permute.xlu0 %1272
        %v1276 = vsel %vm705, %v1269, 0
        %1278 = vmatprep.subr.mxu0 0.0
        %1279 = vmatpush1.msra.mxu0 %v1273
        %1280 = vmatprep.subr.mxu0 0.0
        %1281 = vmatpush1.msra.mxu0 0.0
        %1282 = vmatprep.subr.mxu0 0.0
        %1283 = vmatpush1.msra.mxu0 0.0
        %1284 = vmatprep.subr.mxu0 0.0
        %1285 = vmatpush1.msra.mxu0 0.0
        %1286 = vmatprep.subr.mxu0 0.0
        %1287 = vmatpush1.msra.mxu0 0.0
        %1288 = vmatprep.subr.mxu0 0.0
        %1289 = vmatpush1.msra.mxu0 0.0
        %1290 = vmatprep.subr.mxu0 0.0
        %1291 = vmatpush1.msra.mxu0 0.0
        %1292 = vmatprep.subr.mxu0 0.0
        %1293 = vmatpush1.msra.mxu0 0.0
        %1294 = vmatprep.subr.mxu0 0.0
        %1295 = vmatpush1.msra.mxu0 0.0
        %1296 = vmatprep.subr.mxu0 0.0
        %1297 = vmatpush1.msra.mxu0 0.0
        %1298 = vmatprep.subr.mxu0 0.0
        %1299 = vmatpush1.msra.mxu0 0.0
        %1300 = vmatprep.subr.mxu0 0.0
        %1301 = vmatpush1.msra.mxu0 0.0
        %1302 = vmatprep.subr.mxu0 0.0
        %1303 = vmatpush1.msra.mxu0 0.0
        %1304 = vmatprep.subr.mxu0 0.0
        %1305 = vmatpush1.msra.mxu0 0.0
        %1306 = vmatprep.subr.mxu0 0.0
        %1307 = vmatpush1.msra.mxu0 0.0
        %1308 = vmatprep.subr.mxu0 0.0
        %1309 = vmatpush1.msra.mxu0 0.0
        %1310 = vmatprep.subr.mxu0 0.0
        %1311 = vmatpush1.msra.mxu0 0.0
        %1312 = vmatprep.subr.mxu0 0.0
        %1313 = vmatpush1.msra.mxu0 0.0
        %1314 = vmatprep.subr.mxu0 0.0
        %1315 = vmatpush1.msra.mxu0 0.0
        %1316 = vmatprep.subr.mxu0 0.0
        %1317 = vmatpush1.msra.mxu0 0.0
        %1318 = vmatprep.subr.mxu0 0.0
        %1319 = vmatpush1.msra.mxu0 0.0
        %1320 = vmatprep.subr.mxu0 0.0
        %1321 = vmatpush1.msra.mxu0 0.0
        %1322 = vmatprep.subr.mxu0 0.0
        %1323 = vmatpush1.msra.mxu0 0.0
        %1324 = vmatprep.subr.mxu0 0.0
        %1325 = vmatpush1.msra.mxu0 0.0
        %1326 = vmatprep.subr.mxu0 0.0
        %1327 = vmatpush1.msra.mxu0 0.0
        %1328 = vmatprep.subr.mxu0 0.0
        %1329 = vmatpush1.msra.mxu0 0.0
        %1330 = vmatprep.subr.mxu0 0.0
        %1331 = vmatpush1.msra.mxu0 0.0
        %1332 = vmatprep.subr.mxu0 0.0
        %1333 = vmatpush1.msra.mxu0 0.0
        %1334 = vmatprep.subr.mxu0 0.0
        %1335 = vmatpush1.msra.mxu0 0.0
        %1336 = vmatprep.subr.mxu0 0.0
        %1337 = vmatpush1.msra.mxu0 0.0
        %1338 = vmatprep.subr.mxu0 0.0
        %1339 = vmatpush1.msra.mxu0 0.0
        %1340 = vmatprep.subr.mxu0 0.0
        %1341 = vmatpush1.msra.mxu0 0.0
        %1342 = vmatprep.mubr.f32.mxu0 0.0
        %1343 = vmatmul.mubr.f32.gmra.mrb[0].mxu0 %v1276
        %v1344 = vpop.f32.mrb[0].mxu0
        %v1345 = vadd.f32 0.0, %v1344
        %v1346 = vpop.f32.mrb[0].mxu0
        %1347 = vdwg.mxu0
        %v1349 = vsel %vm705, %v1345, 0
        %1351 = vmatprep.subr.mxu0 0.0
        %1352 = vmatpush1.msra.mxu0 %v439
        %1353 = vmatprep.subr.mxu0 0.0
        %1354 = vmatpush1.msra.mxu0 0.0
        %1355 = vmatprep.subr.mxu0 0.0
        %1356 = vmatpush1.msra.mxu0 0.0
        %1357 = vmatprep.subr.mxu0 0.0
        %1358 = vmatpush1.msra.mxu0 0.0
        %1359 = vmatprep.subr.mxu0 0.0
        %1360 = vmatpush1.msra.mxu0 0.0
        %1361 = vmatprep.subr.mxu0 0.0
        %1362 = vmatpush1.msra.mxu0 0.0
        %1363 = vmatprep.subr.mxu0 0.0
        %1364 = vmatpush1.msra.mxu0 0.0
        %1365 = vmatprep.subr.mxu0 0.0
        %1366 = vmatpush1.msra.mxu0 0.0
        %1367 = vmatprep.subr.mxu0 0.0
        %1368 = vmatpush1.msra.mxu0 0.0
        %1369 = vmatprep.subr.mxu0 0.0
        %1370 = vmatpush1.msra.mxu0 0.0
        %1371 = vmatprep.subr.mxu0 0.0
        %1372 = vmatpush1.msra.mxu0 0.0
        %1373 = vmatprep.subr.mxu0 0.0
        %1374 = vmatpush1.msra.mxu0 0.0
        %1375 = vmatprep.subr.mxu0 0.0
        %1376 = vmatpush1.msra.mxu0 0.0
        %1377 = vmatprep.subr.mxu0 0.0
        %1378 = vmatpush1.msra.mxu0 0.0
        %1379 = vmatprep.subr.mxu0 0.0
        %1380 = vmatpush1.msra.mxu0 0.0
        %1381 = vmatprep.subr.mxu0 0.0
        %1382 = vmatpush1.msra.mxu0 0.0
        %1383 = vmatprep.subr.mxu0 0.0
        %1384 = vmatpush1.msra.mxu0 0.0
        %1385 = vmatprep.subr.mxu0 0.0
        %1386 = vmatpush1.msra.mxu0 0.0
        %1387 = vmatprep.subr.mxu0 0.0
        %1388 = vmatpush1.msra.mxu0 0.0
        %1389 = vmatprep.subr.mxu0 0.0
        %1390 = vmatpush1.msra.mxu0 0.0
        %1391 = vmatprep.subr.mxu0 0.0
        %1392 = vmatpush1.msra.mxu0 0.0
        %1393 = vmatprep.subr.mxu0 0.0
        %1394 = vmatpush1.msra.mxu0 0.0
        %1395 = vmatprep.subr.mxu0 0.0
        %1396 = vmatpush1.msra.mxu0 0.0
        %1397 = vmatprep.subr.mxu0 0.0
        %1398 = vmatpush1.msra.mxu0 0.0
        %1399 = vmatprep.subr.mxu0 0.0
        %1400 = vmatpush1.msra.mxu0 0.0
        %1401 = vmatprep.subr.mxu0 0.0
        %1402 = vmatpush1.msra.mxu0 0.0
        %1403 = vmatprep.subr.mxu0 0.0
        %1404 = vmatpush1.msra.mxu0 0.0
        %1405 = vmatprep.subr.mxu0 0.0
        %1406 = vmatpush1.msra.mxu0 0.0
        %1407 = vmatprep.subr.mxu0 0.0
        %1408 = vmatpush1.msra.mxu0 0.0
        %1409 = vmatprep.subr.mxu0 0.0
        %1410 = vmatpush1.msra.mxu0 0.0
        %1411 = vmatprep.subr.mxu0 0.0
        %1412 = vmatpush1.msra.mxu0 0.0
        %1413 = vmatprep.subr.mxu0 0.0
        %1414 = vmatpush1.msra.mxu0 0.0
        %1415 = vmatprep.mubr.f32.mxu0 0.0
        %1416 = vmatmul.mubr.f32.gmra.mrb[0].mxu0 %v1349
        %v1417 = vpop.f32.mrb[0].mxu0
        %v1418 = vadd.f32 0.0, %v1417
        %v1419 = vpop.f32.mrb[0].mxu0
        %1420 = vdwg.mxu0
        %v1421 = vadd.f32 %v1178, %v1418
        %1422 = vrot.lane.b32.xlu0 %v704, 104
        %v1423 = vpop.permute.xlu0 %1422
        %1424 = vrot.lane.b32.xlu0 %v613, 104
        %v1425 = vpop.permute.xlu0 %1424
        %v1426 = vsel %vm705, %v1423, 0
        %v1428 = vsel %vm705, %v1425, 0
        %1430 = vmatprep.subr.mxu0 0.0
        %1431 = vmatpush1.xpose.msra.mxu0 %v1428
        %1432 = vmatprep.subr.mxu0 0.0
        %1433 = vmatpush1.xpose.msra.mxu0 0.0
        %1434 = vmatprep.subr.mxu0 0.0
        %1435 = vmatpush1.xpose.msra.mxu0 0.0
        %1436 = vmatprep.subr.mxu0 0.0
        %1437 = vmatpush1.xpose.msra.mxu0 0.0
        %1438 = vmatprep.subr.mxu0 0.0
        %1439 = vmatpush1.xpose.msra.mxu0 0.0
        %1440 = vmatprep.subr.mxu0 0.0
        %1441 = vmatpush1.xpose.msra.mxu0 0.0
        %1442 = vmatprep.subr.mxu0 0.0
        %1443 = vmatpush1.xpose.msra.mxu0 0.0
        %1444 = vmatprep.subr.mxu0 0.0
        %1445 = vmatpush1.xpose.msra.mxu0 0.0
        %1446 = vmatprep.subr.mxu0 0.0
        %1447 = vmatpush1.xpose.msra.mxu0 0.0
        %1448 = vmatprep.subr.mxu0 0.0
        %1449 = vmatpush1.xpose.msra.mxu0 0.0
        %1450 = vmatprep.subr.mxu0 0.0
        %1451 = vmatpush1.xpose.msra.mxu0 0.0
        %1452 = vmatprep.subr.mxu0 0.0
        %1453 = vmatpush1.xpose.msra.mxu0 0.0
        %1454 = vmatprep.subr.mxu0 0.0
        %1455 = vmatpush1.xpose.msra.mxu0 0.0
        %1456 = vmatprep.subr.mxu0 0.0
        %1457 = vmatpush1.xpose.msra.mxu0 0.0
        %1458 = vmatprep.subr.mxu0 0.0
        %1459 = vmatpush1.xpose.msra.mxu0 0.0
        %1460 = vmatprep.subr.mxu0 0.0
        %1461 = vmatpush1.xpose.msra.mxu0 0.0
        %1462 = vmatprep.subr.mxu0 0.0
        %1463 = vmatpush1.xpose.msra.mxu0 0.0
        %1464 = vmatprep.subr.mxu0 0.0
        %1465 = vmatpush1.xpose.msra.mxu0 0.0
        %1466 = vmatprep.subr.mxu0 0.0
        %1467 = vmatpush1.xpose.msra.mxu0 0.0
        %1468 = vmatprep.subr.mxu0 0.0
        %1469 = vmatpush1.xpose.msra.mxu0 0.0
        %1470 = vmatprep.subr.mxu0 0.0
        %1471 = vmatpush1.xpose.msra.mxu0 0.0
        %1472 = vmatprep.subr.mxu0 0.0
        %1473 = vmatpush1.xpose.msra.mxu0 0.0
        %1474 = vmatprep.subr.mxu0 0.0
        %1475 = vmatpush1.xpose.msra.mxu0 0.0
        %1476 = vmatprep.subr.mxu0 0.0
        %1477 = vmatpush1.xpose.msra.mxu0 0.0
        %1478 = vmatprep.subr.mxu0 0.0
        %1479 = vmatpush1.xpose.msra.mxu0 0.0
        %1480 = vmatprep.subr.mxu0 0.0
        %1481 = vmatpush1.xpose.msra.mxu0 0.0
        %1482 = vmatprep.subr.mxu0 0.0
        %1483 = vmatpush1.xpose.msra.mxu0 0.0
        %1484 = vmatprep.subr.mxu0 0.0
        %1485 = vmatpush1.xpose.msra.mxu0 0.0
        %1486 = vmatprep.subr.mxu0 0.0
        %1487 = vmatpush1.xpose.msra.mxu0 0.0
        %1488 = vmatprep.subr.mxu0 0.0
        %1489 = vmatpush1.xpose.msra.mxu0 0.0
        %1490 = vmatprep.subr.mxu0 0.0
        %1491 = vmatpush1.xpose.msra.mxu0 0.0
        %1492 = vmatprep.subr.mxu0 0.0
        %1493 = vmatpush1.xpose.msra.mxu0 0.0
        %1494 = vmatprep.mubr.f32.mxu0 0.0
        %1495 = vmatmul.mubr.f32.gmra.mrb[0].mxu0 %v1426
        %v1496 = vpop.f32.mrb[0].mxu0
        %v1497 = vadd.f32 0.0, %v1496
        %v1498 = vpop.f32.mrb[0].mxu0
        %1499 = vdwg.mxu0
        %v1500 = vsel %vm705, %v1497, -inf
        %1501 = vmax.xlane.f32.xlu0 %v1500
        %v1502 = vpop.xlane.xlu0 %1501
        %v1503 = vsub.f32 %v1497, %v1502
        %v1504 = vmul.f32 %v1503, 1.442695
        %v1505 = vpow.pop %v1504
        %v1506 = vsel %vm705, %v1505, 0.0
        %1507 = vadd.xlane.f32.xlu0 %v1506
        %v1508 = vpop.xlane.xlu0 %1507
        %v1509 = vrcp.pop %v1508
        %v1510 = vmul.f32 %v1505, %v1509
        %s1511 = scalar_lea.vmem %s431, 24 [#allocation12]
        %1512 = vst.msk [vmem:[%s1511] sm:$0xff] %vm705, %v1510
        %1513 = vrot.lane.b32.xlu0 %v701, 104
        %v1514 = vpop.permute.xlu0 %1513
        %v1517 = vsel %vm705, %v1510, 0
        %1519 = vmatprep.subr.mxu0 0.0
        %1520 = vmatpush1.msra.mxu0 %v1514
        %1521 = vmatprep.subr.mxu0 0.0
        %1522 = vmatpush1.msra.mxu0 0.0
        %1523 = vmatprep.subr.mxu0 0.0
        %1524 = vmatpush1.msra.mxu0 0.0
        %1525 = vmatprep.subr.mxu0 0.0
        %1526 = vmatpush1.msra.mxu0 0.0
        %1527 = vmatprep.subr.mxu0 0.0
        %1528 = vmatpush1.msra.mxu0 0.0
        %1529 = vmatprep.subr.mxu0 0.0
        %1530 = vmatpush1.msra.mxu0 0.0
        %1531 = vmatprep.subr.mxu0 0.0
        %1532 = vmatpush1.msra.mxu0 0.0
        %1533 = vmatprep.subr.mxu0 0.0
        %1534 = vmatpush1.msra.mxu0 0.0
        %1535 = vmatprep.subr.mxu0 0.0
        %1536 = vmatpush1.msra.mxu0 0.0
        %1537 = vmatprep.subr.mxu0 0.0
        %1538 = vmatpush1.msra.mxu0 0.0
        %1539 = vmatprep.subr.mxu0 0.0
        %1540 = vmatpush1.msra.mxu0 0.0
        %1541 = vmatprep.subr.mxu0 0.0
        %1542 = vmatpush1.msra.mxu0 0.0
        %1543 = vmatprep.subr.mxu0 0.0
        %1544 = vmatpush1.msra.mxu0 0.0
        %1545 = vmatprep.subr.mxu0 0.0
        %1546 = vmatpush1.msra.mxu0 0.0
        %1547 = vmatprep.subr.mxu0 0.0
        %1548 = vmatpush1.msra.mxu0 0.0
        %1549 = vmatprep.subr.mxu0 0.0
        %1550 = vmatpush1.msra.mxu0 0.0
        %1551 = vmatprep.subr.mxu0 0.0
        %1552 = vmatpush1.msra.mxu0 0.0
        %1553 = vmatprep.subr.mxu0 0.0
        %1554 = vmatpush1.msra.mxu0 0.0
        %1555 = vmatprep.subr.mxu0 0.0
        %1556 = vmatpush1.msra.mxu0 0.0
        %1557 = vmatprep.subr.mxu0 0.0
        %1558 = vmatpush1.msra.mxu0 0.0
        %1559 = vmatprep.subr.mxu0 0.0
        %1560 = vmatpush1.msra.mxu0 0.0
        %1561 = vmatprep.subr.mxu0 0.0
        %1562 = vmatpush1.msra.mxu0 0.0
        %1563 = vmatprep.subr.mxu0 0.0
        %1564 = vmatpush1.msra.mxu0 0.0
        %1565 = vmatprep.subr.mxu0 0.0
        %1566 = vmatpush1.msra.mxu0 0.0
        %1567 = vmatprep.subr.mxu0 0.0
        %1568 = vmatpush1.msra.mxu0 0.0
        %1569 = vmatprep.subr.mxu0 0.0
        %1570 = vmatpush1.msra.mxu0 0.0
        %1571 = vmatprep.subr.mxu0 0.0
        %1572 = vmatpush1.msra.mxu0 0.0
        %1573 = vmatprep.subr.mxu0 0.0
        %1574 = vmatpush1.msra.mxu0 0.0
        %1575 = vmatprep.subr.mxu0 0.0
        %1576 = vmatpush1.msra.mxu0 0.0
        %1577 = vmatprep.subr.mxu0 0.0
        %1578 = vmatpush1.msra.mxu0 0.0
        %1579 = vmatprep.subr.mxu0 0.0
        %1580 = vmatpush1.msra.mxu0 0.0
        %1581 = vmatprep.subr.mxu0 0.0
        %1582 = vmatpush1.msra.mxu0 0.0
        %1583 = vmatprep.mubr.f32.mxu0 0.0
        %1584 = vmatmul.mubr.f32.gmra.mrb[0].mxu0 %v1517
        %v1585 = vpop.f32.mrb[0].mxu0
        %v1586 = vadd.f32 0.0, %v1585
        %v1587 = vpop.f32.mrb[0].mxu0
        %1588 = vdwg.mxu0
        %v1590 = vsel %vm705, %v1586, 0
        %1592 = vmatprep.subr.mxu0 0.0
        %1593 = vmatpush1.msra.mxu0 %v440
        %1594 = vmatprep.subr.mxu0 0.0
        %1595 = vmatpush1.msra.mxu0 0.0
        %1596 = vmatprep.subr.mxu0 0.0
        %1597 = vmatpush1.msra.mxu0 0.0
        %1598 = vmatprep.subr.mxu0 0.0
        %1599 = vmatpush1.msra.mxu0 0.0
        %1600 = vmatprep.subr.mxu0 0.0
        %1601 = vmatpush1.msra.mxu0 0.0
        %1602 = vmatprep.subr.mxu0 0.0
        %1603 = vmatpush1.msra.mxu0 0.0
        %1604 = vmatprep.subr.mxu0 0.0
        %1605 = vmatpush1.msra.mxu0 0.0
        %1606 = vmatprep.subr.mxu0 0.0
        %1607 = vmatpush1.msra.mxu0 0.0
        %1608 = vmatprep.subr.mxu0 0.0
        %1609 = vmatpush1.msra.mxu0 0.0
        %1610 = vmatprep.subr.mxu0 0.0
        %1611 = vmatpush1.msra.mxu0 0.0
        %1612 = vmatprep.subr.mxu0 0.0
        %1613 = vmatpush1.msra.mxu0 0.0
        %1614 = vmatprep.subr.mxu0 0.0
        %1615 = vmatpush1.msra.mxu0 0.0
        %1616 = vmatprep.subr.mxu0 0.0
        %1617 = vmatpush1.msra.mxu0 0.0
        %1618 = vmatprep.subr.mxu0 0.0
        %1619 = vmatpush1.msra.mxu0 0.0
        %1620 = vmatprep.subr.mxu0 0.0
        %1621 = vmatpush1.msra.mxu0 0.0
        %1622 = vmatprep.subr.mxu0 0.0
        %1623 = vmatpush1.msra.mxu0 0.0
        %1624 = vmatprep.subr.mxu0 0.0
        %1625 = vmatpush1.msra.mxu0 0.0
        %1626 = vmatprep.subr.mxu0 0.0
        %1627 = vmatpush1.msra.mxu0 0.0
        %1628 = vmatprep.subr.mxu0 0.0
        %1629 = vmatpush1.msra.mxu0 0.0
        %1630 = vmatprep.subr.mxu0 0.0
        %1631 = vmatpush1.msra.mxu0 0.0
        %1632 = vmatprep.subr.mxu0 0.0
        %1633 = vmatpush1.msra.mxu0 0.0
        %1634 = vmatprep.subr.mxu0 0.0
        %1635 = vmatpush1.msra.mxu0 0.0
        %1636 = vmatprep.subr.mxu0 0.0
        %1637 = vmatpush1.msra.mxu0 0.0
        %1638 = vmatprep.subr.mxu0 0.0
        %1639 = vmatpush1.msra.mxu0 0.0
        %1640 = vmatprep.subr.mxu0 0.0
        %1641 = vmatpush1.msra.mxu0 0.0
        %1642 = vmatprep.subr.mxu0 0.0
        %1643 = vmatpush1.msra.mxu0 0.0
        %1644 = vmatprep.subr.mxu0 0.0
        %1645 = vmatpush1.msra.mxu0 0.0
        %1646 = vmatprep.subr.mxu0 0.0
        %1647 = vmatpush1.msra.mxu0 0.0
        %1648 = vmatprep.subr.mxu0 0.0
        %1649 = vmatpush1.msra.mxu0 0.0
        %1650 = vmatprep.subr.mxu0 0.0
        %1651 = vmatpush1.msra.mxu0 0.0
        %1652 = vmatprep.subr.mxu0 0.0
        %1653 = vmatpush1.msra.mxu0 0.0
        %1654 = vmatprep.subr.mxu0 0.0
        %1655 = vmatpush1.msra.mxu0 0.0
        %1656 = vmatprep.mubr.f32.mxu0 0.0
        %1657 = vmatmul.mubr.f32.gmra.mrb[0].mxu0 %v1590
        %v1658 = vpop.f32.mrb[0].mxu0
        %v1659 = vadd.f32 0.0, %v1658
        %v1660 = vpop.f32.mrb[0].mxu0
        %1661 = vdwg.mxu0
        %v1662 = vadd.f32 %v1421, %v1659
        %v1663 = vld [vmem:[%s6] sm:$0x1]
        %v1665 = vlaneseq
        %v1666 = vshrl.u32 %v1665, 7
        %v1667 = vsub.s32 0, %v1666
        %v1668 = vrot.slane %v1663, %v1667
        %v1670 = vadd.f32 %v1662, %v1668
        %1671 = vst.msk [vmem:[%s424] sm:$0xff] %vm450, %v1670
        %s1672 = sand.u32 %s203, 1
        %s1673 = scalar_lea.sflag [#allocation4], %s1672
        %s1674 = sand.u32 %s203, 1
        %s1675 = smul.addr %s1674, 8
        %s1676 = scalar_lea.vmem [#allocation11], %s1675
        %s1677 = sand.u32 %s229, 1
        %s1678 = scalar_lea.sflag [#allocation13], %s1677
        %s1679 = sand.u32 %s229, 1
        %s1680 = smul.addr %s1679, 32
        %s1681 = scalar_lea.vmem [#allocation12], %s1680
        // Predicated region
        $region69: #{tpu_custom_call.1} parent=47 // pred_check
          %p1682 = pneg %p213
        $region70: #{tpu_custom_call.1} parent=47 // pred_check_branch
          %1684 = sbr.rel (%p1682) target = $region72
        $region71: #{tpu_custom_call.1} parent=47 // pred_region
          %s1686 = ssub.s32 128, 128
          %1687 = vsyncadd %s1673, %s1686
          %s1688 = smul.addr %s33, 128
          %s1689 = scalar_lea.hbm %s7, %s1688
          %s1691 = sshll.u32 %s1676, 4
          %s1692 = int_to_ptr.vmem [resolvable:$true] %s1691
          %1694 = dma.vmem_to_hbm [thread:$0]  %s1692, 128, %s1689, %s1673
        $region72: #{tpu_custom_call.1} parent=47 // pred_fallthru
          _
        // Predicated region
        $region73: #{tpu_custom_call.1} parent=47 // pred_check
          %p1695 = pneg %p239
        $region74: #{tpu_custom_call.1} parent=47 // pred_check_branch
          %1697 = sbr.rel (%p1695) target = $region76
        $region75: #{tpu_custom_call.1} parent=47 // pred_region
          %s1699 = ssub.s32 512, 512
          %1700 = vsyncadd %s1678, %s1699
          %s1701 = smul.addr %s33, 4
          %s1702 = smul.addr %s1701, 128
          %s1703 = scalar_lea.hbm %s8, %s1702
          %s1704 = sshll.u32 %s1681, 4
          %s1705 = int_to_ptr.vmem [resolvable:$true] %s1704
          %1710 = dma.vmem_to_hbm [thread:$0]  %s1705, 512, %s1703, %s1678, 128, 128, 8
        $region76: #{tpu_custom_call.1} parent=47 // pred_fallthru
          _
      $region48: #{tpu_custom_call.1} parent=5 // pred_fallthru
        _
      %p1711 = scmp.le.s32.totalorder 2, %s28
      // Predicated region
      $region77: #{tpu_custom_call.1} parent=5 // pred_check
        %p1712 = pneg %p1711
      $region78: #{tpu_custom_call.1} parent=5 // pred_check_branch
        %1714 = sbr.rel (%p1712) target = $region80
      $region79: #{tpu_custom_call.1} parent=5 // pred_region
        %s1715 = ssub.s32 %s28, 2
        // Predicated region
        $region81: #{tpu_custom_call.1} parent=79 // pred_check
          %p1716 = pneg %p219
        $region82: #{tpu_custom_call.1} parent=79 // pred_check_branch
          %1718 = sbr.rel (%p1716) target = $region84
        $region83: #{tpu_custom_call.1} parent=79 // pred_region
          %s1719 = sand.u32 %s204, 1
          %s1720 = scalar_lea.sflag [#allocation4], %s1719
          %s1721 = sand.u32 %s204, 1
          %s1722 = smul.addr %s1721, 8
          %s1723 = scalar_lea.vmem [#allocation11], %s1722
          %1724 = dma.done %s1720, 128
        $region84: #{tpu_custom_call.1} parent=79 // pred_fallthru
          _
        // Predicated region
        $region85: #{tpu_custom_call.1} parent=79 // pred_check
          %p1725 = pneg %p245
        $region86: #{tpu_custom_call.1} parent=79 // pred_check_branch
          %1727 = sbr.rel (%p1725) target = $region88
        $region87: #{tpu_custom_call.1} parent=79 // pred_region
          %s1728 = sand.u32 %s230, 1
          %s1729 = scalar_lea.sflag [#allocation13], %s1728
          %s1730 = sand.u32 %s230, 1
          %s1731 = smul.addr %s1730, 32
          %s1732 = scalar_lea.vmem [#allocation12], %s1731
          %1733 = dma.done %s1729, 512
        $region88: #{tpu_custom_call.1} parent=79 // pred_fallthru
          _
      $region80: #{tpu_custom_call.1} parent=5 // pred_fallthru
        _
    $region6: #{tpu_custom_call.1} parent=1 // loop_footer
      %s32 = sadd.s32 1, %s28
    $region7: #{tpu_custom_call.1} parent=1 // loop_footer_branch
      %27 = sbr.rel target = $region3
    $region8: #{tpu_custom_call.1} parent=1 // loop_exit
      _
    %1734 = vsyncpa [#allocation3], 1
    %s1735 = scalar_lea.sflag [#allocation3], 1
    %1736 = vsyncpa %s1735, 1
    %1737 = vsyncpa [#allocation6], 1
    %s1738 = scalar_lea.sflag [#allocation6], 1
    %1739 = vsyncpa %s1738, 1
    %1740 = vsyncpa [#allocation9], 1
    %1741 = vsyncpa [#allocation4], 1
    %s1742 = scalar_lea.sflag [#allocation4], 1
    %1743 = vsyncpa %s1742, 1
    %1744 = vsyncpa [#allocation13], 1
    %s1745 = scalar_lea.sflag [#allocation13], 1
    %1746 = vsyncpa %s1745, 1

</llo_original>
